<compile_context>
chip_gen: v7x
topology: tpu7x:2x2x1
jax: 0.10.0
libtpu: 0.0.40
codegen_flags: <defaults>
</compile_context>

<pallas_src>
import functools

import numpy as np
import jax
import jax.numpy as jnp
from jax.experimental import pallas as pl
from jax.experimental.pallas import tpu as pltpu


# ---------------------------------------------------------------------------
# Fused kernel
# ---------------------------------------------------------------------------

def lenet5_kernel(xq_ref, w1_ref, b1_ref, w2_ref, b2_ref,
                  wf1_ref, bf1_ref, wf2_ref, bf2_ref, wf3_ref, bf3_ref,
                  out_ref, x2_ref):
    """Whole LeNet-5 forward for one batch tile.

    xq_ref : (bt, 16, 128) bf16  parity-decomposed padded input
             lane = (row%4 * 2 + col%2)*16 + col//2, sublane = row//4
    w1_ref : (192, 448) bf16  conv1 banded weight (4 pool quadrants in N)
    w2_ref : (672, 448) bf16  conv2 banded weight
    wf1_ref: (784, 128) f32   fc1 weight, NCHW flatten folded in
    x2_ref : (bt, 16, 224) bf16 scratch = conv2 input planes
             [b, U, pa*112 + pd*56 + v*8 + ci] = pool1out[2U+pa-2, 2v+pd, ci]
    """
    bt = xq_ref.shape[0]
    f32 = jnp.float32

    # ----- stage 1: conv1 + bias + ReLU + 2x2 maxpool (one matmul per row
    # parity half; output rows come out parity-major so conv2 staging is
    # dense slicing only) ----------------------------------------------------
    base0 = xq_ref[:, 0:8, :]                       # row-window offset tau=0
    base1 = xq_ref[:, 1:9, :]                       # row-window offset tau=1
    halves = (
        jnp.concatenate([base0, base1[:, :, 0:64]], axis=-1),               # pa=0
        jnp.concatenate([base0[:, :, 64:128], base1], axis=-1),             # pa=1
    )

    # zero only the row border of the conv2 input planes (U=0 and U=8,9)
    x2_ref[:, 0:1, :] = jnp.zeros((bt, 1, 224), x2_ref.dtype)
    x2_ref[:, 8:10, :] = jnp.zeros((bt, 2, 224), x2_ref.dtype)

    for pa in range(2):
        lhs = halves[pa].reshape(bt * 8, 192)
        z = jnp.dot(lhs, w1_ref[...], preferred_element_type=f32)   # (bt*8,448)
        z = jnp.maximum(jnp.maximum(z[:, 0:112], z[:, 112:224]),
                        jnp.maximum(z[:, 224:336], z[:, 336:448]))  # pool1 max
        p1 = jnp.maximum(z + b1_ref[...], 0.0)                      # bias+ReLU
        p1 = p1.reshape(bt, 8, 112)[:, 0:7, :].astype(x2_ref.dtype)
        x2_ref[:, 1:8, pa * 112:(pa + 1) * 112] = p1

    # ----- stage 2: conv2 + bias + ReLU + 2x2 maxpool (one matmul) ----------
    lhs2 = jnp.concatenate([x2_ref[:, su:su + 8, :] for su in range(3)],
                           axis=-1)                                  # (bt,8,672)
    lhs2 = lhs2.reshape(bt * 8, 672)
    z2 = jnp.dot(lhs2, w2_ref[...], preferred_element_type=f32)      # (bt*8,448)
    z2 = jnp.maximum(jnp.maximum(z2[:, 0:112], z2[:, 112:224]),
                     jnp.maximum(z2[:, 224:336], z2[:, 336:448]))    # pool2 max
    p2 = jnp.maximum(z2 + b2_ref[...], 0.0)                          # (bt*8,112)
    p2 = p2.reshape(bt, 8, 112)                                      # row g, lane h*16+co

    # ----- fc1 (flatten folded into weight) -> fc2 -> out (f32 matmuls) -----
    fc_in = jnp.concatenate([p2[:, g, :] for g in range(7)], axis=-1)  # (bt,784)
    h = jnp.dot(fc_in, wf1_ref[...], preferred_element_type=f32) + bf1_ref[...]
    h = jnp.dot(h, wf2_ref[...], preferred_element_type=f32) + bf2_ref[...]
    h = jnp.dot(h, wf3_ref[...], preferred_element_type=f32) + bf3_ref[...]
    out_ref[...] = h


# ---------------------------------------------------------------------------
# Host-side weight re-layout (pure data movement, done once, outside jit)
# ---------------------------------------------------------------------------

def prepare_params(params):
    (cw1, cb1, cw2, cb2, fw1, fb1, fw2, fb2, fw3, fb3) = [
        np.asarray(p, np.float32) for p in params]

    # conv1 banded weight: lhs lane = ((qu*2+pr)*2+pc)*16 + vv holds
    # xpad32[2*(a+qu)+pr, 2*vv+pc]; output lane = q*112 + (D%2)*56 + (D//2)*8 + c
    rhs1 = np.zeros((192, 448), np.float32)
    for q in range(4):
        ey, ex = q // 2, q % 2
        for ki in range(5):
            pr, qu = (ey + ki) % 2, (ey + ki) // 2
            for kj in range(5):
                pc, qv = (ex + kj) % 2, (ex + kj) // 2
                blk = (qu * 2 + pr) * 2 + pc
                for D in range(14):
                    row = blk * 16 + D + qv
                    col = q * 112 + (D % 2) * 56 + (D // 2) * 8
                    rhs1[row, col:col + 6] += cw1[:, 0, ki, kj]
    b1x = np.tile(np.pad(cb1, (0, 2)), 14).reshape(1, 112)

    # conv2 banded weight: lhs lane = su*224 + pa*112 + pd*56 + v*8 + ci holds
    # pool1out[2*(su+g)+pa-2, 2*v+pd, ci]; output lane = q*112 + h*16 + co
    rhs2 = np.zeros((672, 448), np.float32)
    for q in range(4):
        fy, fx = q // 2, q % 2
        for ki in range(5):
            pa, su = (fy + ki) % 2, (fy + ki) // 2
            for kj in range(5):
                pd, m = (fx + kj) % 2, (fx + kj) // 2
                for h in range(7):
                    v = h + m - 1
                    if 0 <= v < 7:                      # column border -> omit
                        row = su * 224 + pa * 112 + pd * 56 + v * 8
                        col = q * 112 + h * 16
                        rhs2[row:row + 6, col:col + 16] += cw2[:, :, ki, kj].T
    b2x = np.tile(cb2, 7).reshape(1, 112)

    # fc1: fold NCHW flatten (index co*49 + g*7 + h) into lane order g*112+h*16+co
    wf1 = fw1.reshape(16, 7, 7, 120).transpose(1, 2, 0, 3).reshape(784, 120)
    wf1 = np.pad(wf1, ((0, 0), (0, 8)))
    bf1 = np.pad(fb1, (0, 8)).reshape(1, 128)

    wf2 = np.pad(fw2, ((0, 8), (0, 44)))
    bf2 = np.pad(fb2, (0, 44)).reshape(1, 128)
    wf3 = np.pad(fw3, ((0, 44), (0, 118)))
    bf3 = np.pad(fb3, (0, 118)).reshape(1, 128)

    bf16 = jnp.bfloat16
    return (jnp.asarray(rhs1, bf16), jnp.asarray(b1x),
            jnp.asarray(rhs2, bf16), jnp.asarray(b2x),
            jnp.asarray(wf1), jnp.asarray(bf1),
            jnp.asarray(wf2), jnp.asarray(bf2),
            jnp.asarray(wf3), jnp.asarray(bf3))


def _round_up(n, m):
    return ((n + m - 1) // m) * m


# ---------------------------------------------------------------------------
# Forward wrapper
# ---------------------------------------------------------------------------

@functools.partial(jax.jit, static_argnums=(2,))
def lenet5_forward(x, prep, block_b=64):
    B = x.shape[0]
    bt = _round_up(min(block_b, _round_up(B, 8)), 8)
    Bp = _round_up(B, bt)

    # pad batch + spatial, then parity-decompose (pure relayout, 4 KB/image)
    xs = x[:, 0]
    if Bp != B:
        xs = jnp.pad(xs, ((0, Bp - B), (0, 0), (0, 0)))
    xp = jnp.pad(xs, ((0, 0), (2, 2), (2, 2)))                     # (Bp,32,32)
    xq = xp.reshape(Bp, 8, 4, 16, 2).transpose(0, 1, 2, 4, 3).reshape(Bp, 8, 128)
    xq = jnp.pad(xq, ((0, 0), (0, 8), (0, 0))).astype(jnp.bfloat16)  # (Bp,16,128)

    out = pl.pallas_call(
        lenet5_kernel,
        out_shape=jax.ShapeDtypeStruct((Bp, 128), jnp.float32),
        grid=(Bp // bt,),
        in_specs=[
            pl.BlockSpec((bt, 16, 128), lambda i: (i, 0, 0)),
            pl.BlockSpec((192, 448), lambda i: (0, 0)),
            pl.BlockSpec((1, 112), lambda i: (0, 0)),
            pl.BlockSpec((672, 448), lambda i: (0, 0)),
            pl.BlockSpec((1, 112), lambda i: (0, 0)),
            pl.BlockSpec((784, 128), lambda i: (0, 0)),
            pl.BlockSpec((1, 128), lambda i: (0, 0)),
            pl.BlockSpec((128, 128), lambda i: (0, 0)),
            pl.BlockSpec((1, 128), lambda i: (0, 0)),
            pl.BlockSpec((128, 128), lambda i: (0, 0)),
            pl.BlockSpec((1, 128), lambda i: (0, 0)),
        ],
        out_specs=pl.BlockSpec((bt, 128), lambda i: (i, 0)),
        scratch_shapes=[pltpu.VMEM((bt, 16, 224), jnp.bfloat16)],
        compiler_params=pltpu.CompilerParams(
            dimension_semantics=("parallel",),
            vmem_limit_bytes=48 * 1024 * 1024,
        ),
    )(xq, *prep)

    return out[:B, :10]


# ---------------------------------------------------------------------------
# Pure-JAX reference (float32) for correctness checking
# ---------------------------------------------------------------------------

def ref_forward(x, params):
    (cw1, cb1, cw2, cb2, fw1, fb1, fw2, fb2, fw3, fb3) = params
    dn = ('NCHW', 'OIHW', 'NCHW')

    def conv_relu_pool(y, w, b):
        y = jax.lax.conv_general_dilated(y, w, (1, 1), ((2, 2), (2, 2)),
                                         dimension_numbers=dn)
        y = jnp.maximum(y + b[None, :, None, None], 0.0)
        return jax.lax.reduce_window(y, -jnp.inf, jax.lax.max,
                                     (1, 1, 2, 2), (1, 1, 2, 2), 'VALID')

    y = conv_relu_pool(x, cw1, cb1)
    y = conv_relu_pool(y, cw2, cb2)
    y = y.reshape(x.shape[0], -1)
    y = y @ fw1 + fb1
    y = y @ fw2 + fb2
    return y @ fw3 + fb3


# ---------------------------------------------------------------------------
# main
# ---------------------------------------------------------------------------

if __name__ == "__main__":
    key = jax.random.PRNGKey(0)
    keys = jax.random.split(key, 11)

    def init(k, shape, fan_in):
        return jax.random.normal(k, shape, jnp.float32) / (float(fan_in) ** 0.5)

    params = (
        init(keys[0], (6, 1, 5, 5), 25),        # conv1 weight (OIHW)
        init(keys[1], (6,), 25),                # conv1 bias
        init(keys[2], (16, 6, 5, 5), 150),      # conv2 weight
        init(keys[3], (16,), 150),              # conv2 bias
        init(keys[4], (784, 120), 784),         # fc1 weight (in, out)
        init(keys[5], (120,), 784),             # fc1 bias
        init(keys[6], (120, 84), 120),          # fc2 weight
        init(keys[7], (84,), 120),              # fc2 bias
        init(keys[8], (84, 10), 84),            # out weight
        init(keys[9], (10,), 84),               # out bias
    )

    # LeNet-5 geometry requires 28x28 inputs (flatten dim = 16*7*7 = 784).
    x = jax.random.normal(keys[10], (2, 1, 28, 28), jnp.float32)

    prep = prepare_params(params)               # host-side, eager (numpy)
    out = jax.block_until_ready(lenet5_forward(x, prep))
    ref = jax.block_until_ready(ref_forward(x, params))

    assert out.shape == (2, 10) and out.dtype == jnp.float32
    max_err = float(jnp.max(jnp.abs(out - ref)))
    assert jnp.allclose(out, ref, rtol=3e-2, atol=3e-2), (
        f"mismatch vs JAX reference (max abs err {max_err})")

    print("KERNEL_OK")
</pallas_src>

<mosaic_0001>
module attributes {stable_mosaic.version = 11 : i64} {
  func.func @lenet5_kernel(%arg0: i32, %arg1: memref<8x16x128xbf16, #tpu.memory_space<vmem>>, %arg2: memref<192x448xbf16, #tpu.memory_space<vmem>>, %arg3: memref<1x112xf32, #tpu.memory_space<vmem>>, %arg4: memref<672x448xbf16, #tpu.memory_space<vmem>>, %arg5: memref<1x112xf32, #tpu.memory_space<vmem>>, %arg6: memref<784x128xf32, #tpu.memory_space<vmem>>, %arg7: memref<1x128xf32, #tpu.memory_space<vmem>>, %arg8: memref<128x128xf32, #tpu.memory_space<vmem>>, %arg9: memref<1x128xf32, #tpu.memory_space<vmem>>, %arg10: memref<128x128xf32, #tpu.memory_space<vmem>>, %arg11: memref<1x128xf32, #tpu.memory_space<vmem>>, %arg12: memref<8x128xf32, #tpu.memory_space<vmem>>, %arg13: memref<8x16x224xbf16, #tpu.memory_space<vmem>>) attributes {dimension_semantics = [#tpu.dimension_semantics<parallel>], iteration_bounds = array<i64: 1>, scalar_prefetch = 0 : i64, scratch_operands = 1 : i64, tpu.core_type = #tpu.core_type<tc>, window_params = [{transform_indices = @transform_0, window_bounds = array<i64: 8, 16, 128>}, {pipeline_mode = #tpu.pipeline_mode<synchronous>, transform_indices = @transform_1, window_bounds = array<i64: 192, 448>}, {pipeline_mode = #tpu.pipeline_mode<synchronous>, transform_indices = @transform_2, window_bounds = array<i64: 1, 112>}, {pipeline_mode = #tpu.pipeline_mode<synchronous>, transform_indices = @transform_3, window_bounds = array<i64: 672, 448>}, {pipeline_mode = #tpu.pipeline_mode<synchronous>, transform_indices = @transform_4, window_bounds = array<i64: 1, 112>}, {pipeline_mode = #tpu.pipeline_mode<synchronous>, transform_indices = @transform_5, window_bounds = array<i64: 784, 128>}, {pipeline_mode = #tpu.pipeline_mode<synchronous>, transform_indices = @transform_6, window_bounds = array<i64: 1, 128>}, {pipeline_mode = #tpu.pipeline_mode<synchronous>, transform_indices = @transform_7, window_bounds = array<i64: 128, 128>}, {pipeline_mode = #tpu.pipeline_mode<synchronous>, transform_indices = @transform_8, window_bounds = array<i64: 1, 128>}, {pipeline_mode = #tpu.pipeline_mode<synchronous>, transform_indices = @transform_9, window_bounds = array<i64: 128, 128>}, {pipeline_mode = #tpu.pipeline_mode<synchronous>, transform_indices = @transform_10, window_bounds = array<i64: 1, 128>}, {transform_indices = @transform_11, window_bounds = array<i64: 8, 128>}]} {
    %c0 = arith.constant 0 : index
    %c0_0 = arith.constant 0 : index
    %c0_1 = arith.constant 0 : index
    %0 = vector.load %arg1[%c0, %c0_0, %c0_1] : memref<8x16x128xbf16, #tpu.memory_space<vmem>>, vector<8x8x128xbf16>
    %c0_2 = arith.constant 0 : index
    %c1 = arith.constant 1 : index
    %c0_3 = arith.constant 0 : index
    %1 = vector.load %arg1[%c0_2, %c1, %c0_3] : memref<8x16x128xbf16, #tpu.memory_space<vmem>>, vector<8x8x128xbf16>
    %2 = vector.extract_strided_slice %1 {offsets = [0, 0, 0], sizes = [8, 8, 64], strides = [1, 1, 1]} : vector<8x8x128xbf16> to vector<8x8x64xbf16>
    %3 = tpu.concatenate %0, %2 in 2 : vector<8x8x128xbf16>, vector<8x8x64xbf16> -> vector<8x8x192xbf16>
    %4 = vector.extract_strided_slice %0 {offsets = [0, 0, 64], sizes = [8, 8, 64], strides = [1, 1, 1]} : vector<8x8x128xbf16> to vector<8x8x64xbf16>
    %5 = tpu.concatenate %4, %1 in 2 : vector<8x8x64xbf16>, vector<8x8x128xbf16> -> vector<8x8x192xbf16>
    %cst = arith.constant 0.000000e+00 : bf16
    %6 = vector.broadcast %cst : bf16 to vector<8x1x224xbf16>
    %c0_4 = arith.constant 0 : index
    %c0_5 = arith.constant 0 : index
    %c0_6 = arith.constant 0 : index
    %7 = vector.load %arg13[%c0_4, %c0_5, %c0_6] : memref<8x16x224xbf16, #tpu.memory_space<vmem>>, vector<8x1x224xbf16>
    tpu.vector_store %arg13[%c0_4, %c0_5, %c0_6], %6 {strides = array<i32>} : memref<8x16x224xbf16, #tpu.memory_space<vmem>>, vector<8x1x224xbf16>,
    %cst_7 = arith.constant 0.000000e+00 : bf16
    %8 = vector.broadcast %cst_7 : bf16 to vector<8x2x224xbf16>
    %c0_8 = arith.constant 0 : index
    %c8 = arith.constant 8 : index
    %c0_9 = arith.constant 0 : index
    %9 = vector.load %arg13[%c0_8, %c8, %c0_9] : memref<8x16x224xbf16, #tpu.memory_space<vmem>>, vector<8x2x224xbf16>
    tpu.vector_store %arg13[%c0_8, %c8, %c0_9], %8 {strides = array<i32>} : memref<8x16x224xbf16, #tpu.memory_space<vmem>>, vector<8x2x224xbf16>,
    %10 = vector.shape_cast %3 : vector<8x8x192xbf16> to vector<64x192xbf16>
    %c0_10 = arith.constant 0 : index
    %c0_11 = arith.constant 0 : index
    %11 = vector.load %arg2[%c0_10, %c0_11] : memref<192x448xbf16, #tpu.memory_space<vmem>>, vector<192x448xbf16>
    %cst_12 = arith.constant dense<0.000000e+00> : vector<64x448xf32>
    %12 = tpu.matmul %10, %11, %cst_12 {dimension_numbers = #tpu.dot_dimension_numbers<[1], [0], [0], [1], [0, 0, 1, 1], [], []>} : vector<64x192xbf16>, vector<192x448xbf16>, vector<64x448xf32> -> vector<64x448xf32>
    %13 = vector.extract_strided_slice %12 {offsets = [0, 0], sizes = [64, 112], strides = [1, 1]} : vector<64x448xf32> to vector<64x112xf32>
    %14 = vector.extract_strided_slice %12 {offsets = [0, 112], sizes = [64, 112], strides = [1, 1]} : vector<64x448xf32> to vector<64x112xf32>
    %15 = arith.maximumf %13, %14 : vector<64x112xf32>
    %16 = vector.extract_strided_slice %12 {offsets = [0, 224], sizes = [64, 112], strides = [1, 1]} : vector<64x448xf32> to vector<64x112xf32>
    %17 = vector.extract_strided_slice %12 {offsets = [0, 336], sizes = [64, 112], strides = [1, 1]} : vector<64x448xf32> to vector<64x112xf32>
    %18 = arith.maximumf %16, %17 : vector<64x112xf32>
    %19 = arith.maximumf %15, %18 : vector<64x112xf32>
    %c0_13 = arith.constant 0 : index
    %c0_14 = arith.constant 0 : index
    %20 = vector.load %arg3[%c0_13, %c0_14] : memref<1x112xf32, #tpu.memory_space<vmem>>, vector<1x112xf32>
    %21 = vector.broadcast %20 : vector<1x112xf32> to vector<64x112xf32>
    %22 = arith.addf %19, %21 : vector<64x112xf32>
    %cst_15 = arith.constant 0.000000e+00 : f32
    %23 = vector.broadcast %cst_15 : f32 to vector<64x112xf32>
    %24 = arith.maximumf %22, %23 : vector<64x112xf32>
    %25 = vector.shape_cast %24 : vector<64x112xf32> to vector<8x8x112xf32>
    %26 = vector.extract_strided_slice %25 {offsets = [0, 0, 0], sizes = [8, 7, 112], strides = [1, 1, 1]} : vector<8x8x112xf32> to vector<8x7x112xf32>
    %27 = arith.truncf %26 : vector<8x7x112xf32> to vector<8x7x112xbf16>
    %c0_16 = arith.constant 0 : index
    %c1_17 = arith.constant 1 : index
    %c0_18 = arith.constant 0 : index
    %28 = vector.load %arg13[%c0_16, %c1_17, %c0_18] : memref<8x16x224xbf16, #tpu.memory_space<vmem>>, vector<8x7x112xbf16>
    tpu.vector_store %arg13[%c0_16, %c1_17, %c0_18], %27 {strides = array<i32>} : memref<8x16x224xbf16, #tpu.memory_space<vmem>>, vector<8x7x112xbf16>,
    %29 = vector.shape_cast %5 : vector<8x8x192xbf16> to vector<64x192xbf16>
    %c0_19 = arith.constant 0 : index
    %c0_20 = arith.constant 0 : index
    %30 = vector.load %arg2[%c0_19, %c0_20] : memref<192x448xbf16, #tpu.memory_space<vmem>>, vector<192x448xbf16>
    %cst_21 = arith.constant dense<0.000000e+00> : vector<64x448xf32>
    %31 = tpu.matmul %29, %30, %cst_21 {dimension_numbers = #tpu.dot_dimension_numbers<[1], [0], [0], [1], [0, 0, 1, 1], [], []>} : vector<64x192xbf16>, vector<192x448xbf16>, vector<64x448xf32> -> vector<64x448xf32>
    %32 = vector.extract_strided_slice %31 {offsets = [0, 0], sizes = [64, 112], strides = [1, 1]} : vector<64x448xf32> to vector<64x112xf32>
    %33 = vector.extract_strided_slice %31 {offsets = [0, 112], sizes = [64, 112], strides = [1, 1]} : vector<64x448xf32> to vector<64x112xf32>
    %34 = arith.maximumf %32, %33 : vector<64x112xf32>
    %35 = vector.extract_strided_slice %31 {offsets = [0, 224], sizes = [64, 112], strides = [1, 1]} : vector<64x448xf32> to vector<64x112xf32>
    %36 = vector.extract_strided_slice %31 {offsets = [0, 336], sizes = [64, 112], strides = [1, 1]} : vector<64x448xf32> to vector<64x112xf32>
    %37 = arith.maximumf %35, %36 : vector<64x112xf32>
    %38 = arith.maximumf %34, %37 : vector<64x112xf32>
    %c0_22 = arith.constant 0 : index
    %c0_23 = arith.constant 0 : index
    %39 = vector.load %arg3[%c0_22, %c0_23] : memref<1x112xf32, #tpu.memory_space<vmem>>, vector<1x112xf32>
    %40 = vector.broadcast %39 : vector<1x112xf32> to vector<64x112xf32>
    %41 = arith.addf %38, %40 : vector<64x112xf32>
    %cst_24 = arith.constant 0.000000e+00 : f32
    %42 = vector.broadcast %cst_24 : f32 to vector<64x112xf32>
    %43 = arith.maximumf %41, %42 : vector<64x112xf32>
    %44 = vector.shape_cast %43 : vector<64x112xf32> to vector<8x8x112xf32>
    %45 = vector.extract_strided_slice %44 {offsets = [0, 0, 0], sizes = [8, 7, 112], strides = [1, 1, 1]} : vector<8x8x112xf32> to vector<8x7x112xf32>
    %46 = arith.truncf %45 : vector<8x7x112xf32> to vector<8x7x112xbf16>
    %c0_25 = arith.constant 0 : index
    %c1_26 = arith.constant 1 : index
    %c112 = arith.constant 112 : index
    %47 = vector.load %arg13[%c0_25, %c1_26, %c112] : memref<8x16x224xbf16, #tpu.memory_space<vmem>>, vector<8x7x112xbf16>
    tpu.vector_store %arg13[%c0_25, %c1_26, %c112], %46 {strides = array<i32>} : memref<8x16x224xbf16, #tpu.memory_space<vmem>>, vector<8x7x112xbf16>,
    %c0_27 = arith.constant 0 : index
    %c0_28 = arith.constant 0 : index
    %c0_29 = arith.constant 0 : index
    %48 = vector.load %arg13[%c0_27, %c0_28, %c0_29] : memref<8x16x224xbf16, #tpu.memory_space<vmem>>, vector<8x8x224xbf16>
    %c0_30 = arith.constant 0 : index
    %c1_31 = arith.constant 1 : index
    %c0_32 = arith.constant 0 : index
    %49 = vector.load %arg13[%c0_30, %c1_31, %c0_32] : memref<8x16x224xbf16, #tpu.memory_space<vmem>>, vector<8x8x224xbf16>
    %c0_33 = arith.constant 0 : index
    %c2 = arith.constant 2 : index
    %c0_34 = arith.constant 0 : index
    %50 = vector.load %arg13[%c0_33, %c2, %c0_34] : memref<8x16x224xbf16, #tpu.memory_space<vmem>>, vector<8x8x224xbf16>
    %51 = tpu.concatenate %48, %49, %50 in 2 : vector<8x8x224xbf16>, vector<8x8x224xbf16>, vector<8x8x224xbf16> -> vector<8x8x672xbf16>
    %52 = vector.shape_cast %51 : vector<8x8x672xbf16> to vector<64x672xbf16>
    %c0_35 = arith.constant 0 : index
    %c0_36 = arith.constant 0 : index
    %53 = vector.load %arg4[%c0_35, %c0_36] : memref<672x448xbf16, #tpu.memory_space<vmem>>, vector<672x448xbf16>
    %cst_37 = arith.constant dense<0.000000e+00> : vector<64x448xf32>
    %54 = tpu.matmul %52, %53, %cst_37 {dimension_numbers = #tpu.dot_dimension_numbers<[1], [0], [0], [1], [0, 0, 1, 1], [], []>} : vector<64x672xbf16>, vector<672x448xbf16>, vector<64x448xf32> -> vector<64x448xf32>
    %55 = vector.extract_strided_slice %54 {offsets = [0, 0], sizes = [64, 112], strides = [1, 1]} : vector<64x448xf32> to vector<64x112xf32>
    %56 = vector.extract_strided_slice %54 {offsets = [0, 112], sizes = [64, 112], strides = [1, 1]} : vector<64x448xf32> to vector<64x112xf32>
    %57 = arith.maximumf %55, %56 : vector<64x112xf32>
    %58 = vector.extract_strided_slice %54 {offsets = [0, 224], sizes = [64, 112], strides = [1, 1]} : vector<64x448xf32> to vector<64x112xf32>
    %59 = vector.extract_strided_slice %54 {offsets = [0, 336], sizes = [64, 112], strides = [1, 1]} : vector<64x448xf32> to vector<64x112xf32>
    %60 = arith.maximumf %58, %59 : vector<64x112xf32>
    %61 = arith.maximumf %57, %60 : vector<64x112xf32>
    %c0_38 = arith.constant 0 : index
    %c0_39 = arith.constant 0 : index
    %62 = vector.load %arg5[%c0_38, %c0_39] : memref<1x112xf32, #tpu.memory_space<vmem>>, vector<1x112xf32>
    %63 = vector.broadcast %62 : vector<1x112xf32> to vector<64x112xf32>
    %64 = arith.addf %61, %63 : vector<64x112xf32>
    %cst_40 = arith.constant 0.000000e+00 : f32
    %65 = vector.broadcast %cst_40 : f32 to vector<64x112xf32>
    %66 = arith.maximumf %64, %65 : vector<64x112xf32>
    %67 = vector.shape_cast %66 : vector<64x112xf32> to vector<8x8x112xf32>
    %68 = vector.extract_strided_slice %67 {offsets = [0, 0, 0], sizes = [8, 1, 112], strides = [1, 1, 1]} : vector<8x8x112xf32> to vector<8x1x112xf32>
    %69 = vector.shape_cast %68 : vector<8x1x112xf32> to vector<8x112xf32>
    %70 = vector.extract_strided_slice %67 {offsets = [0, 1, 0], sizes = [8, 1, 112], strides = [1, 1, 1]} : vector<8x8x112xf32> to vector<8x1x112xf32>
    %71 = vector.shape_cast %70 : vector<8x1x112xf32> to vector<8x112xf32>
    %72 = vector.extract_strided_slice %67 {offsets = [0, 2, 0], sizes = [8, 1, 112], strides = [1, 1, 1]} : vector<8x8x112xf32> to vector<8x1x112xf32>
    %73 = vector.shape_cast %72 : vector<8x1x112xf32> to vector<8x112xf32>
    %74 = vector.extract_strided_slice %67 {offsets = [0, 3, 0], sizes = [8, 1, 112], strides = [1, 1, 1]} : vector<8x8x112xf32> to vector<8x1x112xf32>
    %75 = vector.shape_cast %74 : vector<8x1x112xf32> to vector<8x112xf32>
    %76 = vector.extract_strided_slice %67 {offsets = [0, 4, 0], sizes = [8, 1, 112], strides = [1, 1, 1]} : vector<8x8x112xf32> to vector<8x1x112xf32>
    %77 = vector.shape_cast %76 : vector<8x1x112xf32> to vector<8x112xf32>
    %78 = vector.extract_strided_slice %67 {offsets = [0, 5, 0], sizes = [8, 1, 112], strides = [1, 1, 1]} : vector<8x8x112xf32> to vector<8x1x112xf32>
    %79 = vector.shape_cast %78 : vector<8x1x112xf32> to vector<8x112xf32>
    %80 = vector.extract_strided_slice %67 {offsets = [0, 6, 0], sizes = [8, 1, 112], strides = [1, 1, 1]} : vector<8x8x112xf32> to vector<8x1x112xf32>
    %81 = vector.shape_cast %80 : vector<8x1x112xf32> to vector<8x112xf32>
    %82 = tpu.concatenate %69, %71, %73, %75, %77, %79, %81 in 1 : vector<8x112xf32>, vector<8x112xf32>, vector<8x112xf32>, vector<8x112xf32>, vector<8x112xf32>, vector<8x112xf32>, vector<8x112xf32> -> vector<8x784xf32>
    %c0_41 = arith.constant 0 : index
    %c0_42 = arith.constant 0 : index
    %83 = vector.load %arg6[%c0_41, %c0_42] : memref<784x128xf32, #tpu.memory_space<vmem>>, vector<784x128xf32>
    %cst_43 = arith.constant dense<0.000000e+00> : vector<8x128xf32>
    %84 = tpu.matmul %82, %83, %cst_43 {dimension_numbers = #tpu.dot_dimension_numbers<[1], [0], [0], [1], [0, 0, 1, 1], [], []>} : vector<8x784xf32>, vector<784x128xf32>, vector<8x128xf32> -> vector<8x128xf32>
    %c0_44 = arith.constant 0 : index
    %c0_45 = arith.constant 0 : index
    %85 = vector.load %arg7[%c0_44, %c0_45] : memref<1x128xf32, #tpu.memory_space<vmem>>, vector<1x128xf32>
    %86 = vector.broadcast %85 : vector<1x128xf32> to vector<8x128xf32>
    %87 = arith.addf %84, %86 : vector<8x128xf32>
    %c0_46 = arith.constant 0 : index
    %c0_47 = arith.constant 0 : index
    %88 = vector.load %arg8[%c0_46, %c0_47] : memref<128x128xf32, #tpu.memory_space<vmem>>, vector<128x128xf32>
    %cst_48 = arith.constant dense<0.000000e+00> : vector<8x128xf32>
    %89 = tpu.matmul %87, %88, %cst_48 {dimension_numbers = #tpu.dot_dimension_numbers<[1], [0], [0], [1], [0, 0, 1, 1], [], []>} : vector<8x128xf32>, vector<128x128xf32>, vector<8x128xf32> -> vector<8x128xf32>
    %c0_49 = arith.constant 0 : index
    %c0_50 = arith.constant 0 : index
    %90 = vector.load %arg9[%c0_49, %c0_50] : memref<1x128xf32, #tpu.memory_space<vmem>>, vector<1x128xf32>
    %91 = vector.broadcast %90 : vector<1x128xf32> to vector<8x128xf32>
    %92 = arith.addf %89, %91 : vector<8x128xf32>
    %c0_51 = arith.constant 0 : index
    %c0_52 = arith.constant 0 : index
    %93 = vector.load %arg10[%c0_51, %c0_52] : memref<128x128xf32, #tpu.memory_space<vmem>>, vector<128x128xf32>
    %cst_53 = arith.constant dense<0.000000e+00> : vector<8x128xf32>
    %94 = tpu.matmul %92, %93, %cst_53 {dimension_numbers = #tpu.dot_dimension_numbers<[1], [0], [0], [1], [0, 0, 1, 1], [], []>} : vector<8x128xf32>, vector<128x128xf32>, vector<8x128xf32> -> vector<8x128xf32>
    %c0_54 = arith.constant 0 : index
    %c0_55 = arith.constant 0 : index
    %95 = vector.load %arg11[%c0_54, %c0_55] : memref<1x128xf32, #tpu.memory_space<vmem>>, vector<1x128xf32>
    %96 = vector.broadcast %95 : vector<1x128xf32> to vector<8x128xf32>
    %97 = arith.addf %94, %96 : vector<8x128xf32>
    %c0_56 = arith.constant 0 : index
    %c0_57 = arith.constant 0 : index
    %98 = vector.load %arg12[%c0_56, %c0_57] : memref<8x128xf32, #tpu.memory_space<vmem>>, vector<8x128xf32>
    tpu.vector_store %arg12[%c0_56, %c0_57], %97 {strides = array<i32>} : memref<8x128xf32, #tpu.memory_space<vmem>>, vector<8x128xf32>,
    return
  }
  func.func @transform_0(%arg0: i32) -> (i32, i32, i32) {
    %c0_i32 = arith.constant 0 : i32
    %c0_i32_0 = arith.constant 0 : i32
    %c0_i32_1 = arith.constant 0 : i32
    return %arg0, %c0_i32, %c0_i32_0 : i32, i32, i32
  }
  func.func @transform_1(%arg0: i32) -> (i32, i32) {
    %c0_i32 = arith.constant 0 : i32
    %c0_i32_0 = arith.constant 0 : i32
    %c0_i32_1 = arith.constant 0 : i32
    return %c0_i32, %c0_i32_0 : i32, i32
  }
  func.func @transform_2(%arg0: i32) -> (i32, i32) {
    %c0_i32 = arith.constant 0 : i32
    %c0_i32_0 = arith.constant 0 : i32
    %c0_i32_1 = arith.constant 0 : i32
    return %c0_i32, %c0_i32_0 : i32, i32
  }
  func.func @transform_3(%arg0: i32) -> (i32, i32) {
    %c0_i32 = arith.constant 0 : i32
    %c0_i32_0 = arith.constant 0 : i32
    %c0_i32_1 = arith.constant 0 : i32
    return %c0_i32, %c0_i32_0 : i32, i32
  }
  func.func @transform_4(%arg0: i32) -> (i32, i32) {
    %c0_i32 = arith.constant 0 : i32
    %c0_i32_0 = arith.constant 0 : i32
    %c0_i32_1 = arith.constant 0 : i32
    return %c0_i32, %c0_i32_0 : i32, i32
  }
  func.func @transform_5(%arg0: i32) -> (i32, i32) {
    %c0_i32 = arith.constant 0 : i32
    %c0_i32_0 = arith.constant 0 : i32
    %c0_i32_1 = arith.constant 0 : i32
    return %c0_i32, %c0_i32_0 : i32, i32
  }
  func.func @transform_6(%arg0: i32) -> (i32, i32) {
    %c0_i32 = arith.constant 0 : i32
    %c0_i32_0 = arith.constant 0 : i32
    %c0_i32_1 = arith.constant 0 : i32
    return %c0_i32, %c0_i32_0 : i32, i32
  }
  func.func @transform_7(%arg0: i32) -> (i32, i32) {
    %c0_i32 = arith.constant 0 : i32
    %c0_i32_0 = arith.constant 0 : i32
    %c0_i32_1 = arith.constant 0 : i32
    return %c0_i32, %c0_i32_0 : i32, i32
  }
  func.func @transform_8(%arg0: i32) -> (i32, i32) {
    %c0_i32 = arith.constant 0 : i32
    %c0_i32_0 = arith.constant 0 : i32
    %c0_i32_1 = arith.constant 0 : i32
    return %c0_i32, %c0_i32_0 : i32, i32
  }
  func.func @transform_9(%arg0: i32) -> (i32, i32) {
    %c0_i32 = arith.constant 0 : i32
    %c0_i32_0 = arith.constant 0 : i32
    %c0_i32_1 = arith.constant 0 : i32
    return %c0_i32, %c0_i32_0 : i32, i32
  }
  func.func @transform_10(%arg0: i32) -> (i32, i32) {
    %c0_i32 = arith.constant 0 : i32
    %c0_i32_0 = arith.constant 0 : i32
    %c0_i32_1 = arith.constant 0 : i32
    return %c0_i32, %c0_i32_0 : i32, i32
  }
  func.func @transform_11(%arg0: i32) -> (i32, i32) {
    %c0_i32 = arith.constant 0 : i32
    %c0_i32_0 = arith.constant 0 : i32
    return %arg0, %c0_i32 : i32, i32
  }
}

</mosaic_0001>

<llo_original>
// kernel: lenet5_forward.1
$region0: #{lenet5_forward.1}
  #allocation0 [shape = 'u32[]', space=smem, size = 0x4, offset = 0x4, fixed_abs, tag = 'smem constant byte address 0x4 - core index']
  #allocation1 [shape = 'u32[144,128]{1,0:T(1,128)}', space=vmem, size = 0x12000, scoped, tag = 'internal scratch']
  #allocation2 [shape = 'bf16[8,16,224]{2,1,0:T(16,128)(2,1)}', space=vmem, size = 0x10000, scoped, tag = 'scratch operand']
  %s0 = inlined_call_operand.vmem [shape: bf16[8,16,128], index: 0, kind: input, shape index: {}]
  %s1 = inlined_call_operand.vmem [shape: bf16[192,448], index: 1, kind: input, shape index: {}]
  %s2 = inlined_call_operand.vmem [shape: f32[1,112], index: 2, kind: input, shape index: {}]
  %s3 = inlined_call_operand.vmem [shape: bf16[672,448], index: 3, kind: input, shape index: {}]
  %s4 = inlined_call_operand.vmem [shape: f32[1,112], index: 4, kind: input, shape index: {}]
  %s5 = inlined_call_operand.vmem [shape: f32[784,128], index: 5, kind: input, shape index: {}]
  %s6 = inlined_call_operand.vmem [shape: f32[1,128], index: 6, kind: input, shape index: {}]
  %s7 = inlined_call_operand.vmem [shape: f32[128,128], index: 7, kind: input, shape index: {}]
  %s8 = inlined_call_operand.vmem [shape: f32[1,128], index: 8, kind: input, shape index: {}]
  %s9 = inlined_call_operand.vmem [shape: f32[128,128], index: 9, kind: input, shape index: {}]
  %s10 = inlined_call_operand.vmem [shape: f32[1,128], index: 10, kind: input, shape index: {}]
  %s11 = inlined_call_operand.vmem [shape: f32[8,128], index: 11, kind: output, shape index: {}]
  %s12 = sld [smem:[#allocation0]]
  $region54: #{lenet5_forward.1} parent=0
    _
  %s14 = ssub.s32 1, %s12
  %s15 = scalar_select 0, %s14, %s12
  // Predicated region
  $region2: #{lenet5_forward.1} parent=0 // pred_check
    _
  $region3: #{lenet5_forward.1} parent=0 // pred_check_branch
    %17 = sbr.rel (0) target = $region5
  $region4: #{lenet5_forward.1} parent=0 // pred_region
    _
  $region5: #{lenet5_forward.1} parent=0 // pred_fallthru
    _
  // Predicated region
  $region6: #{lenet5_forward.1} parent=0 // pred_check
    _
  $region7: #{lenet5_forward.1} parent=0 // pred_check_branch
    %19 = sbr.rel (0) target = $region9
  $region8: #{lenet5_forward.1} parent=0 // pred_region
    _
  $region9: #{lenet5_forward.1} parent=0 // pred_fallthru
    _
  // Predicated region
  $region10: #{lenet5_forward.1} parent=0 // pred_check
    _
  $region11: #{lenet5_forward.1} parent=0 // pred_check_branch
    %21 = sbr.rel (0) target = $region13
  $region12: #{lenet5_forward.1} parent=0 // pred_region
    _
  $region13: #{lenet5_forward.1} parent=0 // pred_fallthru
    _
  // Predicated region
  $region14: #{lenet5_forward.1} parent=0 // pred_check
    _
  $region15: #{lenet5_forward.1} parent=0 // pred_check_branch
    %23 = sbr.rel (0) target = $region17
  $region16: #{lenet5_forward.1} parent=0 // pred_region
    _
  $region17: #{lenet5_forward.1} parent=0 // pred_fallthru
    _
  // Predicated region
  $region18: #{lenet5_forward.1} parent=0 // pred_check
    _
  $region19: #{lenet5_forward.1} parent=0 // pred_check_branch
    %25 = sbr.rel (0) target = $region21
  $region20: #{lenet5_forward.1} parent=0 // pred_region
    _
  $region21: #{lenet5_forward.1} parent=0 // pred_fallthru
    _
  // Predicated region
  $region22: #{lenet5_forward.1} parent=0 // pred_check
    _
  $region23: #{lenet5_forward.1} parent=0 // pred_check_branch
    %27 = sbr.rel (0) target = $region25
  $region24: #{lenet5_forward.1} parent=0 // pred_region
    _
  $region25: #{lenet5_forward.1} parent=0 // pred_fallthru
    _
  // Predicated region
  $region26: #{lenet5_forward.1} parent=0 // pred_check
    _
  $region27: #{lenet5_forward.1} parent=0 // pred_check_branch
    %29 = sbr.rel (0) target = $region29
  $region28: #{lenet5_forward.1} parent=0 // pred_region
    _
  $region29: #{lenet5_forward.1} parent=0 // pred_fallthru
    _
  // Predicated region
  $region30: #{lenet5_forward.1} parent=0 // pred_check
    _
  $region31: #{lenet5_forward.1} parent=0 // pred_check_branch
    %31 = sbr.rel (0) target = $region33
  $region32: #{lenet5_forward.1} parent=0 // pred_region
    _
  $region33: #{lenet5_forward.1} parent=0 // pred_fallthru
    _
  // Predicated region
  $region34: #{lenet5_forward.1} parent=0 // pred_check
    _
  $region35: #{lenet5_forward.1} parent=0 // pred_check_branch
    %33 = sbr.rel (0) target = $region37
  $region36: #{lenet5_forward.1} parent=0 // pred_region
    _
  $region37: #{lenet5_forward.1} parent=0 // pred_fallthru
    _
  // Predicated region
  $region38: #{lenet5_forward.1} parent=0 // pred_check
    _
  $region39: #{lenet5_forward.1} parent=0 // pred_check_branch
    %35 = sbr.rel (0) target = $region41
  $region40: #{lenet5_forward.1} parent=0 // pred_region
    _
  $region41: #{lenet5_forward.1} parent=0 // pred_fallthru
    _
  // Predicated region
  $region42: #{lenet5_forward.1} parent=0 // pred_check
    _
  $region43: #{lenet5_forward.1} parent=0 // pred_check_branch
    %37 = sbr.rel (0) target = $region45
  $region44: #{lenet5_forward.1} parent=0 // pred_region
    _
  $region45: #{lenet5_forward.1} parent=0 // pred_fallthru
    _
  %v39 = vld [vmem:[%s0] sm:$0xf]
  %v40 = vld [vmem:[%s0 + $0x8] sm:$0xf]
  %v41 = vld [vmem:[%s0 + $0x10] sm:$0xf]
  %v42 = vld [vmem:[%s0 + $0x18] sm:$0xf]
  %v43 = vld [vmem:[%s0 + $0x20] sm:$0xf]
  %v44 = vld [vmem:[%s0 + $0x28] sm:$0xf]
  %v45 = vld [vmem:[%s0 + $0x30] sm:$0xf]
  %v46 = vld [vmem:[%s0 + $0x38] sm:$0xf]
  %v47 = vld [vmem:[%s0] sm:$0xf]
  %v48 = vld [vmem:[%s0 + $0x4] sm:$0x1]
  %v49 = vld [vmem:[%s0 + $0x8] sm:$0xf]
  %v50 = vld [vmem:[%s0 + $0xc] sm:$0x1]
  %v51 = vld [vmem:[%s0 + $0x10] sm:$0xf]
  %v52 = vld [vmem:[%s0 + $0x14] sm:$0x1]
  %v53 = vld [vmem:[%s0 + $0x18] sm:$0xf]
  %v54 = vld [vmem:[%s0 + $0x1c] sm:$0x1]
  %v55 = vld [vmem:[%s0 + $0x20] sm:$0xf]
  %v56 = vld [vmem:[%s0 + $0x24] sm:$0x1]
  %v57 = vld [vmem:[%s0 + $0x28] sm:$0xf]
  %v58 = vld [vmem:[%s0 + $0x2c] sm:$0x1]
  %v59 = vld [vmem:[%s0 + $0x30] sm:$0xf]
  %v60 = vld [vmem:[%s0 + $0x34] sm:$0x1]
  %v61 = vld [vmem:[%s0 + $0x38] sm:$0xf]
  %v62 = vld [vmem:[%s0 + $0x3c] sm:$0x1]
  %v79 = vunpack.c.l.b16 %v47
  %v80 = vunpack.c.l.b16 %v48
  %v81 = vunpack.c.l.b16 %v49
  %v82 = vunpack.c.l.b16 %v50
  %v83 = vunpack.c.l.b16 %v51
  %v84 = vunpack.c.l.b16 %v52
  %v85 = vunpack.c.l.b16 %v53
  %v86 = vunpack.c.l.b16 %v54
  %v87 = vunpack.c.l.b16 %v55
  %v88 = vunpack.c.l.b16 %v56
  %v89 = vunpack.c.l.b16 %v57
  %v90 = vunpack.c.l.b16 %v58
  %v91 = vunpack.c.l.b16 %v59
  %v92 = vunpack.c.l.b16 %v60
  %v93 = vunpack.c.l.b16 %v61
  %v94 = vunpack.c.l.b16 %v62
  %v95 = vpack.c.b16 %v80, %v79
  %v96 = vpack.c.b16 %v82, %v81
  %v97 = vpack.c.b16 %v84, %v83
  %v98 = vpack.c.b16 %v86, %v85
  %v99 = vpack.c.b16 %v88, %v87
  %v100 = vpack.c.b16 %v90, %v89
  %v101 = vpack.c.b16 %v92, %v91
  %v102 = vpack.c.b16 %v94, %v93
  %v104 = vshrl.u32 %v95, 16
  %v106 = vshll.u32 %v95, 16
  %v108 = vrot.slane %v106, 1
  %v109 = vor.u32 %v104, %v108
  %v111 = vshrl.u32 %v96, 16
  %v113 = vshll.u32 %v96, 16
  %v115 = vrot.slane %v113, 1
  %v116 = vor.u32 %v111, %v115
  %v118 = vshrl.u32 %v97, 16
  %v120 = vshll.u32 %v97, 16
  %v122 = vrot.slane %v120, 1
  %v123 = vor.u32 %v118, %v122
  %v125 = vshrl.u32 %v98, 16
  %v127 = vshll.u32 %v98, 16
  %v129 = vrot.slane %v127, 1
  %v130 = vor.u32 %v125, %v129
  %v132 = vshrl.u32 %v99, 16
  %v134 = vshll.u32 %v99, 16
  %v136 = vrot.slane %v134, 1
  %v137 = vor.u32 %v132, %v136
  %v139 = vshrl.u32 %v100, 16
  %v141 = vshll.u32 %v100, 16
  %v143 = vrot.slane %v141, 1
  %v144 = vor.u32 %v139, %v143
  %v146 = vshrl.u32 %v101, 16
  %v148 = vshll.u32 %v101, 16
  %v150 = vrot.slane %v148, 1
  %v151 = vor.u32 %v146, %v150
  %v153 = vshrl.u32 %v102, 16
  %v155 = vshll.u32 %v102, 16
  %v157 = vrot.slane %v155, 1
  %v158 = vor.u32 %v153, %v157
  %v167 = vunpack.c.l.b16 %v39
  %v168 = vunpack.c.l.b16 %v40
  %v169 = vunpack.c.l.b16 %v41
  %v170 = vunpack.c.l.b16 %v42
  %v171 = vunpack.c.l.b16 %v43
  %v172 = vunpack.c.l.b16 %v44
  %v173 = vunpack.c.l.b16 %v45
  %v174 = vunpack.c.l.b16 %v46
  %v175 = vpack.c.b16 %v167, %v167
  %v176 = vpack.c.b16 %v168, %v168
  %v177 = vpack.c.b16 %v169, %v169
  %v178 = vpack.c.b16 %v170, %v170
  %v179 = vpack.c.b16 %v171, %v171
  %v180 = vpack.c.b16 %v172, %v172
  %v181 = vpack.c.b16 %v173, %v173
  %v182 = vpack.c.b16 %v174, %v174
  %183 = vrot.lane.b32.xlu0 %v175, 64
  %v184 = vpop.permute.xlu0 %183
  %185 = vrot.lane.b32.xlu0 %v176, 64
  %v186 = vpop.permute.xlu0 %185
  %187 = vrot.lane.b32.xlu0 %v177, 64
  %v188 = vpop.permute.xlu0 %187
  %189 = vrot.lane.b32.xlu0 %v178, 64
  %v190 = vpop.permute.xlu0 %189
  %191 = vrot.lane.b32.xlu0 %v179, 64
  %v192 = vpop.permute.xlu0 %191
  %193 = vrot.lane.b32.xlu0 %v180, 64
  %v194 = vpop.permute.xlu0 %193
  %195 = vrot.lane.b32.xlu0 %v181, 64
  %v196 = vpop.permute.xlu0 %195
  %197 = vrot.lane.b32.xlu0 %v182, 64
  %v198 = vpop.permute.xlu0 %197
  %199 = vrot.lane.b32.xlu0 %v109, 64
  %v200 = vpop.permute.xlu0 %199
  %201 = vrot.lane.b32.xlu0 %v116, 64
  %v202 = vpop.permute.xlu0 %201
  %203 = vrot.lane.b32.xlu0 %v123, 64
  %v204 = vpop.permute.xlu0 %203
  %205 = vrot.lane.b32.xlu0 %v130, 64
  %v206 = vpop.permute.xlu0 %205
  %207 = vrot.lane.b32.xlu0 %v137, 64
  %v208 = vpop.permute.xlu0 %207
  %209 = vrot.lane.b32.xlu0 %v144, 64
  %v210 = vpop.permute.xlu0 %209
  %211 = vrot.lane.b32.xlu0 %v151, 64
  %v212 = vpop.permute.xlu0 %211
  %213 = vrot.lane.b32.xlu0 %v158, 64
  %v214 = vpop.permute.xlu0 %213
  %vm215 = vcmask 523264
  %v218 = vsel %vm215, %v184, %v200
  %v221 = vsel %vm215, %v186, %v202
  %v224 = vsel %vm215, %v188, %v204
  %v227 = vsel %vm215, %v190, %v206
  %v230 = vsel %vm215, %v192, %v208
  %v233 = vsel %vm215, %v194, %v210
  %v236 = vsel %vm215, %v196, %v212
  %v239 = vsel %vm215, %v198, %v214
  %vm240 = vcmask 1040384
  %vm241 = vsmask.f32 256
  %vm242 = vmand %vm240, %vm241
  %v243 = vld [vmem:[#allocation2] sm:$0x1]
  %v244 = vsel %vm242, 0, %v243
  %245 = vst [vmem:[#allocation2] sm:$0x1] %v244
  %vm246 = vcmask 778240
  %vm247 = vmand %vm246, %vm241
  %v248 = vld [vmem:[#allocation2 + $0x8] sm:$0x1]
  %v249 = vsel %vm247, 0, %v248
  %250 = vst [vmem:[#allocation2 + $0x8] sm:$0x1] %v249
  %v251 = vld [vmem:[#allocation2 + $0x10] sm:$0x1]
  %v252 = vsel %vm242, 0, %v251
  %253 = vst [vmem:[#allocation2 + $0x10] sm:$0x1] %v252
  %v254 = vld [vmem:[#allocation2 + $0x18] sm:$0x1]
  %v255 = vsel %vm247, 0, %v254
  %256 = vst [vmem:[#allocation2 + $0x18] sm:$0x1] %v255
  %v257 = vld [vmem:[#allocation2 + $0x20] sm:$0x1]
  %v258 = vsel %vm242, 0, %v257
  %259 = vst [vmem:[#allocation2 + $0x20] sm:$0x1] %v258
  %v260 = vld [vmem:[#allocation2 + $0x28] sm:$0x1]
  %v261 = vsel %vm247, 0, %v260
  %262 = vst [vmem:[#allocation2 + $0x28] sm:$0x1] %v261
  %v263 = vld [vmem:[#allocation2 + $0x30] sm:$0x1]
  %v264 = vsel %vm242, 0, %v263
  %265 = vst [vmem:[#allocation2 + $0x30] sm:$0x1] %v264
  %v266 = vld [vmem:[#allocation2 + $0x38] sm:$0x1]
  %v267 = vsel %vm247, 0, %v266
  %268 = vst [vmem:[#allocation2 + $0x38] sm:$0x1] %v267
  %v269 = vld [vmem:[#allocation2 + $0x40] sm:$0x1]
  %v270 = vsel %vm242, 0, %v269
  %271 = vst [vmem:[#allocation2 + $0x40] sm:$0x1] %v270
  %v272 = vld [vmem:[#allocation2 + $0x48] sm:$0x1]
  %v273 = vsel %vm247, 0, %v272
  %274 = vst [vmem:[#allocation2 + $0x48] sm:$0x1] %v273
  %v275 = vld [vmem:[#allocation2 + $0x50] sm:$0x1]
  %v276 = vsel %vm242, 0, %v275
  %277 = vst [vmem:[#allocation2 + $0x50] sm:$0x1] %v276
  %v278 = vld [vmem:[#allocation2 + $0x58] sm:$0x1]
  %v279 = vsel %vm247, 0, %v278
  %280 = vst [vmem:[#allocation2 + $0x58] sm:$0x1] %v279
  %v281 = vld [vmem:[#allocation2 + $0x60] sm:$0x1]
  %v282 = vsel %vm242, 0, %v281
  %283 = vst [vmem:[#allocation2 + $0x60] sm:$0x1] %v282
  %v284 = vld [vmem:[#allocation2 + $0x68] sm:$0x1]
  %v285 = vsel %vm247, 0, %v284
  %286 = vst [vmem:[#allocation2 + $0x68] sm:$0x1] %v285
  %v287 = vld [vmem:[#allocation2 + $0x70] sm:$0x1]
  %v288 = vsel %vm242, 0, %v287
  %289 = vst [vmem:[#allocation2 + $0x70] sm:$0x1] %v288
  %v290 = vld [vmem:[#allocation2 + $0x78] sm:$0x1]
  %v291 = vsel %vm247, 0, %v290
  %292 = vst [vmem:[#allocation2 + $0x78] sm:$0x1] %v291
  %293 = vst [vmem:[#allocation2] sm:$0x10] 0
  %vm294 = vcmask 782340
  %295 = vst.msk [vmem:[#allocation2 + $0x8] sm:$0x10] %vm294, 0
  %296 = vst [vmem:[#allocation2 + $0x10] sm:$0x10] 0
  %297 = vst.msk [vmem:[#allocation2 + $0x18] sm:$0x10] %vm294, 0
  %298 = vst [vmem:[#allocation2 + $0x20] sm:$0x10] 0
  %299 = vst.msk [vmem:[#allocation2 + $0x28] sm:$0x10] %vm294, 0
  %300 = vst [vmem:[#allocation2 + $0x30] sm:$0x10] 0
  %301 = vst.msk [vmem:[#allocation2 + $0x38] sm:$0x10] %vm294, 0
  %302 = vst [vmem:[#allocation2 + $0x40] sm:$0x10] 0
  %303 = vst.msk [vmem:[#allocation2 + $0x48] sm:$0x10] %vm294, 0
  %304 = vst [vmem:[#allocation2 + $0x50] sm:$0x10] 0
  %305 = vst.msk [vmem:[#allocation2 + $0x58] sm:$0x10] %vm294, 0
  %306 = vst [vmem:[#allocation2 + $0x60] sm:$0x10] 0
  %307 = vst.msk [vmem:[#allocation2 + $0x68] sm:$0x10] %vm294, 0
  %308 = vst [vmem:[#allocation2 + $0x70] sm:$0x10] 0
  %309 = vst.msk [vmem:[#allocation2 + $0x78] sm:$0x10] %vm294, 0
  %v310 = vunpack.c.l.b16 %v109
  %v311 = vunpack.c.l.b16 %v116
  %v312 = vunpack.c.l.b16 %v123
  %v313 = vunpack.c.l.b16 %v130
  %v314 = vunpack.c.l.b16 %v137
  %v315 = vunpack.c.l.b16 %v144
  %v316 = vunpack.c.l.b16 %v151
  %v317 = vunpack.c.l.b16 %v158
  %v318 = vld [vmem:[%s1] sm:$0xff]
  %v319 = vld [vmem:[%s1 + $0x8] sm:$0xff]
  %v320 = vld [vmem:[%s1 + $0x10] sm:$0xff]
  %v321 = vld [vmem:[%s1 + $0x18] sm:$0xff]
  %v322 = vld [vmem:[%s1 + $0x20] sm:$0xff]
  %v323 = vld [vmem:[%s1 + $0x28] sm:$0xff]
  %v324 = vld [vmem:[%s1 + $0x30] sm:$0xff]
  %v325 = vld [vmem:[%s1 + $0x38] sm:$0xff]
  %v326 = vld [vmem:[%s1 + $0x40] sm:$0xff]
  %v327 = vld [vmem:[%s1 + $0x48] sm:$0xff]
  %v328 = vld [vmem:[%s1 + $0x50] sm:$0xff]
  %v329 = vld [vmem:[%s1 + $0x58] sm:$0xff]
  %v330 = vld [vmem:[%s1 + $0x60] sm:$0xff]
  %v331 = vld [vmem:[%s1 + $0x68] sm:$0xff]
  %v332 = vld [vmem:[%s1 + $0x70] sm:$0xff]
  %v333 = vld [vmem:[%s1 + $0x78] sm:$0xff]
  %v334 = vld [vmem:[%s1 + $0x80] sm:$0xff]
  %v335 = vld [vmem:[%s1 + $0x88] sm:$0xff]
  %v336 = vld [vmem:[%s1 + $0x90] sm:$0xff]
  %v337 = vld [vmem:[%s1 + $0x98] sm:$0xff]
  %v338 = vld [vmem:[%s1 + $0xa0] sm:$0xff]
  %v339 = vld [vmem:[%s1 + $0xa8] sm:$0xff]
  %v340 = vld [vmem:[%s1 + $0xb0] sm:$0xff]
  %v341 = vld [vmem:[%s1 + $0xb8] sm:$0xff]
  %v342 = vld [vmem:[%s1 + $0xc0] sm:$0xff]
  %v343 = vld [vmem:[%s1 + $0xc8] sm:$0xff]
  %v344 = vld [vmem:[%s1 + $0xd0] sm:$0xff]
  %v345 = vld [vmem:[%s1 + $0xd8] sm:$0xff]
  %v346 = vld [vmem:[%s1 + $0xe0] sm:$0xff]
  %v347 = vld [vmem:[%s1 + $0xe8] sm:$0xff]
  %v348 = vld [vmem:[%s1 + $0xf0] sm:$0xff]
  %v349 = vld [vmem:[%s1 + $0xf8] sm:$0xff]
  %v350 = vld [vmem:[%s1 + $0x100] sm:$0xff]
  %v351 = vld [vmem:[%s1 + $0x108] sm:$0xff]
  %v352 = vld [vmem:[%s1 + $0x110] sm:$0xff]
  %v353 = vld [vmem:[%s1 + $0x118] sm:$0xff]
  %v354 = vld [vmem:[%s1 + $0x120] sm:$0xff]
  %v355 = vld [vmem:[%s1 + $0x128] sm:$0xff]
  %v356 = vld [vmem:[%s1 + $0x130] sm:$0xff]
  %v357 = vld [vmem:[%s1 + $0x138] sm:$0xff]
  %v358 = vld [vmem:[%s1 + $0x140] sm:$0xff]
  %v359 = vld [vmem:[%s1 + $0x148] sm:$0xff]
  %v360 = vld [vmem:[%s1 + $0x150] sm:$0xff]
  %v361 = vld [vmem:[%s1 + $0x158] sm:$0xff]
  %v362 = vld [vmem:[%s1 + $0x160] sm:$0xff]
  %v363 = vld [vmem:[%s1 + $0x168] sm:$0xff]
  %v364 = vld [vmem:[%s1 + $0x170] sm:$0xff]
  %v365 = vld [vmem:[%s1 + $0x178] sm:$0xff]
  %v366 = vpack.c.b16 %v168, %v167
  %v367 = vpack.c.b16 %v311, %v310
  %v368 = vpack.c.b16 %v170, %v169
  %v369 = vpack.c.b16 %v313, %v312
  %v370 = vpack.c.b16 %v172, %v171
  %v371 = vpack.c.b16 %v315, %v314
  %v372 = vpack.c.b16 %v174, %v173
  %v373 = vpack.c.b16 %v317, %v316
  %v426 = vunpack.c.l.b16 %v318
  %v427 = vunpack.c.h.b16 %v318
  %v428 = vunpack.c.l.b16 %v319
  %v429 = vunpack.c.h.b16 %v319
  %v430 = vunpack.c.l.b16 %v320
  %v431 = vunpack.c.h.b16 %v320
  %v432 = vunpack.c.l.b16 %v321
  %v433 = vunpack.c.h.b16 %v321
  %v434 = vunpack.c.l.b16 %v322
  %v435 = vunpack.c.h.b16 %v322
  %v436 = vunpack.c.l.b16 %v323
  %v437 = vunpack.c.h.b16 %v323
  %v438 = vunpack.c.l.b16 %v324
  %v439 = vunpack.c.h.b16 %v324
  %v440 = vunpack.c.l.b16 %v325
  %v441 = vunpack.c.h.b16 %v325
  %v442 = vunpack.c.l.b16 %v326
  %v443 = vunpack.c.h.b16 %v326
  %v444 = vunpack.c.l.b16 %v327
  %v445 = vunpack.c.h.b16 %v327
  %v446 = vunpack.c.l.b16 %v328
  %v447 = vunpack.c.h.b16 %v328
  %v448 = vunpack.c.l.b16 %v329
  %v449 = vunpack.c.h.b16 %v329
  %v450 = vunpack.c.l.b16 %v330
  %v451 = vunpack.c.h.b16 %v330
  %v452 = vunpack.c.l.b16 %v331
  %v453 = vunpack.c.h.b16 %v331
  %v454 = vunpack.c.l.b16 %v332
  %v455 = vunpack.c.h.b16 %v332
  %v456 = vunpack.c.l.b16 %v333
  %v457 = vunpack.c.h.b16 %v333
  %v458 = vunpack.c.l.b16 %v334
  %v459 = vunpack.c.h.b16 %v334
  %v460 = vunpack.c.l.b16 %v335
  %v461 = vunpack.c.h.b16 %v335
  %v462 = vunpack.c.l.b16 %v336
  %v463 = vunpack.c.h.b16 %v336
  %v464 = vunpack.c.l.b16 %v337
  %v465 = vunpack.c.h.b16 %v337
  %v466 = vunpack.c.l.b16 %v338
  %v467 = vunpack.c.h.b16 %v338
  %v468 = vunpack.c.l.b16 %v339
  %v469 = vunpack.c.h.b16 %v339
  %v470 = vunpack.c.l.b16 %v340
  %v471 = vunpack.c.h.b16 %v340
  %v472 = vunpack.c.l.b16 %v341
  %v473 = vunpack.c.h.b16 %v341
  %v474 = vunpack.c.l.b16 %v342
  %v475 = vunpack.c.h.b16 %v342
  %v476 = vunpack.c.l.b16 %v343
  %v477 = vunpack.c.h.b16 %v343
  %v478 = vunpack.c.l.b16 %v344
  %v479 = vunpack.c.h.b16 %v344
  %v480 = vunpack.c.l.b16 %v345
  %v481 = vunpack.c.h.b16 %v345
  %v482 = vunpack.c.l.b16 %v346
  %v483 = vunpack.c.h.b16 %v346
  %v484 = vunpack.c.l.b16 %v347
  %v485 = vunpack.c.h.b16 %v347
  %v486 = vunpack.c.l.b16 %v348
  %v487 = vunpack.c.h.b16 %v348
  %v488 = vunpack.c.l.b16 %v349
  %v489 = vunpack.c.h.b16 %v349
  %v490 = vunpack.c.l.b16 %v350
  %v491 = vunpack.c.h.b16 %v350
  %v492 = vunpack.c.l.b16 %v351
  %v493 = vunpack.c.h.b16 %v351
  %v494 = vunpack.c.l.b16 %v352
  %v495 = vunpack.c.h.b16 %v352
  %v496 = vunpack.c.l.b16 %v353
  %v497 = vunpack.c.h.b16 %v353
  %v498 = vunpack.c.l.b16 %v354
  %v499 = vunpack.c.h.b16 %v354
  %v500 = vunpack.c.l.b16 %v355
  %v501 = vunpack.c.h.b16 %v355
  %v502 = vunpack.c.l.b16 %v356
  %v503 = vunpack.c.h.b16 %v356
  %v504 = vunpack.c.l.b16 %v357
  %v505 = vunpack.c.h.b16 %v357
  %v506 = vunpack.c.l.b16 %v358
  %v507 = vunpack.c.h.b16 %v358
  %v508 = vunpack.c.l.b16 %v359
  %v509 = vunpack.c.h.b16 %v359
  %v510 = vunpack.c.l.b16 %v360
  %v511 = vunpack.c.h.b16 %v360
  %v512 = vunpack.c.l.b16 %v361
  %v513 = vunpack.c.h.b16 %v361
  %v514 = vunpack.c.l.b16 %v362
  %v515 = vunpack.c.h.b16 %v362
  %v516 = vunpack.c.l.b16 %v363
  %v517 = vunpack.c.h.b16 %v363
  %v518 = vunpack.c.l.b16 %v364
  %v519 = vunpack.c.h.b16 %v364
  %v520 = vunpack.c.l.b16 %v365
  %v521 = vunpack.c.h.b16 %v365
  %v522 = vpack.c.b16 %v430, %v426
  %v523 = vpack.c.b16 %v431, %v427
  %v524 = vpack.c.b16 %v432, %v428
  %v525 = vpack.c.b16 %v433, %v429
  %v526 = vpack.c.b16 %v438, %v434
  %v527 = vpack.c.b16 %v439, %v435
  %v528 = vpack.c.b16 %v440, %v436
  %v529 = vpack.c.b16 %v441, %v437
  %v530 = vpack.c.b16 %v446, %v442
  %v531 = vpack.c.b16 %v447, %v443
  %v532 = vpack.c.b16 %v448, %v444
  %v533 = vpack.c.b16 %v449, %v445
  %v534 = vpack.c.b16 %v454, %v450
  %v535 = vpack.c.b16 %v455, %v451
  %v536 = vpack.c.b16 %v456, %v452
  %v537 = vpack.c.b16 %v457, %v453
  %v538 = vpack.c.b16 %v462, %v458
  %v539 = vpack.c.b16 %v463, %v459
  %v540 = vpack.c.b16 %v464, %v460
  %v541 = vpack.c.b16 %v465, %v461
  %v542 = vpack.c.b16 %v470, %v466
  %v543 = vpack.c.b16 %v471, %v467
  %v544 = vpack.c.b16 %v472, %v468
  %v545 = vpack.c.b16 %v473, %v469
  %v546 = vpack.c.b16 %v478, %v474
  %v547 = vpack.c.b16 %v479, %v475
  %v548 = vpack.c.b16 %v480, %v476
  %v549 = vpack.c.b16 %v481, %v477
  %v550 = vpack.c.b16 %v486, %v482
  %v551 = vpack.c.b16 %v487, %v483
  %v552 = vpack.c.b16 %v488, %v484
  %v553 = vpack.c.b16 %v489, %v485
  %v554 = vpack.c.b16 %v494, %v490
  %v555 = vpack.c.b16 %v495, %v491
  %v556 = vpack.c.b16 %v496, %v492
  %v557 = vpack.c.b16 %v497, %v493
  %v558 = vpack.c.b16 %v502, %v498
  %v559 = vpack.c.b16 %v503, %v499
  %v560 = vpack.c.b16 %v504, %v500
  %v561 = vpack.c.b16 %v505, %v501
  %v562 = vpack.c.b16 %v510, %v506
  %v563 = vpack.c.b16 %v511, %v507
  %v564 = vpack.c.b16 %v512, %v508
  %v565 = vpack.c.b16 %v513, %v509
  %v566 = vpack.c.b16 %v518, %v514
  %v567 = vpack.c.b16 %v519, %v515
  %v568 = vpack.c.b16 %v520, %v516
  %v569 = vpack.c.b16 %v521, %v517
  %v619 = vsel %vm215, %v367, 0
  %v622 = vsel %vm215, %v369, 0
  %v625 = vsel %vm215, %v371, 0
  %v628 = vsel %vm215, %v373, 0
  %630 = vmatprep.subr.bf16.mxu0 %v523
  %631 = vmatpush1.bf16.msra.mxu0 %v522
  %632 = vmatprep.subr.bf16.mxu0 %v527
  %633 = vmatpush1.bf16.msra.mxu0 %v526
  %634 = vmatprep.subr.bf16.mxu0 %v531
  %635 = vmatpush1.bf16.msra.mxu0 %v530
  %636 = vmatprep.subr.bf16.mxu0 %v535
  %637 = vmatpush1.bf16.msra.mxu0 %v534
  %638 = vmatprep.subr.bf16.mxu0 %v539
  %639 = vmatpush1.bf16.msra.mxu0 %v538
  %640 = vmatprep.subr.bf16.mxu0 %v543
  %641 = vmatpush1.bf16.msra.mxu0 %v542
  %642 = vmatprep.subr.bf16.mxu0 %v547
  %643 = vmatpush1.bf16.msra.mxu0 %v546
  %644 = vmatprep.subr.bf16.mxu0 %v551
  %645 = vmatpush1.bf16.msra.mxu0 %v550
  %646 = vmatprep.subr.bf16.mxu0 %v555
  %647 = vmatpush1.bf16.msra.mxu0 %v554
  %648 = vmatprep.subr.bf16.mxu0 %v559
  %649 = vmatpush1.bf16.msra.mxu0 %v558
  %650 = vmatprep.subr.bf16.mxu0 %v563
  %651 = vmatpush1.bf16.msra.mxu0 %v562
  %652 = vmatprep.subr.bf16.mxu0 %v567
  %653 = vmatpush1.bf16.msra.mxu0 %v566
  %654 = vmatprep.subr.bf16.mxu0 0
  %655 = vmatpush1.bf16.msra.mxu0 0
  %656 = vmatprep.subr.bf16.mxu0 0
  %657 = vmatpush1.bf16.msra.mxu0 0
  %658 = vmatprep.subr.bf16.mxu0 0
  %659 = vmatpush1.bf16.msra.mxu0 0
  %660 = vmatprep.subr.bf16.mxu0 0
  %661 = vmatpush1.bf16.msra.mxu0 0
  %662 = vmatprep.mubr.bf16.mxu0 %v619
  %663 = vmatmul.mubr.bf16.gmra.mrb[0].mxu0 %v366
  %v664 = vpop.f32.mrb[0].mxu0
  %v665 = vadd.f32 0.0, %v664
  %v666 = vpop.f32.mrb[0].mxu0
  %v667 = vadd.f32 0.0, %v666
  %v668 = vpop.f32.mrb[0].mxu0
  %v669 = vadd.f32 0.0, %v668
  %v670 = vpop.f32.mrb[0].mxu0
  %v671 = vadd.f32 0.0, %v670
  %672 = vmatprep.mubr.bf16.mxu0 %v622
  %673 = vmatmul.mubr.bf16.gmra.mrb[0].mxu0 %v368
  %v674 = vpop.f32.mrb[0].mxu0
  %v675 = vadd.f32 0.0, %v674
  %v676 = vpop.f32.mrb[0].mxu0
  %v677 = vadd.f32 0.0, %v676
  %v678 = vpop.f32.mrb[0].mxu0
  %v679 = vadd.f32 0.0, %v678
  %v680 = vpop.f32.mrb[0].mxu0
  %v681 = vadd.f32 0.0, %v680
  %682 = vmatprep.mubr.bf16.mxu0 %v625
  %683 = vmatmul.mubr.bf16.gmra.mrb[0].mxu0 %v370
  %v684 = vpop.f32.mrb[0].mxu0
  %v685 = vadd.f32 0.0, %v684
  %v686 = vpop.f32.mrb[0].mxu0
  %v687 = vadd.f32 0.0, %v686
  %v688 = vpop.f32.mrb[0].mxu0
  %v689 = vadd.f32 0.0, %v688
  %v690 = vpop.f32.mrb[0].mxu0
  %v691 = vadd.f32 0.0, %v690
  %692 = vmatprep.mubr.bf16.mxu0 %v628
  %693 = vmatmul.mubr.bf16.gmra.mrb[0].mxu0 %v372
  %v694 = vpop.f32.mrb[0].mxu0
  %v695 = vadd.f32 0.0, %v694
  %v696 = vpop.f32.mrb[0].mxu0
  %v697 = vadd.f32 0.0, %v696
  %v698 = vpop.f32.mrb[0].mxu0
  %v699 = vadd.f32 0.0, %v698
  %v700 = vpop.f32.mrb[0].mxu0
  %v701 = vadd.f32 0.0, %v700
  %702 = vdwg.mxu0
  %703 = vmatprep.subr.bf16.mxu0 %v525
  %704 = vmatpush1.bf16.msra.mxu0 %v524
  %705 = vmatprep.subr.bf16.mxu0 %v529
  %706 = vmatpush1.bf16.msra.mxu0 %v528
  %707 = vmatprep.subr.bf16.mxu0 %v533
  %708 = vmatpush1.bf16.msra.mxu0 %v532
  %709 = vmatprep.subr.bf16.mxu0 %v537
  %710 = vmatpush1.bf16.msra.mxu0 %v536
  %711 = vmatprep.subr.bf16.mxu0 %v541
  %712 = vmatpush1.bf16.msra.mxu0 %v540
  %713 = vmatprep.subr.bf16.mxu0 %v545
  %714 = vmatpush1.bf16.msra.mxu0 %v544
  %715 = vmatprep.subr.bf16.mxu0 %v549
  %716 = vmatpush1.bf16.msra.mxu0 %v548
  %717 = vmatprep.subr.bf16.mxu0 %v553
  %718 = vmatpush1.bf16.msra.mxu0 %v552
  %719 = vmatprep.subr.bf16.mxu0 %v557
  %720 = vmatpush1.bf16.msra.mxu0 %v556
  %721 = vmatprep.subr.bf16.mxu0 %v561
  %722 = vmatpush1.bf16.msra.mxu0 %v560
  %723 = vmatprep.subr.bf16.mxu0 %v565
  %724 = vmatpush1.bf16.msra.mxu0 %v564
  %725 = vmatprep.subr.bf16.mxu0 %v569
  %726 = vmatpush1.bf16.msra.mxu0 %v568
  %727 = vmatprep.subr.bf16.mxu0 0
  %728 = vmatpush1.bf16.msra.mxu0 0
  %729 = vmatprep.subr.bf16.mxu0 0
  %730 = vmatpush1.bf16.msra.mxu0 0
  %731 = vmatprep.subr.bf16.mxu0 0
  %732 = vmatpush1.bf16.msra.mxu0 0
  %733 = vmatprep.subr.bf16.mxu0 0
  %734 = vmatpush1.bf16.msra.mxu0 0
  %735 = vmatprep.mubr.bf16.mxu0 %v619
  %736 = vmatmul.mubr.bf16.gmra.mrb[0].mxu0 %v366
  %v737 = vpop.f32.mrb[0].mxu0
  %v738 = vadd.f32 0.0, %v737
  %v739 = vpop.f32.mrb[0].mxu0
  %v740 = vadd.f32 0.0, %v739
  %v741 = vpop.f32.mrb[0].mxu0
  %v742 = vadd.f32 0.0, %v741
  %v743 = vpop.f32.mrb[0].mxu0
  %v744 = vadd.f32 0.0, %v743
  %745 = vmatprep.mubr.bf16.mxu0 %v622
  %746 = vmatmul.mubr.bf16.gmra.mrb[0].mxu0 %v368
  %v747 = vpop.f32.mrb[0].mxu0
  %v748 = vadd.f32 0.0, %v747
  %v749 = vpop.f32.mrb[0].mxu0
  %v750 = vadd.f32 0.0, %v749
  %v751 = vpop.f32.mrb[0].mxu0
  %v752 = vadd.f32 0.0, %v751
  %v753 = vpop.f32.mrb[0].mxu0
  %v754 = vadd.f32 0.0, %v753
  %755 = vmatprep.mubr.bf16.mxu0 %v625
  %756 = vmatmul.mubr.bf16.gmra.mrb[0].mxu0 %v370
  %v757 = vpop.f32.mrb[0].mxu0
  %v758 = vadd.f32 0.0, %v757
  %v759 = vpop.f32.mrb[0].mxu0
  %v760 = vadd.f32 0.0, %v759
  %v761 = vpop.f32.mrb[0].mxu0
  %v762 = vadd.f32 0.0, %v761
  %v763 = vpop.f32.mrb[0].mxu0
  %v764 = vadd.f32 0.0, %v763
  %765 = vmatprep.mubr.bf16.mxu0 %v628
  %766 = vmatmul.mubr.bf16.gmra.mrb[0].mxu0 %v372
  %v767 = vpop.f32.mrb[0].mxu0
  %v768 = vadd.f32 0.0, %v767
  %v769 = vpop.f32.mrb[0].mxu0
  %v770 = vadd.f32 0.0, %v769
  %v771 = vpop.f32.mrb[0].mxu0
  %v772 = vadd.f32 0.0, %v771
  %v773 = vpop.f32.mrb[0].mxu0
  %v774 = vadd.f32 0.0, %v773
  %775 = vdwg.mxu0
  %792 = vrot.lane.b32.xlu0 %v665, 16
  %v793 = vpop.permute.xlu0 %792
  %794 = vrot.lane.b32.xlu0 %v667, 16
  %v795 = vpop.permute.xlu0 %794
  %796 = vrot.lane.b32.xlu0 %v669, 16
  %v797 = vpop.permute.xlu0 %796
  %798 = vrot.lane.b32.xlu0 %v671, 16
  %v799 = vpop.permute.xlu0 %798
  %800 = vrot.lane.b32.xlu0 %v675, 16
  %v801 = vpop.permute.xlu0 %800
  %802 = vrot.lane.b32.xlu0 %v677, 16
  %v803 = vpop.permute.xlu0 %802
  %804 = vrot.lane.b32.xlu0 %v679, 16
  %v805 = vpop.permute.xlu0 %804
  %806 = vrot.lane.b32.xlu0 %v681, 16
  %v807 = vpop.permute.xlu0 %806
  %808 = vrot.lane.b32.xlu0 %v685, 16
  %v809 = vpop.permute.xlu0 %808
  %810 = vrot.lane.b32.xlu0 %v687, 16
  %v811 = vpop.permute.xlu0 %810
  %812 = vrot.lane.b32.xlu0 %v689, 16
  %v813 = vpop.permute.xlu0 %812
  %814 = vrot.lane.b32.xlu0 %v691, 16
  %v815 = vpop.permute.xlu0 %814
  %816 = vrot.lane.b32.xlu0 %v695, 16
  %v817 = vpop.permute.xlu0 %816
  %818 = vrot.lane.b32.xlu0 %v697, 16
  %v819 = vpop.permute.xlu0 %818
  %820 = vrot.lane.b32.xlu0 %v699, 16
  %v821 = vpop.permute.xlu0 %820
  %822 = vrot.lane.b32.xlu0 %v701, 16
  %v823 = vpop.permute.xlu0 %822
  %vm824 = vcmask 130048
  %v825 = vsel %vm824, %v793, %v795
  %v826 = vsel %vm824, %v797, %v799
  %v827 = vsel %vm824, %v801, %v803
  %v828 = vsel %vm824, %v805, %v807
  %v829 = vsel %vm824, %v809, %v811
  %v830 = vsel %vm824, %v813, %v815
  %v831 = vsel %vm824, %v817, %v819
  %v832 = vsel %vm824, %v821, %v823
  %v841 = vmax.f32 %v665, %v825
  %v842 = vmax.f32 %v669, %v826
  %v843 = vmax.f32 %v675, %v827
  %v844 = vmax.f32 %v679, %v828
  %v845 = vmax.f32 %v685, %v829
  %v846 = vmax.f32 %v689, %v830
  %v847 = vmax.f32 %v695, %v831
  %v848 = vmax.f32 %v699, %v832
  %865 = vrot.lane.b32.xlu0 %v738, 16
  %v866 = vpop.permute.xlu0 %865
  %867 = vrot.lane.b32.xlu0 %v740, 16
  %v868 = vpop.permute.xlu0 %867
  %869 = vrot.lane.b32.xlu0 %v742, 16
  %v870 = vpop.permute.xlu0 %869
  %871 = vrot.lane.b32.xlu0 %v744, 16
  %v872 = vpop.permute.xlu0 %871
  %873 = vrot.lane.b32.xlu0 %v748, 16
  %v874 = vpop.permute.xlu0 %873
  %875 = vrot.lane.b32.xlu0 %v750, 16
  %v876 = vpop.permute.xlu0 %875
  %877 = vrot.lane.b32.xlu0 %v752, 16
  %v878 = vpop.permute.xlu0 %877
  %879 = vrot.lane.b32.xlu0 %v754, 16
  %v880 = vpop.permute.xlu0 %879
  %881 = vrot.lane.b32.xlu0 %v758, 16
  %v882 = vpop.permute.xlu0 %881
  %883 = vrot.lane.b32.xlu0 %v760, 16
  %v884 = vpop.permute.xlu0 %883
  %885 = vrot.lane.b32.xlu0 %v762, 16
  %v886 = vpop.permute.xlu0 %885
  %887 = vrot.lane.b32.xlu0 %v764, 16
  %v888 = vpop.permute.xlu0 %887
  %889 = vrot.lane.b32.xlu0 %v768, 16
  %v890 = vpop.permute.xlu0 %889
  %891 = vrot.lane.b32.xlu0 %v770, 16
  %v892 = vpop.permute.xlu0 %891
  %893 = vrot.lane.b32.xlu0 %v772, 16
  %v894 = vpop.permute.xlu0 %893
  %895 = vrot.lane.b32.xlu0 %v774, 16
  %v896 = vpop.permute.xlu0 %895
  %v897 = vsel %vm824, %v866, %v868
  %v898 = vsel %vm824, %v870, %v872
  %v899 = vsel %vm824, %v874, %v876
  %v900 = vsel %vm824, %v878, %v880
  %v901 = vsel %vm824, %v882, %v884
  %v902 = vsel %vm824, %v886, %v888
  %v903 = vsel %vm824, %v890, %v892
  %v904 = vsel %vm824, %v894, %v896
  %v921 = vmax.f32 %v667, %v866
  %v922 = vmax.f32 %v738, %v897
  %v923 = vmax.f32 %v671, %v870
  %v924 = vmax.f32 %v742, %v898
  %v925 = vmax.f32 %v677, %v874
  %v926 = vmax.f32 %v748, %v899
  %v927 = vmax.f32 %v681, %v878
  %v928 = vmax.f32 %v752, %v900
  %v929 = vmax.f32 %v687, %v882
  %v930 = vmax.f32 %v758, %v901
  %v931 = vmax.f32 %v691, %v886
  %v932 = vmax.f32 %v762, %v902
  %v933 = vmax.f32 %v697, %v890
  %v934 = vmax.f32 %v768, %v903
  %v935 = vmax.f32 %v701, %v894
  %v936 = vmax.f32 %v772, %v904
  %953 = vrot.lane.b32.xlu0 %v921, 32
  %v954 = vpop.permute.xlu0 %953
  %955 = vrot.lane.b32.xlu0 %v922, 32
  %v956 = vpop.permute.xlu0 %955
  %957 = vrot.lane.b32.xlu0 %v923, 32
  %v958 = vpop.permute.xlu0 %957
  %959 = vrot.lane.b32.xlu0 %v924, 32
  %v960 = vpop.permute.xlu0 %959
  %961 = vrot.lane.b32.xlu0 %v925, 32
  %v962 = vpop.permute.xlu0 %961
  %963 = vrot.lane.b32.xlu0 %v926, 32
  %v964 = vpop.permute.xlu0 %963
  %965 = vrot.lane.b32.xlu0 %v927, 32
  %v966 = vpop.permute.xlu0 %965
  %967 = vrot.lane.b32.xlu0 %v928, 32
  %v968 = vpop.permute.xlu0 %967
  %969 = vrot.lane.b32.xlu0 %v929, 32
  %v970 = vpop.permute.xlu0 %969
  %971 = vrot.lane.b32.xlu0 %v930, 32
  %v972 = vpop.permute.xlu0 %971
  %973 = vrot.lane.b32.xlu0 %v931, 32
  %v974 = vpop.permute.xlu0 %973
  %975 = vrot.lane.b32.xlu0 %v932, 32
  %v976 = vpop.permute.xlu0 %975
  %977 = vrot.lane.b32.xlu0 %v933, 32
  %v978 = vpop.permute.xlu0 %977
  %979 = vrot.lane.b32.xlu0 %v934, 32
  %v980 = vpop.permute.xlu0 %979
  %981 = vrot.lane.b32.xlu0 %v935, 32
  %v982 = vpop.permute.xlu0 %981
  %983 = vrot.lane.b32.xlu0 %v936, 32
  %v984 = vpop.permute.xlu0 %983
  %vm985 = vcmask 261120
  %v986 = vsel %vm985, %v954, %v956
  %v987 = vsel %vm985, %v958, %v960
  %v988 = vsel %vm985, %v962, %v964
  %v989 = vsel %vm985, %v966, %v968
  %v990 = vsel %vm985, %v970, %v972
  %v991 = vsel %vm985, %v974, %v976
  %v992 = vsel %vm985, %v978, %v980
  %v993 = vsel %vm985, %v982, %v984
  %v1002 = vmax.f32 %v841, %v986
  %v1003 = vmax.f32 %v842, %v987
  %v1004 = vmax.f32 %v843, %v988
  %v1005 = vmax.f32 %v844, %v989
  %v1006 = vmax.f32 %v845, %v990
  %v1007 = vmax.f32 %v846, %v991
  %v1008 = vmax.f32 %v847, %v992
  %v1009 = vmax.f32 %v848, %v993
  %v1010 = vld [vmem:[%s2] sm:$0x1]
  %v1012 = vlaneseq
  %v1013 = vshrl.u32 %v1012, 7
  %v1014 = vsub.s32 0, %v1013
  %v1015 = vrot.slane %v1010, %v1014
  %v1017 = vadd.f32 %v1002, %v1015
  %v1018 = vadd.f32 %v1003, %v1015
  %v1019 = vadd.f32 %v1004, %v1015
  %v1020 = vadd.f32 %v1005, %v1015
  %v1021 = vadd.f32 %v1006, %v1015
  %v1022 = vadd.f32 %v1007, %v1015
  %v1023 = vadd.f32 %v1008, %v1015
  %v1024 = vadd.f32 %v1009, %v1015
  %v1025 = vmax.f32 %v1017, 0.0
  %v1026 = vmax.f32 %v1018, 0.0
  %v1027 = vmax.f32 %v1019, 0.0
  %v1028 = vmax.f32 %v1020, 0.0
  %v1029 = vmax.f32 %v1021, 0.0
  %v1030 = vmax.f32 %v1022, 0.0
  %v1031 = vmax.f32 %v1023, 0.0
  %v1032 = vmax.f32 %v1024, 0.0
  %v1033 = vpack.c.bf16 %v1025, %v1025
  %v1034 = vpack.c.bf16 %v1026, %v1026
  %v1035 = vpack.c.bf16 %v1027, %v1027
  %v1036 = vpack.c.bf16 %v1028, %v1028
  %v1037 = vpack.c.bf16 %v1029, %v1029
  %v1038 = vpack.c.bf16 %v1030, %v1030
  %v1039 = vpack.c.bf16 %v1031, %v1031
  %v1040 = vpack.c.bf16 %v1032, %v1032
  %v1042 = vshrl.u32 %v1033, 16
  %v1044 = vrot.slane %v1042, 7
  %v1045 = vshll.u32 %v1033, 16
  %v1047 = vor.u32 %v1044, %v1045
  %v1049 = vshrl.u32 %v1034, 16
  %v1051 = vrot.slane %v1049, 7
  %v1052 = vshll.u32 %v1034, 16
  %v1054 = vor.u32 %v1051, %v1052
  %v1056 = vshrl.u32 %v1035, 16
  %v1058 = vrot.slane %v1056, 7
  %v1059 = vshll.u32 %v1035, 16
  %v1061 = vor.u32 %v1058, %v1059
  %v1063 = vshrl.u32 %v1036, 16
  %v1065 = vrot.slane %v1063, 7
  %v1066 = vshll.u32 %v1036, 16
  %v1068 = vor.u32 %v1065, %v1066
  %v1070 = vshrl.u32 %v1037, 16
  %v1072 = vrot.slane %v1070, 7
  %v1073 = vshll.u32 %v1037, 16
  %v1075 = vor.u32 %v1072, %v1073
  %v1077 = vshrl.u32 %v1038, 16
  %v1079 = vrot.slane %v1077, 7
  %v1080 = vshll.u32 %v1038, 16
  %v1082 = vor.u32 %v1079, %v1080
  %v1084 = vshrl.u32 %v1039, 16
  %v1086 = vrot.slane %v1084, 7
  %v1087 = vshll.u32 %v1039, 16
  %v1089 = vor.u32 %v1086, %v1087
  %v1091 = vshrl.u32 %v1040, 16
  %v1093 = vrot.slane %v1091, 7
  %v1094 = vshll.u32 %v1040, 16
  %v1096 = vor.u32 %v1093, %v1094
  %vm1105 = vcmask 912384
  %vm1106 = vsmask.f32 7938
  %vm1107 = vmand %vm1105, %vm1106
  %v1108 = vld [vmem:[#allocation2] sm:$0xf]
  %v1109 = vsel %vm1107, %v1047, %v1108
  %1110 = vst [vmem:[#allocation2] sm:$0xf] %v1109
  %v1111 = vld [vmem:[#allocation2 + $0x10] sm:$0xf]
  %v1112 = vsel %vm1107, %v1054, %v1111
  %1113 = vst [vmem:[#allocation2 + $0x10] sm:$0xf] %v1112
  %v1114 = vld [vmem:[#allocation2 + $0x20] sm:$0xf]
  %v1115 = vsel %vm1107, %v1061, %v1114
  %1116 = vst [vmem:[#allocation2 + $0x20] sm:$0xf] %v1115
  %v1117 = vld [vmem:[#allocation2 + $0x30] sm:$0xf]
  %v1118 = vsel %vm1107, %v1068, %v1117
  %1119 = vst [vmem:[#allocation2 + $0x30] sm:$0xf] %v1118
  %v1120 = vld [vmem:[#allocation2 + $0x40] sm:$0xf]
  %v1121 = vsel %vm1107, %v1075, %v1120
  %1122 = vst [vmem:[#allocation2 + $0x40] sm:$0xf] %v1121
  %v1123 = vld [vmem:[#allocation2 + $0x50] sm:$0xf]
  %v1124 = vsel %vm1107, %v1082, %v1123
  %1125 = vst [vmem:[#allocation2 + $0x50] sm:$0xf] %v1124
  %v1126 = vld [vmem:[#allocation2 + $0x60] sm:$0xf]
  %v1127 = vsel %vm1107, %v1089, %v1126
  %1128 = vst [vmem:[#allocation2 + $0x60] sm:$0xf] %v1127
  %v1129 = vld [vmem:[#allocation2 + $0x70] sm:$0xf]
  %v1130 = vsel %vm1107, %v1096, %v1129
  %1131 = vst [vmem:[#allocation2 + $0x70] sm:$0xf] %v1130
  %v1140 = vunpack.c.l.b16 %v218
  %v1141 = vunpack.c.l.b16 %v200
  %v1142 = vunpack.c.l.b16 %v221
  %v1143 = vunpack.c.l.b16 %v202
  %v1144 = vunpack.c.l.b16 %v224
  %v1145 = vunpack.c.l.b16 %v204
  %v1146 = vunpack.c.l.b16 %v227
  %v1147 = vunpack.c.l.b16 %v206
  %v1148 = vunpack.c.l.b16 %v230
  %v1149 = vunpack.c.l.b16 %v208
  %v1150 = vunpack.c.l.b16 %v233
  %v1151 = vunpack.c.l.b16 %v210
  %v1152 = vunpack.c.l.b16 %v236
  %v1153 = vunpack.c.l.b16 %v212
  %v1154 = vunpack.c.l.b16 %v239
  %v1155 = vunpack.c.l.b16 %v214
  %v1156 = vld [vmem:[%s1] sm:$0xff]
  %v1157 = vld [vmem:[%s1 + $0x8] sm:$0xff]
  %v1158 = vld [vmem:[%s1 + $0x10] sm:$0xff]
  %v1159 = vld [vmem:[%s1 + $0x18] sm:$0xff]
  %v1160 = vld [vmem:[%s1 + $0x20] sm:$0xff]
  %v1161 = vld [vmem:[%s1 + $0x28] sm:$0xff]
  %v1162 = vld [vmem:[%s1 + $0x30] sm:$0xff]
  %v1163 = vld [vmem:[%s1 + $0x38] sm:$0xff]
  %v1164 = vld [vmem:[%s1 + $0x40] sm:$0xff]
  %v1165 = vld [vmem:[%s1 + $0x48] sm:$0xff]
  %v1166 = vld [vmem:[%s1 + $0x50] sm:$0xff]
  %v1167 = vld [vmem:[%s1 + $0x58] sm:$0xff]
  %v1168 = vld [vmem:[%s1 + $0x60] sm:$0xff]
  %v1169 = vld [vmem:[%s1 + $0x68] sm:$0xff]
  %v1170 = vld [vmem:[%s1 + $0x70] sm:$0xff]
  %v1171 = vld [vmem:[%s1 + $0x78] sm:$0xff]
  %v1172 = vld [vmem:[%s1 + $0x80] sm:$0xff]
  %v1173 = vld [vmem:[%s1 + $0x88] sm:$0xff]
  %v1174 = vld [vmem:[%s1 + $0x90] sm:$0xff]
  %v1175 = vld [vmem:[%s1 + $0x98] sm:$0xff]
  %v1176 = vld [vmem:[%s1 + $0xa0] sm:$0xff]
  %v1177 = vld [vmem:[%s1 + $0xa8] sm:$0xff]
  %v1178 = vld [vmem:[%s1 + $0xb0] sm:$0xff]
  %v1179 = vld [vmem:[%s1 + $0xb8] sm:$0xff]
  %v1180 = vld [vmem:[%s1 + $0xc0] sm:$0xff]
  %v1181 = vld [vmem:[%s1 + $0xc8] sm:$0xff]
  %v1182 = vld [vmem:[%s1 + $0xd0] sm:$0xff]
  %v1183 = vld [vmem:[%s1 + $0xd8] sm:$0xff]
  %v1184 = vld [vmem:[%s1 + $0xe0] sm:$0xff]
  %v1185 = vld [vmem:[%s1 + $0xe8] sm:$0xff]
  %v1186 = vld [vmem:[%s1 + $0xf0] sm:$0xff]
  %v1187 = vld [vmem:[%s1 + $0xf8] sm:$0xff]
  %v1188 = vld [vmem:[%s1 + $0x100] sm:$0xff]
  %v1189 = vld [vmem:[%s1 + $0x108] sm:$0xff]
  %v1190 = vld [vmem:[%s1 + $0x110] sm:$0xff]
  %v1191 = vld [vmem:[%s1 + $0x118] sm:$0xff]
  %v1192 = vld [vmem:[%s1 + $0x120] sm:$0xff]
  %v1193 = vld [vmem:[%s1 + $0x128] sm:$0xff]
  %v1194 = vld [vmem:[%s1 + $0x130] sm:$0xff]
  %v1195 = vld [vmem:[%s1 + $0x138] sm:$0xff]
  %v1196 = vld [vmem:[%s1 + $0x140] sm:$0xff]
  %v1197 = vld [vmem:[%s1 + $0x148] sm:$0xff]
  %v1198 = vld [vmem:[%s1 + $0x150] sm:$0xff]
  %v1199 = vld [vmem:[%s1 + $0x158] sm:$0xff]
  %v1200 = vld [vmem:[%s1 + $0x160] sm:$0xff]
  %v1201 = vld [vmem:[%s1 + $0x168] sm:$0xff]
  %v1202 = vld [vmem:[%s1 + $0x170] sm:$0xff]
  %v1203 = vld [vmem:[%s1 + $0x178] sm:$0xff]
  %v1204 = vpack.c.b16 %v1142, %v1140
  %v1205 = vpack.c.b16 %v1143, %v1141
  %v1206 = vpack.c.b16 %v1146, %v1144
  %v1207 = vpack.c.b16 %v1147, %v1145
  %v1208 = vpack.c.b16 %v1150, %v1148
  %v1209 = vpack.c.b16 %v1151, %v1149
  %v1210 = vpack.c.b16 %v1154, %v1152
  %v1211 = vpack.c.b16 %v1155, %v1153
  %v1264 = vunpack.c.l.b16 %v1156
  %v1265 = vunpack.c.h.b16 %v1156
  %v1266 = vunpack.c.l.b16 %v1157
  %v1267 = vunpack.c.h.b16 %v1157
  %v1268 = vunpack.c.l.b16 %v1158
  %v1269 = vunpack.c.h.b16 %v1158
  %v1270 = vunpack.c.l.b16 %v1159
  %v1271 = vunpack.c.h.b16 %v1159
  %v1272 = vunpack.c.l.b16 %v1160
  %v1273 = vunpack.c.h.b16 %v1160
  %v1274 = vunpack.c.l.b16 %v1161
  %v1275 = vunpack.c.h.b16 %v1161
  %v1276 = vunpack.c.l.b16 %v1162
  %v1277 = vunpack.c.h.b16 %v1162
  %v1278 = vunpack.c.l.b16 %v1163
  %v1279 = vunpack.c.h.b16 %v1163
  %v1280 = vunpack.c.l.b16 %v1164
  %v1281 = vunpack.c.h.b16 %v1164
  %v1282 = vunpack.c.l.b16 %v1165
  %v1283 = vunpack.c.h.b16 %v1165
  %v1284 = vunpack.c.l.b16 %v1166
  %v1285 = vunpack.c.h.b16 %v1166
  %v1286 = vunpack.c.l.b16 %v1167
  %v1287 = vunpack.c.h.b16 %v1167
  %v1288 = vunpack.c.l.b16 %v1168
  %v1289 = vunpack.c.h.b16 %v1168
  %v1290 = vunpack.c.l.b16 %v1169
  %v1291 = vunpack.c.h.b16 %v1169
  %v1292 = vunpack.c.l.b16 %v1170
  %v1293 = vunpack.c.h.b16 %v1170
  %v1294 = vunpack.c.l.b16 %v1171
  %v1295 = vunpack.c.h.b16 %v1171
  %v1296 = vunpack.c.l.b16 %v1172
  %v1297 = vunpack.c.h.b16 %v1172
  %v1298 = vunpack.c.l.b16 %v1173
  %v1299 = vunpack.c.h.b16 %v1173
  %v1300 = vunpack.c.l.b16 %v1174
  %v1301 = vunpack.c.h.b16 %v1174
  %v1302 = vunpack.c.l.b16 %v1175
  %v1303 = vunpack.c.h.b16 %v1175
  %v1304 = vunpack.c.l.b16 %v1176
  %v1305 = vunpack.c.h.b16 %v1176
  %v1306 = vunpack.c.l.b16 %v1177
  %v1307 = vunpack.c.h.b16 %v1177
  %v1308 = vunpack.c.l.b16 %v1178
  %v1309 = vunpack.c.h.b16 %v1178
  %v1310 = vunpack.c.l.b16 %v1179
  %v1311 = vunpack.c.h.b16 %v1179
  %v1312 = vunpack.c.l.b16 %v1180
  %v1313 = vunpack.c.h.b16 %v1180
  %v1314 = vunpack.c.l.b16 %v1181
  %v1315 = vunpack.c.h.b16 %v1181
  %v1316 = vunpack.c.l.b16 %v1182
  %v1317 = vunpack.c.h.b16 %v1182
  %v1318 = vunpack.c.l.b16 %v1183
  %v1319 = vunpack.c.h.b16 %v1183
  %v1320 = vunpack.c.l.b16 %v1184
  %v1321 = vunpack.c.h.b16 %v1184
  %v1322 = vunpack.c.l.b16 %v1185
  %v1323 = vunpack.c.h.b16 %v1185
  %v1324 = vunpack.c.l.b16 %v1186
  %v1325 = vunpack.c.h.b16 %v1186
  %v1326 = vunpack.c.l.b16 %v1187
  %v1327 = vunpack.c.h.b16 %v1187
  %v1328 = vunpack.c.l.b16 %v1188
  %v1329 = vunpack.c.h.b16 %v1188
  %v1330 = vunpack.c.l.b16 %v1189
  %v1331 = vunpack.c.h.b16 %v1189
  %v1332 = vunpack.c.l.b16 %v1190
  %v1333 = vunpack.c.h.b16 %v1190
  %v1334 = vunpack.c.l.b16 %v1191
  %v1335 = vunpack.c.h.b16 %v1191
  %v1336 = vunpack.c.l.b16 %v1192
  %v1337 = vunpack.c.h.b16 %v1192
  %v1338 = vunpack.c.l.b16 %v1193
  %v1339 = vunpack.c.h.b16 %v1193
  %v1340 = vunpack.c.l.b16 %v1194
  %v1341 = vunpack.c.h.b16 %v1194
  %v1342 = vunpack.c.l.b16 %v1195
  %v1343 = vunpack.c.h.b16 %v1195
  %v1344 = vunpack.c.l.b16 %v1196
  %v1345 = vunpack.c.h.b16 %v1196
  %v1346 = vunpack.c.l.b16 %v1197
  %v1347 = vunpack.c.h.b16 %v1197
  %v1348 = vunpack.c.l.b16 %v1198
  %v1349 = vunpack.c.h.b16 %v1198
  %v1350 = vunpack.c.l.b16 %v1199
  %v1351 = vunpack.c.h.b16 %v1199
  %v1352 = vunpack.c.l.b16 %v1200
  %v1353 = vunpack.c.h.b16 %v1200
  %v1354 = vunpack.c.l.b16 %v1201
  %v1355 = vunpack.c.h.b16 %v1201
  %v1356 = vunpack.c.l.b16 %v1202
  %v1357 = vunpack.c.h.b16 %v1202
  %v1358 = vunpack.c.l.b16 %v1203
  %v1359 = vunpack.c.h.b16 %v1203
  %v1360 = vpack.c.b16 %v1268, %v1264
  %v1361 = vpack.c.b16 %v1269, %v1265
  %v1362 = vpack.c.b16 %v1270, %v1266
  %v1363 = vpack.c.b16 %v1271, %v1267
  %v1364 = vpack.c.b16 %v1276, %v1272
  %v1365 = vpack.c.b16 %v1277, %v1273
  %v1366 = vpack.c.b16 %v1278, %v1274
  %v1367 = vpack.c.b16 %v1279, %v1275
  %v1368 = vpack.c.b16 %v1284, %v1280
  %v1369 = vpack.c.b16 %v1285, %v1281
  %v1370 = vpack.c.b16 %v1286, %v1282
  %v1371 = vpack.c.b16 %v1287, %v1283
  %v1372 = vpack.c.b16 %v1292, %v1288
  %v1373 = vpack.c.b16 %v1293, %v1289
  %v1374 = vpack.c.b16 %v1294, %v1290
  %v1375 = vpack.c.b16 %v1295, %v1291
  %v1376 = vpack.c.b16 %v1300, %v1296
  %v1377 = vpack.c.b16 %v1301, %v1297
  %v1378 = vpack.c.b16 %v1302, %v1298
  %v1379 = vpack.c.b16 %v1303, %v1299
  %v1380 = vpack.c.b16 %v1308, %v1304
  %v1381 = vpack.c.b16 %v1309, %v1305
  %v1382 = vpack.c.b16 %v1310, %v1306
  %v1383 = vpack.c.b16 %v1311, %v1307
  %v1384 = vpack.c.b16 %v1316, %v1312
  %v1385 = vpack.c.b16 %v1317, %v1313
  %v1386 = vpack.c.b16 %v1318, %v1314
  %v1387 = vpack.c.b16 %v1319, %v1315
  %v1388 = vpack.c.b16 %v1324, %v1320
  %v1389 = vpack.c.b16 %v1325, %v1321
  %v1390 = vpack.c.b16 %v1326, %v1322
  %v1391 = vpack.c.b16 %v1327, %v1323
  %v1392 = vpack.c.b16 %v1332, %v1328
  %v1393 = vpack.c.b16 %v1333, %v1329
  %v1394 = vpack.c.b16 %v1334, %v1330
  %v1395 = vpack.c.b16 %v1335, %v1331
  %v1396 = vpack.c.b16 %v1340, %v1336
  %v1397 = vpack.c.b16 %v1341, %v1337
  %v1398 = vpack.c.b16 %v1342, %v1338
  %v1399 = vpack.c.b16 %v1343, %v1339
  %v1400 = vpack.c.b16 %v1348, %v1344
  %v1401 = vpack.c.b16 %v1349, %v1345
  %v1402 = vpack.c.b16 %v1350, %v1346
  %v1403 = vpack.c.b16 %v1351, %v1347
  %v1404 = vpack.c.b16 %v1356, %v1352
  %v1405 = vpack.c.b16 %v1357, %v1353
  %v1406 = vpack.c.b16 %v1358, %v1354
  %v1407 = vpack.c.b16 %v1359, %v1355
  %v1457 = vsel %vm215, %v1205, 0
  %v1460 = vsel %vm215, %v1207, 0
  %v1463 = vsel %vm215, %v1209, 0
  %v1466 = vsel %vm215, %v1211, 0
  %1468 = vmatprep.subr.bf16.mxu0 %v1361
  %1469 = vmatpush1.bf16.msra.mxu0 %v1360
  %1470 = vmatprep.subr.bf16.mxu0 %v1365
  %1471 = vmatpush1.bf16.msra.mxu0 %v1364
  %1472 = vmatprep.subr.bf16.mxu0 %v1369
  %1473 = vmatpush1.bf16.msra.mxu0 %v1368
  %1474 = vmatprep.subr.bf16.mxu0 %v1373
  %1475 = vmatpush1.bf16.msra.mxu0 %v1372
  %1476 = vmatprep.subr.bf16.mxu0 %v1377
  %1477 = vmatpush1.bf16.msra.mxu0 %v1376
  %1478 = vmatprep.subr.bf16.mxu0 %v1381
  %1479 = vmatpush1.bf16.msra.mxu0 %v1380
  %1480 = vmatprep.subr.bf16.mxu0 %v1385
  %1481 = vmatpush1.bf16.msra.mxu0 %v1384
  %1482 = vmatprep.subr.bf16.mxu0 %v1389
  %1483 = vmatpush1.bf16.msra.mxu0 %v1388
  %1484 = vmatprep.subr.bf16.mxu0 %v1393
  %1485 = vmatpush1.bf16.msra.mxu0 %v1392
  %1486 = vmatprep.subr.bf16.mxu0 %v1397
  %1487 = vmatpush1.bf16.msra.mxu0 %v1396
  %1488 = vmatprep.subr.bf16.mxu0 %v1401
  %1489 = vmatpush1.bf16.msra.mxu0 %v1400
  %1490 = vmatprep.subr.bf16.mxu0 %v1405
  %1491 = vmatpush1.bf16.msra.mxu0 %v1404
  %1492 = vmatprep.subr.bf16.mxu0 0
  %1493 = vmatpush1.bf16.msra.mxu0 0
  %1494 = vmatprep.subr.bf16.mxu0 0
  %1495 = vmatpush1.bf16.msra.mxu0 0
  %1496 = vmatprep.subr.bf16.mxu0 0
  %1497 = vmatpush1.bf16.msra.mxu0 0
  %1498 = vmatprep.subr.bf16.mxu0 0
  %1499 = vmatpush1.bf16.msra.mxu0 0
  %1500 = vmatprep.mubr.bf16.mxu0 %v1457
  %1501 = vmatmul.mubr.bf16.gmra.mrb[0].mxu0 %v1204
  %v1502 = vpop.f32.mrb[0].mxu0
  %v1503 = vadd.f32 0.0, %v1502
  %v1504 = vpop.f32.mrb[0].mxu0
  %v1505 = vadd.f32 0.0, %v1504
  %v1506 = vpop.f32.mrb[0].mxu0
  %v1507 = vadd.f32 0.0, %v1506
  %v1508 = vpop.f32.mrb[0].mxu0
  %v1509 = vadd.f32 0.0, %v1508
  %1510 = vmatprep.mubr.bf16.mxu0 %v1460
  %1511 = vmatmul.mubr.bf16.gmra.mrb[0].mxu0 %v1206
  %v1512 = vpop.f32.mrb[0].mxu0
  %v1513 = vadd.f32 0.0, %v1512
  %v1514 = vpop.f32.mrb[0].mxu0
  %v1515 = vadd.f32 0.0, %v1514
  %v1516 = vpop.f32.mrb[0].mxu0
  %v1517 = vadd.f32 0.0, %v1516
  %v1518 = vpop.f32.mrb[0].mxu0
  %v1519 = vadd.f32 0.0, %v1518
  %1520 = vmatprep.mubr.bf16.mxu0 %v1463
  %1521 = vmatmul.mubr.bf16.gmra.mrb[0].mxu0 %v1208
  %v1522 = vpop.f32.mrb[0].mxu0
  %v1523 = vadd.f32 0.0, %v1522
  %v1524 = vpop.f32.mrb[0].mxu0
  %v1525 = vadd.f32 0.0, %v1524
  %v1526 = vpop.f32.mrb[0].mxu0
  %v1527 = vadd.f32 0.0, %v1526
  %v1528 = vpop.f32.mrb[0].mxu0
  %v1529 = vadd.f32 0.0, %v1528
  %1530 = vmatprep.mubr.bf16.mxu0 %v1466
  %1531 = vmatmul.mubr.bf16.gmra.mrb[0].mxu0 %v1210
  %v1532 = vpop.f32.mrb[0].mxu0
  %v1533 = vadd.f32 0.0, %v1532
  %v1534 = vpop.f32.mrb[0].mxu0
  %v1535 = vadd.f32 0.0, %v1534
  %v1536 = vpop.f32.mrb[0].mxu0
  %v1537 = vadd.f32 0.0, %v1536
  %v1538 = vpop.f32.mrb[0].mxu0
  %v1539 = vadd.f32 0.0, %v1538
  %1540 = vdwg.mxu0
  %1541 = vmatprep.subr.bf16.mxu0 %v1363
  %1542 = vmatpush1.bf16.msra.mxu0 %v1362
  %1543 = vmatprep.subr.bf16.mxu0 %v1367
  %1544 = vmatpush1.bf16.msra.mxu0 %v1366
  %1545 = vmatprep.subr.bf16.mxu0 %v1371
  %1546 = vmatpush1.bf16.msra.mxu0 %v1370
  %1547 = vmatprep.subr.bf16.mxu0 %v1375
  %1548 = vmatpush1.bf16.msra.mxu0 %v1374
  %1549 = vmatprep.subr.bf16.mxu0 %v1379
  %1550 = vmatpush1.bf16.msra.mxu0 %v1378
  %1551 = vmatprep.subr.bf16.mxu0 %v1383
  %1552 = vmatpush1.bf16.msra.mxu0 %v1382
  %1553 = vmatprep.subr.bf16.mxu0 %v1387
  %1554 = vmatpush1.bf16.msra.mxu0 %v1386
  %1555 = vmatprep.subr.bf16.mxu0 %v1391
  %1556 = vmatpush1.bf16.msra.mxu0 %v1390
  %1557 = vmatprep.subr.bf16.mxu0 %v1395
  %1558 = vmatpush1.bf16.msra.mxu0 %v1394
  %1559 = vmatprep.subr.bf16.mxu0 %v1399
  %1560 = vmatpush1.bf16.msra.mxu0 %v1398
  %1561 = vmatprep.subr.bf16.mxu0 %v1403
  %1562 = vmatpush1.bf16.msra.mxu0 %v1402
  %1563 = vmatprep.subr.bf16.mxu0 %v1407
  %1564 = vmatpush1.bf16.msra.mxu0 %v1406
  %1565 = vmatprep.subr.bf16.mxu0 0
  %1566 = vmatpush1.bf16.msra.mxu0 0
  %1567 = vmatprep.subr.bf16.mxu0 0
  %1568 = vmatpush1.bf16.msra.mxu0 0
  %1569 = vmatprep.subr.bf16.mxu0 0
  %1570 = vmatpush1.bf16.msra.mxu0 0
  %1571 = vmatprep.subr.bf16.mxu0 0
  %1572 = vmatpush1.bf16.msra.mxu0 0
  %1573 = vmatprep.mubr.bf16.mxu0 %v1457
  %1574 = vmatmul.mubr.bf16.gmra.mrb[0].mxu0 %v1204
  %v1575 = vpop.f32.mrb[0].mxu0
  %v1576 = vadd.f32 0.0, %v1575
  %v1577 = vpop.f32.mrb[0].mxu0
  %v1578 = vadd.f32 0.0, %v1577
  %v1579 = vpop.f32.mrb[0].mxu0
  %v1580 = vadd.f32 0.0, %v1579
  %v1581 = vpop.f32.mrb[0].mxu0
  %v1582 = vadd.f32 0.0, %v1581
  %1583 = vmatprep.mubr.bf16.mxu0 %v1460
  %1584 = vmatmul.mubr.bf16.gmra.mrb[0].mxu0 %v1206
  %v1585 = vpop.f32.mrb[0].mxu0
  %v1586 = vadd.f32 0.0, %v1585
  %v1587 = vpop.f32.mrb[0].mxu0
  %v1588 = vadd.f32 0.0, %v1587
  %v1589 = vpop.f32.mrb[0].mxu0
  %v1590 = vadd.f32 0.0, %v1589
  %v1591 = vpop.f32.mrb[0].mxu0
  %v1592 = vadd.f32 0.0, %v1591
  %1593 = vmatprep.mubr.bf16.mxu0 %v1463
  %1594 = vmatmul.mubr.bf16.gmra.mrb[0].mxu0 %v1208
  %v1595 = vpop.f32.mrb[0].mxu0
  %v1596 = vadd.f32 0.0, %v1595
  %v1597 = vpop.f32.mrb[0].mxu0
  %v1598 = vadd.f32 0.0, %v1597
  %v1599 = vpop.f32.mrb[0].mxu0
  %v1600 = vadd.f32 0.0, %v1599
  %v1601 = vpop.f32.mrb[0].mxu0
  %v1602 = vadd.f32 0.0, %v1601
  %1603 = vmatprep.mubr.bf16.mxu0 %v1466
  %1604 = vmatmul.mubr.bf16.gmra.mrb[0].mxu0 %v1210
  %v1605 = vpop.f32.mrb[0].mxu0
  %v1606 = vadd.f32 0.0, %v1605
  %v1607 = vpop.f32.mrb[0].mxu0
  %v1608 = vadd.f32 0.0, %v1607
  %v1609 = vpop.f32.mrb[0].mxu0
  %v1610 = vadd.f32 0.0, %v1609
  %v1611 = vpop.f32.mrb[0].mxu0
  %v1612 = vadd.f32 0.0, %v1611
  %1613 = vdwg.mxu0
  %1630 = vrot.lane.b32.xlu0 %v1503, 16
  %v1631 = vpop.permute.xlu0 %1630
  %1632 = vrot.lane.b32.xlu0 %v1505, 16
  %v1633 = vpop.permute.xlu0 %1632
  %1634 = vrot.lane.b32.xlu0 %v1507, 16
  %v1635 = vpop.permute.xlu0 %1634
  %1636 = vrot.lane.b32.xlu0 %v1509, 16
  %v1637 = vpop.permute.xlu0 %1636
  %1638 = vrot.lane.b32.xlu0 %v1513, 16
  %v1639 = vpop.permute.xlu0 %1638
  %1640 = vrot.lane.b32.xlu0 %v1515, 16
  %v1641 = vpop.permute.xlu0 %1640
  %1642 = vrot.lane.b32.xlu0 %v1517, 16
  %v1643 = vpop.permute.xlu0 %1642
  %1644 = vrot.lane.b32.xlu0 %v1519, 16
  %v1645 = vpop.permute.xlu0 %1644
  %1646 = vrot.lane.b32.xlu0 %v1523, 16
  %v1647 = vpop.permute.xlu0 %1646
  %1648 = vrot.lane.b32.xlu0 %v1525, 16
  %v1649 = vpop.permute.xlu0 %1648
  %1650 = vrot.lane.b32.xlu0 %v1527, 16
  %v1651 = vpop.permute.xlu0 %1650
  %1652 = vrot.lane.b32.xlu0 %v1529, 16
  %v1653 = vpop.permute.xlu0 %1652
  %1654 = vrot.lane.b32.xlu0 %v1533, 16
  %v1655 = vpop.permute.xlu0 %1654
  %1656 = vrot.lane.b32.xlu0 %v1535, 16
  %v1657 = vpop.permute.xlu0 %1656
  %1658 = vrot.lane.b32.xlu0 %v1537, 16
  %v1659 = vpop.permute.xlu0 %1658
  %1660 = vrot.lane.b32.xlu0 %v1539, 16
  %v1661 = vpop.permute.xlu0 %1660
  %v1662 = vsel %vm824, %v1631, %v1633
  %v1663 = vsel %vm824, %v1635, %v1637
  %v1664 = vsel %vm824, %v1639, %v1641
  %v1665 = vsel %vm824, %v1643, %v1645
  %v1666 = vsel %vm824, %v1647, %v1649
  %v1667 = vsel %vm824, %v1651, %v1653
  %v1668 = vsel %vm824, %v1655, %v1657
  %v1669 = vsel %vm824, %v1659, %v1661
  %v1678 = vmax.f32 %v1503, %v1662
  %v1679 = vmax.f32 %v1507, %v1663
  %v1680 = vmax.f32 %v1513, %v1664
  %v1681 = vmax.f32 %v1517, %v1665
  %v1682 = vmax.f32 %v1523, %v1666
  %v1683 = vmax.f32 %v1527, %v1667
  %v1684 = vmax.f32 %v1533, %v1668
  %v1685 = vmax.f32 %v1537, %v1669
  %1702 = vrot.lane.b32.xlu0 %v1576, 16
  %v1703 = vpop.permute.xlu0 %1702
  %1704 = vrot.lane.b32.xlu0 %v1578, 16
  %v1705 = vpop.permute.xlu0 %1704
  %1706 = vrot.lane.b32.xlu0 %v1580, 16
  %v1707 = vpop.permute.xlu0 %1706
  %1708 = vrot.lane.b32.xlu0 %v1582, 16
  %v1709 = vpop.permute.xlu0 %1708
  %1710 = vrot.lane.b32.xlu0 %v1586, 16
  %v1711 = vpop.permute.xlu0 %1710
  %1712 = vrot.lane.b32.xlu0 %v1588, 16
  %v1713 = vpop.permute.xlu0 %1712
  %1714 = vrot.lane.b32.xlu0 %v1590, 16
  %v1715 = vpop.permute.xlu0 %1714
  %1716 = vrot.lane.b32.xlu0 %v1592, 16
  %v1717 = vpop.permute.xlu0 %1716
  %1718 = vrot.lane.b32.xlu0 %v1596, 16
  %v1719 = vpop.permute.xlu0 %1718
  %1720 = vrot.lane.b32.xlu0 %v1598, 16
  %v1721 = vpop.permute.xlu0 %1720
  %1722 = vrot.lane.b32.xlu0 %v1600, 16
  %v1723 = vpop.permute.xlu0 %1722
  %1724 = vrot.lane.b32.xlu0 %v1602, 16
  %v1725 = vpop.permute.xlu0 %1724
  %1726 = vrot.lane.b32.xlu0 %v1606, 16
  %v1727 = vpop.permute.xlu0 %1726
  %1728 = vrot.lane.b32.xlu0 %v1608, 16
  %v1729 = vpop.permute.xlu0 %1728
  %1730 = vrot.lane.b32.xlu0 %v1610, 16
  %v1731 = vpop.permute.xlu0 %1730
  %1732 = vrot.lane.b32.xlu0 %v1612, 16
  %v1733 = vpop.permute.xlu0 %1732
  %v1734 = vsel %vm824, %v1703, %v1705
  %v1735 = vsel %vm824, %v1707, %v1709
  %v1736 = vsel %vm824, %v1711, %v1713
  %v1737 = vsel %vm824, %v1715, %v1717
  %v1738 = vsel %vm824, %v1719, %v1721
  %v1739 = vsel %vm824, %v1723, %v1725
  %v1740 = vsel %vm824, %v1727, %v1729
  %v1741 = vsel %vm824, %v1731, %v1733
  %v1758 = vmax.f32 %v1505, %v1703
  %v1759 = vmax.f32 %v1576, %v1734
  %v1760 = vmax.f32 %v1509, %v1707
  %v1761 = vmax.f32 %v1580, %v1735
  %v1762 = vmax.f32 %v1515, %v1711
  %v1763 = vmax.f32 %v1586, %v1736
  %v1764 = vmax.f32 %v1519, %v1715
  %v1765 = vmax.f32 %v1590, %v1737
  %v1766 = vmax.f32 %v1525, %v1719
  %v1767 = vmax.f32 %v1596, %v1738
  %v1768 = vmax.f32 %v1529, %v1723
  %v1769 = vmax.f32 %v1600, %v1739
  %v1770 = vmax.f32 %v1535, %v1727
  %v1771 = vmax.f32 %v1606, %v1740
  %v1772 = vmax.f32 %v1539, %v1731
  %v1773 = vmax.f32 %v1610, %v1741
  %1790 = vrot.lane.b32.xlu0 %v1758, 32
  %v1791 = vpop.permute.xlu0 %1790
  %1792 = vrot.lane.b32.xlu0 %v1759, 32
  %v1793 = vpop.permute.xlu0 %1792
  %1794 = vrot.lane.b32.xlu0 %v1760, 32
  %v1795 = vpop.permute.xlu0 %1794
  %1796 = vrot.lane.b32.xlu0 %v1761, 32
  %v1797 = vpop.permute.xlu0 %1796
  %1798 = vrot.lane.b32.xlu0 %v1762, 32
  %v1799 = vpop.permute.xlu0 %1798
  %1800 = vrot.lane.b32.xlu0 %v1763, 32
  %v1801 = vpop.permute.xlu0 %1800
  %1802 = vrot.lane.b32.xlu0 %v1764, 32
  %v1803 = vpop.permute.xlu0 %1802
  %1804 = vrot.lane.b32.xlu0 %v1765, 32
  %v1805 = vpop.permute.xlu0 %1804
  %1806 = vrot.lane.b32.xlu0 %v1766, 32
  %v1807 = vpop.permute.xlu0 %1806
  %1808 = vrot.lane.b32.xlu0 %v1767, 32
  %v1809 = vpop.permute.xlu0 %1808
  %1810 = vrot.lane.b32.xlu0 %v1768, 32
  %v1811 = vpop.permute.xlu0 %1810
  %1812 = vrot.lane.b32.xlu0 %v1769, 32
  %v1813 = vpop.permute.xlu0 %1812
  %1814 = vrot.lane.b32.xlu0 %v1770, 32
  %v1815 = vpop.permute.xlu0 %1814
  %1816 = vrot.lane.b32.xlu0 %v1771, 32
  %v1817 = vpop.permute.xlu0 %1816
  %1818 = vrot.lane.b32.xlu0 %v1772, 32
  %v1819 = vpop.permute.xlu0 %1818
  %1820 = vrot.lane.b32.xlu0 %v1773, 32
  %v1821 = vpop.permute.xlu0 %1820
  %v1822 = vsel %vm985, %v1791, %v1793
  %v1823 = vsel %vm985, %v1795, %v1797
  %v1824 = vsel %vm985, %v1799, %v1801
  %v1825 = vsel %vm985, %v1803, %v1805
  %v1826 = vsel %vm985, %v1807, %v1809
  %v1827 = vsel %vm985, %v1811, %v1813
  %v1828 = vsel %vm985, %v1815, %v1817
  %v1829 = vsel %vm985, %v1819, %v1821
  %v1838 = vmax.f32 %v1678, %v1822
  %v1839 = vmax.f32 %v1679, %v1823
  %v1840 = vmax.f32 %v1680, %v1824
  %v1841 = vmax.f32 %v1681, %v1825
  %v1842 = vmax.f32 %v1682, %v1826
  %v1843 = vmax.f32 %v1683, %v1827
  %v1844 = vmax.f32 %v1684, %v1828
  %v1845 = vmax.f32 %v1685, %v1829
  %v1846 = vld [vmem:[%s2] sm:$0x1]
  %v1848 = vlaneseq
  %v1849 = vshrl.u32 %v1848, 7
  %v1850 = vsub.s32 0, %v1849
  %v1851 = vrot.slane %v1846, %v1850
  %v1853 = vadd.f32 %v1838, %v1851
  %v1854 = vadd.f32 %v1839, %v1851
  %v1855 = vadd.f32 %v1840, %v1851
  %v1856 = vadd.f32 %v1841, %v1851
  %v1857 = vadd.f32 %v1842, %v1851
  %v1858 = vadd.f32 %v1843, %v1851
  %v1859 = vadd.f32 %v1844, %v1851
  %v1860 = vadd.f32 %v1845, %v1851
  %v1861 = vmax.f32 %v1853, 0.0
  %v1862 = vmax.f32 %v1854, 0.0
  %v1863 = vmax.f32 %v1855, 0.0
  %v1864 = vmax.f32 %v1856, 0.0
  %v1865 = vmax.f32 %v1857, 0.0
  %v1866 = vmax.f32 %v1858, 0.0
  %v1867 = vmax.f32 %v1859, 0.0
  %v1868 = vmax.f32 %v1860, 0.0
  %v1869 = vpack.c.bf16 %v1861, %v1861
  %v1870 = vpack.c.bf16 %v1862, %v1862
  %v1871 = vpack.c.bf16 %v1863, %v1863
  %v1872 = vpack.c.bf16 %v1864, %v1864
  %v1873 = vpack.c.bf16 %v1865, %v1865
  %v1874 = vpack.c.bf16 %v1866, %v1866
  %v1875 = vpack.c.bf16 %v1867, %v1867
  %v1876 = vpack.c.bf16 %v1868, %v1868
  %v1878 = vshrl.u32 %v1869, 16
  %v1880 = vrot.slane %v1878, 7
  %v1881 = vshll.u32 %v1869, 16
  %v1883 = vor.u32 %v1880, %v1881
  %v1885 = vshrl.u32 %v1870, 16
  %v1887 = vrot.slane %v1885, 7
  %v1888 = vshll.u32 %v1870, 16
  %v1890 = vor.u32 %v1887, %v1888
  %v1892 = vshrl.u32 %v1871, 16
  %v1894 = vrot.slane %v1892, 7
  %v1895 = vshll.u32 %v1871, 16
  %v1897 = vor.u32 %v1894, %v1895
  %v1899 = vshrl.u32 %v1872, 16
  %v1901 = vrot.slane %v1899, 7
  %v1902 = vshll.u32 %v1872, 16
  %v1904 = vor.u32 %v1901, %v1902
  %v1906 = vshrl.u32 %v1873, 16
  %v1908 = vrot.slane %v1906, 7
  %v1909 = vshll.u32 %v1873, 16
  %v1911 = vor.u32 %v1908, %v1909
  %v1913 = vshrl.u32 %v1874, 16
  %v1915 = vrot.slane %v1913, 7
  %v1916 = vshll.u32 %v1874, 16
  %v1918 = vor.u32 %v1915, %v1916
  %v1920 = vshrl.u32 %v1875, 16
  %v1922 = vrot.slane %v1920, 7
  %v1923 = vshll.u32 %v1875, 16
  %v1925 = vor.u32 %v1922, %v1923
  %v1927 = vshrl.u32 %v1876, 16
  %v1929 = vrot.slane %v1927, 7
  %v1930 = vshll.u32 %v1876, 16
  %v1932 = vor.u32 %v1929, %v1930
  %1933 = vrot.lane.b32.xlu0 %v1883, 112
  %v1934 = vpop.permute.xlu0 %1933
  %1935 = vrot.lane.b32.xlu0 %v1890, 112
  %v1936 = vpop.permute.xlu0 %1935
  %1937 = vrot.lane.b32.xlu0 %v1897, 112
  %v1938 = vpop.permute.xlu0 %1937
  %1939 = vrot.lane.b32.xlu0 %v1904, 112
  %v1940 = vpop.permute.xlu0 %1939
  %1941 = vrot.lane.b32.xlu0 %v1911, 112
  %v1942 = vpop.permute.xlu0 %1941
  %1943 = vrot.lane.b32.xlu0 %v1918, 112
  %v1944 = vpop.permute.xlu0 %1943
  %1945 = vrot.lane.b32.xlu0 %v1925, 112
  %v1946 = vpop.permute.xlu0 %1945
  %1947 = vrot.lane.b32.xlu0 %v1932, 112
  %v1948 = vpop.permute.xlu0 %1947
  %vm1957 = vcmask 1044352
  %vm1958 = vmand %vm1957, %vm1106
  %v1959 = vld [vmem:[#allocation2] sm:$0xf]
  %v1960 = vsel %vm1958, %v1934, %v1959
  %1961 = vst [vmem:[#allocation2] sm:$0xf] %v1960
  %vm1962 = vcmask 781312
  %vm1963 = vmand %vm1962, %vm1106
  %v1964 = vld [vmem:[#allocation2 + $0x8] sm:$0xf]
  %v1965 = vsel %vm1963, %v1934, %v1964
  %1966 = vst [vmem:[#allocation2 + $0x8] sm:$0xf] %v1965
  %v1967 = vld [vmem:[#allocation2 + $0x10] sm:$0xf]
  %v1968 = vsel %vm1958, %v1936, %v1967
  %1969 = vst [vmem:[#allocation2 + $0x10] sm:$0xf] %v1968
  %v1970 = vld [vmem:[#allocation2 + $0x18] sm:$0xf]
  %v1971 = vsel %vm1963, %v1936, %v1970
  %1972 = vst [vmem:[#allocation2 + $0x18] sm:$0xf] %v1971
  %v1973 = vld [vmem:[#allocation2 + $0x20] sm:$0xf]
  %v1974 = vsel %vm1958, %v1938, %v1973
  %1975 = vst [vmem:[#allocation2 + $0x20] sm:$0xf] %v1974
  %v1976 = vld [vmem:[#allocation2 + $0x28] sm:$0xf]
  %v1977 = vsel %vm1963, %v1938, %v1976
  %1978 = vst [vmem:[#allocation2 + $0x28] sm:$0xf] %v1977
  %v1979 = vld [vmem:[#allocation2 + $0x30] sm:$0xf]
  %v1980 = vsel %vm1958, %v1940, %v1979
  %1981 = vst [vmem:[#allocation2 + $0x30] sm:$0xf] %v1980
  %v1982 = vld [vmem:[#allocation2 + $0x38] sm:$0xf]
  %v1983 = vsel %vm1963, %v1940, %v1982
  %1984 = vst [vmem:[#allocation2 + $0x38] sm:$0xf] %v1983
  %v1985 = vld [vmem:[#allocation2 + $0x40] sm:$0xf]
  %v1986 = vsel %vm1958, %v1942, %v1985
  %1987 = vst [vmem:[#allocation2 + $0x40] sm:$0xf] %v1986
  %v1988 = vld [vmem:[#allocation2 + $0x48] sm:$0xf]
  %v1989 = vsel %vm1963, %v1942, %v1988
  %1990 = vst [vmem:[#allocation2 + $0x48] sm:$0xf] %v1989
  %v1991 = vld [vmem:[#allocation2 + $0x50] sm:$0xf]
  %v1992 = vsel %vm1958, %v1944, %v1991
  %1993 = vst [vmem:[#allocation2 + $0x50] sm:$0xf] %v1992
  %v1994 = vld [vmem:[#allocation2 + $0x58] sm:$0xf]
  %v1995 = vsel %vm1963, %v1944, %v1994
  %1996 = vst [vmem:[#allocation2 + $0x58] sm:$0xf] %v1995
  %v1997 = vld [vmem:[#allocation2 + $0x60] sm:$0xf]
  %v1998 = vsel %vm1958, %v1946, %v1997
  %1999 = vst [vmem:[#allocation2 + $0x60] sm:$0xf] %v1998
  %v2000 = vld [vmem:[#allocation2 + $0x68] sm:$0xf]
  %v2001 = vsel %vm1963, %v1946, %v2000
  %2002 = vst [vmem:[#allocation2 + $0x68] sm:$0xf] %v2001
  %v2003 = vld [vmem:[#allocation2 + $0x70] sm:$0xf]
  %v2004 = vsel %vm1958, %v1948, %v2003
  %2005 = vst [vmem:[#allocation2 + $0x70] sm:$0xf] %v2004
  %v2006 = vld [vmem:[#allocation2 + $0x78] sm:$0xf]
  %v2007 = vsel %vm1963, %v1948, %v2006
  %2008 = vst [vmem:[#allocation2 + $0x78] sm:$0xf] %v2007
  %v2009 = vld [vmem:[#allocation2] sm:$0xf]
  %v2010 = vld [vmem:[#allocation2 + $0x8] sm:$0xf]
  %v2011 = vld [vmem:[#allocation2 + $0x10] sm:$0xf]
  %v2012 = vld [vmem:[#allocation2 + $0x18] sm:$0xf]
  %v2013 = vld [vmem:[#allocation2 + $0x20] sm:$0xf]
  %v2014 = vld [vmem:[#allocation2 + $0x28] sm:$0xf]
  %v2015 = vld [vmem:[#allocation2 + $0x30] sm:$0xf]
  %v2016 = vld [vmem:[#allocation2 + $0x38] sm:$0xf]
  %v2017 = vld [vmem:[#allocation2 + $0x40] sm:$0xf]
  %v2018 = vld [vmem:[#allocation2 + $0x48] sm:$0xf]
  %v2019 = vld [vmem:[#allocation2 + $0x50] sm:$0xf]
  %v2020 = vld [vmem:[#allocation2 + $0x58] sm:$0xf]
  %v2021 = vld [vmem:[#allocation2 + $0x60] sm:$0xf]
  %v2022 = vld [vmem:[#allocation2 + $0x68] sm:$0xf]
  %v2023 = vld [vmem:[#allocation2 + $0x70] sm:$0xf]
  %v2024 = vld [vmem:[#allocation2 + $0x78] sm:$0xf]
  %v2025 = vld [vmem:[#allocation2] sm:$0x1f]
  %v2026 = vld [vmem:[#allocation2 + $0x8] sm:$0x1f]
  %v2027 = vld [vmem:[#allocation2 + $0x10] sm:$0x1f]
  %v2028 = vld [vmem:[#allocation2 + $0x18] sm:$0x1f]
  %v2029 = vld [vmem:[#allocation2 + $0x20] sm:$0x1f]
  %v2030 = vld [vmem:[#allocation2 + $0x28] sm:$0x1f]
  %v2031 = vld [vmem:[#allocation2 + $0x30] sm:$0x1f]
  %v2032 = vld [vmem:[#allocation2 + $0x38] sm:$0x1f]
  %v2033 = vld [vmem:[#allocation2 + $0x40] sm:$0x1f]
  %v2034 = vld [vmem:[#allocation2 + $0x48] sm:$0x1f]
  %v2035 = vld [vmem:[#allocation2 + $0x50] sm:$0x1f]
  %v2036 = vld [vmem:[#allocation2 + $0x58] sm:$0x1f]
  %v2037 = vld [vmem:[#allocation2 + $0x60] sm:$0x1f]
  %v2038 = vld [vmem:[#allocation2 + $0x68] sm:$0x1f]
  %v2039 = vld [vmem:[#allocation2 + $0x70] sm:$0x1f]
  %v2040 = vld [vmem:[#allocation2 + $0x78] sm:$0x1f]
  %v2041 = vld [vmem:[#allocation2] sm:$0x1e]
  %v2042 = vld [vmem:[#allocation2 + $0x8] sm:$0x1e]
  %v2043 = vld [vmem:[#allocation2 + $0x10] sm:$0x1e]
  %v2044 = vld [vmem:[#allocation2 + $0x18] sm:$0x1e]
  %v2045 = vld [vmem:[#allocation2 + $0x20] sm:$0x1e]
  %v2046 = vld [vmem:[#allocation2 + $0x28] sm:$0x1e]
  %v2047 = vld [vmem:[#allocation2 + $0x30] sm:$0x1e]
  %v2048 = vld [vmem:[#allocation2 + $0x38] sm:$0x1e]
  %v2049 = vld [vmem:[#allocation2 + $0x40] sm:$0x1e]
  %v2050 = vld [vmem:[#allocation2 + $0x48] sm:$0x1e]
  %v2051 = vld [vmem:[#allocation2 + $0x50] sm:$0x1e]
  %v2052 = vld [vmem:[#allocation2 + $0x58] sm:$0x1e]
  %v2053 = vld [vmem:[#allocation2 + $0x60] sm:$0x1e]
  %v2054 = vld [vmem:[#allocation2 + $0x68] sm:$0x1e]
  %v2055 = vld [vmem:[#allocation2 + $0x70] sm:$0x1e]
  %v2056 = vld [vmem:[#allocation2 + $0x78] sm:$0x1e]
  %v2058 = vshrl.u32 %v2025, 16
  %v2060 = vshll.u32 %v2025, 16
  %v2062 = vrot.slane %v2060, 1
  %v2063 = vor.u32 %v2058, %v2062
  %v2065 = vshrl.u32 %v2026, 16
  %v2067 = vshll.u32 %v2026, 16
  %v2069 = vrot.slane %v2067, 1
  %v2070 = vor.u32 %v2065, %v2069
  %v2072 = vshrl.u32 %v2027, 16
  %v2074 = vshll.u32 %v2027, 16
  %v2076 = vrot.slane %v2074, 1
  %v2077 = vor.u32 %v2072, %v2076
  %v2079 = vshrl.u32 %v2028, 16
  %v2081 = vshll.u32 %v2028, 16
  %v2083 = vrot.slane %v2081, 1
  %v2084 = vor.u32 %v2079, %v2083
  %v2086 = vshrl.u32 %v2029, 16
  %v2088 = vshll.u32 %v2029, 16
  %v2090 = vrot.slane %v2088, 1
  %v2091 = vor.u32 %v2086, %v2090
  %v2093 = vshrl.u32 %v2030, 16
  %v2095 = vshll.u32 %v2030, 16
  %v2097 = vrot.slane %v2095, 1
  %v2098 = vor.u32 %v2093, %v2097
  %v2100 = vshrl.u32 %v2031, 16
  %v2102 = vshll.u32 %v2031, 16
  %v2104 = vrot.slane %v2102, 1
  %v2105 = vor.u32 %v2100, %v2104
  %v2107 = vshrl.u32 %v2032, 16
  %v2109 = vshll.u32 %v2032, 16
  %v2111 = vrot.slane %v2109, 1
  %v2112 = vor.u32 %v2107, %v2111
  %v2114 = vshrl.u32 %v2033, 16
  %v2116 = vshll.u32 %v2033, 16
  %v2118 = vrot.slane %v2116, 1
  %v2119 = vor.u32 %v2114, %v2118
  %v2121 = vshrl.u32 %v2034, 16
  %v2123 = vshll.u32 %v2034, 16
  %v2125 = vrot.slane %v2123, 1
  %v2126 = vor.u32 %v2121, %v2125
  %v2128 = vshrl.u32 %v2035, 16
  %v2130 = vshll.u32 %v2035, 16
  %v2132 = vrot.slane %v2130, 1
  %v2133 = vor.u32 %v2128, %v2132
  %v2135 = vshrl.u32 %v2036, 16
  %v2137 = vshll.u32 %v2036, 16
  %v2139 = vrot.slane %v2137, 1
  %v2140 = vor.u32 %v2135, %v2139
  %v2142 = vshrl.u32 %v2037, 16
  %v2144 = vshll.u32 %v2037, 16
  %v2146 = vrot.slane %v2144, 1
  %v2147 = vor.u32 %v2142, %v2146
  %v2149 = vshrl.u32 %v2038, 16
  %v2151 = vshll.u32 %v2038, 16
  %v2153 = vrot.slane %v2151, 1
  %v2154 = vor.u32 %v2149, %v2153
  %v2156 = vshrl.u32 %v2039, 16
  %v2158 = vshll.u32 %v2039, 16
  %v2160 = vrot.slane %v2158, 1
  %v2161 = vor.u32 %v2156, %v2160
  %v2163 = vshrl.u32 %v2040, 16
  %v2165 = vshll.u32 %v2040, 16
  %v2167 = vrot.slane %v2165, 1
  %v2168 = vor.u32 %v2163, %v2167
  %2169 = vrot.lane.b32.xlu0 %v2063, 96
  %v2170 = vpop.permute.xlu0 %2169
  %2171 = vrot.lane.b32.xlu0 %v2070, 96
  %v2172 = vpop.permute.xlu0 %2171
  %2173 = vrot.lane.b32.xlu0 %v2077, 96
  %v2174 = vpop.permute.xlu0 %2173
  %2175 = vrot.lane.b32.xlu0 %v2084, 96
  %v2176 = vpop.permute.xlu0 %2175
  %2177 = vrot.lane.b32.xlu0 %v2091, 96
  %v2178 = vpop.permute.xlu0 %2177
  %2179 = vrot.lane.b32.xlu0 %v2098, 96
  %v2180 = vpop.permute.xlu0 %2179
  %2181 = vrot.lane.b32.xlu0 %v2105, 96
  %v2182 = vpop.permute.xlu0 %2181
  %2183 = vrot.lane.b32.xlu0 %v2112, 96
  %v2184 = vpop.permute.xlu0 %2183
  %2185 = vrot.lane.b32.xlu0 %v2119, 96
  %v2186 = vpop.permute.xlu0 %2185
  %2187 = vrot.lane.b32.xlu0 %v2126, 96
  %v2188 = vpop.permute.xlu0 %2187
  %2189 = vrot.lane.b32.xlu0 %v2133, 96
  %v2190 = vpop.permute.xlu0 %2189
  %2191 = vrot.lane.b32.xlu0 %v2140, 96
  %v2192 = vpop.permute.xlu0 %2191
  %2193 = vrot.lane.b32.xlu0 %v2147, 96
  %v2194 = vpop.permute.xlu0 %2193
  %2195 = vrot.lane.b32.xlu0 %v2154, 96
  %v2196 = vpop.permute.xlu0 %2195
  %2197 = vrot.lane.b32.xlu0 %v2161, 96
  %v2198 = vpop.permute.xlu0 %2197
  %2199 = vrot.lane.b32.xlu0 %v2168, 96
  %v2200 = vpop.permute.xlu0 %2199
  %vm2201 = vcmask 785408
  %v2202 = vsel %vm2201, %v2170, %v2172
  %v2203 = vsel %vm2201, %v2174, %v2176
  %v2204 = vsel %vm2201, %v2178, %v2180
  %v2205 = vsel %vm2201, %v2182, %v2184
  %v2206 = vsel %vm2201, %v2186, %v2188
  %v2207 = vsel %vm2201, %v2190, %v2192
  %v2208 = vsel %vm2201, %v2194, %v2196
  %v2209 = vsel %vm2201, %v2198, %v2200
  %v2226 = vrot.slane %v2041, 1
  %v2227 = vrot.slane %v2042, 1
  %v2228 = vrot.slane %v2043, 1
  %v2229 = vrot.slane %v2044, 1
  %v2230 = vrot.slane %v2045, 1
  %v2231 = vrot.slane %v2046, 1
  %v2232 = vrot.slane %v2047, 1
  %v2233 = vrot.slane %v2048, 1
  %v2234 = vrot.slane %v2049, 1
  %v2235 = vrot.slane %v2050, 1
  %v2236 = vrot.slane %v2051, 1
  %v2237 = vrot.slane %v2052, 1
  %v2238 = vrot.slane %v2053, 1
  %v2239 = vrot.slane %v2054, 1
  %v2240 = vrot.slane %v2055, 1
  %v2241 = vrot.slane %v2056, 1
  %2242 = vrot.lane.b32.xlu0 %v2226, 64
  %v2243 = vpop.permute.xlu0 %2242
  %2244 = vrot.lane.b32.xlu0 %v2227, 64
  %v2245 = vpop.permute.xlu0 %2244
  %2246 = vrot.lane.b32.xlu0 %v2228, 64
  %v2247 = vpop.permute.xlu0 %2246
  %2248 = vrot.lane.b32.xlu0 %v2229, 64
  %v2249 = vpop.permute.xlu0 %2248
  %2250 = vrot.lane.b32.xlu0 %v2230, 64
  %v2251 = vpop.permute.xlu0 %2250
  %2252 = vrot.lane.b32.xlu0 %v2231, 64
  %v2253 = vpop.permute.xlu0 %2252
  %2254 = vrot.lane.b32.xlu0 %v2232, 64
  %v2255 = vpop.permute.xlu0 %2254
  %2256 = vrot.lane.b32.xlu0 %v2233, 64
  %v2257 = vpop.permute.xlu0 %2256
  %2258 = vrot.lane.b32.xlu0 %v2234, 64
  %v2259 = vpop.permute.xlu0 %2258
  %2260 = vrot.lane.b32.xlu0 %v2235, 64
  %v2261 = vpop.permute.xlu0 %2260
  %2262 = vrot.lane.b32.xlu0 %v2236, 64
  %v2263 = vpop.permute.xlu0 %2262
  %2264 = vrot.lane.b32.xlu0 %v2237, 64
  %v2265 = vpop.permute.xlu0 %2264
  %2266 = vrot.lane.b32.xlu0 %v2238, 64
  %v2267 = vpop.permute.xlu0 %2266
  %2268 = vrot.lane.b32.xlu0 %v2239, 64
  %v2269 = vpop.permute.xlu0 %2268
  %2270 = vrot.lane.b32.xlu0 %v2240, 64
  %v2271 = vpop.permute.xlu0 %2270
  %2272 = vrot.lane.b32.xlu0 %v2241, 64
  %v2273 = vpop.permute.xlu0 %2272
  %vm2274 = vcmask 523264
  %v2275 = vsel %vm2274, %v2243, %v2245
  %v2276 = vsel %vm2274, %v2247, %v2249
  %v2277 = vsel %vm2274, %v2251, %v2253
  %v2278 = vsel %vm2274, %v2255, %v2257
  %v2279 = vsel %vm2274, %v2259, %v2261
  %v2280 = vsel %vm2274, %v2263, %v2265
  %v2281 = vsel %vm2274, %v2267, %v2269
  %v2282 = vsel %vm2274, %v2271, %v2273
  %vm2283 = vcmask 785408
  %v2286 = vsel %vm2283, %v2010, %v2170
  %v2289 = vsel %vm2283, %v2012, %v2174
  %v2292 = vsel %vm2283, %v2014, %v2178
  %v2295 = vsel %vm2283, %v2016, %v2182
  %v2298 = vsel %vm2283, %v2018, %v2186
  %v2301 = vsel %vm2283, %v2020, %v2190
  %v2304 = vsel %vm2283, %v2022, %v2194
  %v2307 = vsel %vm2283, %v2024, %v2198
  %v2310 = vsel %vm215, %v2172, %v2243
  %v2313 = vsel %vm215, %v2176, %v2247
  %v2316 = vsel %vm215, %v2180, %v2251
  %v2319 = vsel %vm215, %v2184, %v2255
  %v2322 = vsel %vm215, %v2188, %v2259
  %v2325 = vsel %vm215, %v2192, %v2263
  %v2328 = vsel %vm215, %v2196, %v2267
  %v2331 = vsel %vm215, %v2200, %v2271
  %v2356 = vunpack.c.l.b16 %v2009
  %v2357 = vunpack.c.l.b16 %v2286
  %v2358 = vunpack.c.l.b16 %v2202
  %v2359 = vunpack.c.l.b16 %v2310
  %v2360 = vunpack.c.l.b16 %v2275
  %v2361 = vunpack.c.l.b16 %v2245
  %v2362 = vunpack.c.l.b16 %v2011
  %v2363 = vunpack.c.l.b16 %v2289
  %v2364 = vunpack.c.l.b16 %v2203
  %v2365 = vunpack.c.l.b16 %v2313
  %v2366 = vunpack.c.l.b16 %v2276
  %v2367 = vunpack.c.l.b16 %v2249
  %v2368 = vunpack.c.l.b16 %v2013
  %v2369 = vunpack.c.l.b16 %v2292
  %v2370 = vunpack.c.l.b16 %v2204
  %v2371 = vunpack.c.l.b16 %v2316
  %v2372 = vunpack.c.l.b16 %v2277
  %v2373 = vunpack.c.l.b16 %v2253
  %v2374 = vunpack.c.l.b16 %v2015
  %v2375 = vunpack.c.l.b16 %v2295
  %v2376 = vunpack.c.l.b16 %v2205
  %v2377 = vunpack.c.l.b16 %v2319
  %v2378 = vunpack.c.l.b16 %v2278
  %v2379 = vunpack.c.l.b16 %v2257
  %v2380 = vunpack.c.l.b16 %v2017
  %v2381 = vunpack.c.l.b16 %v2298
  %v2382 = vunpack.c.l.b16 %v2206
  %v2383 = vunpack.c.l.b16 %v2322
  %v2384 = vunpack.c.l.b16 %v2279
  %v2385 = vunpack.c.l.b16 %v2261
  %v2386 = vunpack.c.l.b16 %v2019
  %v2387 = vunpack.c.l.b16 %v2301
  %v2388 = vunpack.c.l.b16 %v2207
  %v2389 = vunpack.c.l.b16 %v2325
  %v2390 = vunpack.c.l.b16 %v2280
  %v2391 = vunpack.c.l.b16 %v2265
  %v2392 = vunpack.c.l.b16 %v2021
  %v2393 = vunpack.c.l.b16 %v2304
  %v2394 = vunpack.c.l.b16 %v2208
  %v2395 = vunpack.c.l.b16 %v2328
  %v2396 = vunpack.c.l.b16 %v2281
  %v2397 = vunpack.c.l.b16 %v2269
  %v2398 = vunpack.c.l.b16 %v2023
  %v2399 = vunpack.c.l.b16 %v2307
  %v2400 = vunpack.c.l.b16 %v2209
  %v2401 = vunpack.c.l.b16 %v2331
  %v2402 = vunpack.c.l.b16 %v2282
  %v2403 = vunpack.c.l.b16 %v2273
  %v2404 = vld [vmem:[%s3] sm:$0xff]
  %v2405 = vld [vmem:[%s3 + $0x8] sm:$0xff]
  %v2406 = vld [vmem:[%s3 + $0x10] sm:$0xff]
  %v2407 = vld [vmem:[%s3 + $0x18] sm:$0xff]
  %v2408 = vld [vmem:[%s3 + $0x20] sm:$0xff]
  %v2409 = vld [vmem:[%s3 + $0x28] sm:$0xff]
  %v2410 = vld [vmem:[%s3 + $0x30] sm:$0xff]
  %v2411 = vld [vmem:[%s3 + $0x38] sm:$0xff]
  %v2412 = vld [vmem:[%s3 + $0x40] sm:$0xff]
  %v2413 = vld [vmem:[%s3 + $0x48] sm:$0xff]
  %v2414 = vld [vmem:[%s3 + $0x50] sm:$0xff]
  %v2415 = vld [vmem:[%s3 + $0x58] sm:$0xff]
  %v2416 = vld [vmem:[%s3 + $0x60] sm:$0xff]
  %v2417 = vld [vmem:[%s3 + $0x68] sm:$0xff]
  %v2418 = vld [vmem:[%s3 + $0x70] sm:$0xff]
  %v2419 = vld [vmem:[%s3 + $0x78] sm:$0xff]
  %v2420 = vld [vmem:[%s3 + $0x80] sm:$0xff]
  %v2421 = vld [vmem:[%s3 + $0x88] sm:$0xff]
  %v2422 = vld [vmem:[%s3 + $0x90] sm:$0xff]
  %v2423 = vld [vmem:[%s3 + $0x98] sm:$0xff]
  %v2424 = vld [vmem:[%s3 + $0xa0] sm:$0xff]
  %v2425 = vld [vmem:[%s3 + $0xa8] sm:$0xff]
  %v2426 = vld [vmem:[%s3 + $0xb0] sm:$0xff]
  %v2427 = vld [vmem:[%s3 + $0xb8] sm:$0xff]
  %v2428 = vld [vmem:[%s3 + $0xc0] sm:$0xff]
  %v2429 = vld [vmem:[%s3 + $0xc8] sm:$0xff]
  %v2430 = vld [vmem:[%s3 + $0xd0] sm:$0xff]
  %v2431 = vld [vmem:[%s3 + $0xd8] sm:$0xff]
  %v2432 = vld [vmem:[%s3 + $0xe0] sm:$0xff]
  %v2433 = vld [vmem:[%s3 + $0xe8] sm:$0xff]
  %v2434 = vld [vmem:[%s3 + $0xf0] sm:$0xff]
  %v2435 = vld [vmem:[%s3 + $0xf8] sm:$0xff]
  %v2436 = vld [vmem:[%s3 + $0x100] sm:$0xff]
  %v2437 = vld [vmem:[%s3 + $0x108] sm:$0xff]
  %v2438 = vld [vmem:[%s3 + $0x110] sm:$0xff]
  %v2439 = vld [vmem:[%s3 + $0x118] sm:$0xff]
  %v2440 = vld [vmem:[%s3 + $0x120] sm:$0xff]
  %v2441 = vld [vmem:[%s3 + $0x128] sm:$0xff]
  %v2442 = vld [vmem:[%s3 + $0x130] sm:$0xff]
  %v2443 = vld [vmem:[%s3 + $0x138] sm:$0xff]
  %v2444 = vld [vmem:[%s3 + $0x140] sm:$0xff]
  %v2445 = vld [vmem:[%s3 + $0x148] sm:$0xff]
  %v2446 = vld [vmem:[%s3 + $0x150] sm:$0xff]
  %v2447 = vld [vmem:[%s3 + $0x158] sm:$0xff]
  %v2448 = vld [vmem:[%s3 + $0x160] sm:$0xff]
  %v2449 = vld [vmem:[%s3 + $0x168] sm:$0xff]
  %v2450 = vld [vmem:[%s3 + $0x170] sm:$0xff]
  %v2451 = vld [vmem:[%s3 + $0x178] sm:$0xff]
  %v2452 = vld [vmem:[%s3 + $0x180] sm:$0xff]
  %v2453 = vld [vmem:[%s3 + $0x188] sm:$0xff]
  %v2454 = vld [vmem:[%s3 + $0x190] sm:$0xff]
  %v2455 = vld [vmem:[%s3 + $0x198] sm:$0xff]
  %v2456 = vld [vmem:[%s3 + $0x1a0] sm:$0xff]
  %v2457 = vld [vmem:[%s3 + $0x1a8] sm:$0xff]
  %v2458 = vld [vmem:[%s3 + $0x1b0] sm:$0xff]
  %v2459 = vld [vmem:[%s3 + $0x1b8] sm:$0xff]
  %v2460 = vld [vmem:[%s3 + $0x1c0] sm:$0xff]
  %v2461 = vld [vmem:[%s3 + $0x1c8] sm:$0xff]
  %v2462 = vld [vmem:[%s3 + $0x1d0] sm:$0xff]
  %v2463 = vld [vmem:[%s3 + $0x1d8] sm:$0xff]
  %v2464 = vld [vmem:[%s3 + $0x1e0] sm:$0xff]
  %v2465 = vld [vmem:[%s3 + $0x1e8] sm:$0xff]
  %v2466 = vld [vmem:[%s3 + $0x1f0] sm:$0xff]
  %v2467 = vld [vmem:[%s3 + $0x1f8] sm:$0xff]
  %v2468 = vld [vmem:[%s3 + $0x200] sm:$0xff]
  %v2469 = vld [vmem:[%s3 + $0x208] sm:$0xff]
  %v2470 = vld [vmem:[%s3 + $0x210] sm:$0xff]
  %v2471 = vld [vmem:[%s3 + $0x218] sm:$0xff]
  %v2472 = vld [vmem:[%s3 + $0x220] sm:$0xff]
  %v2473 = vld [vmem:[%s3 + $0x228] sm:$0xff]
  %v2474 = vld [vmem:[%s3 + $0x230] sm:$0xff]
  %v2475 = vld [vmem:[%s3 + $0x238] sm:$0xff]
  %v2476 = vld [vmem:[%s3 + $0x240] sm:$0xff]
  %v2477 = vld [vmem:[%s3 + $0x248] sm:$0xff]
  %v2478 = vld [vmem:[%s3 + $0x250] sm:$0xff]
  %v2479 = vld [vmem:[%s3 + $0x258] sm:$0xff]
  %v2480 = vld [vmem:[%s3 + $0x260] sm:$0xff]
  %v2481 = vld [vmem:[%s3 + $0x268] sm:$0xff]
  %v2482 = vld [vmem:[%s3 + $0x270] sm:$0xff]
  %v2483 = vld [vmem:[%s3 + $0x278] sm:$0xff]
  %v2484 = vld [vmem:[%s3 + $0x280] sm:$0xff]
  %v2485 = vld [vmem:[%s3 + $0x288] sm:$0xff]
  %v2486 = vld [vmem:[%s3 + $0x290] sm:$0xff]
  %v2487 = vld [vmem:[%s3 + $0x298] sm:$0xff]
  %v2488 = vld [vmem:[%s3 + $0x2a0] sm:$0xff]
  %v2489 = vld [vmem:[%s3 + $0x2a8] sm:$0xff]
  %v2490 = vld [vmem:[%s3 + $0x2b0] sm:$0xff]
  %v2491 = vld [vmem:[%s3 + $0x2b8] sm:$0xff]
  %v2492 = vld [vmem:[%s3 + $0x2c0] sm:$0xff]
  %v2493 = vld [vmem:[%s3 + $0x2c8] sm:$0xff]
  %v2494 = vld [vmem:[%s3 + $0x2d0] sm:$0xff]
  %v2495 = vld [vmem:[%s3 + $0x2d8] sm:$0xff]
  %v2496 = vld [vmem:[%s3 + $0x2e0] sm:$0xff]
  %v2497 = vld [vmem:[%s3 + $0x2e8] sm:$0xff]
  %v2498 = vld [vmem:[%s3 + $0x2f0] sm:$0xff]
  %v2499 = vld [vmem:[%s3 + $0x2f8] sm:$0xff]
  %v2500 = vld [vmem:[%s3 + $0x300] sm:$0xff]
  %v2501 = vld [vmem:[%s3 + $0x308] sm:$0xff]
  %v2502 = vld [vmem:[%s3 + $0x310] sm:$0xff]
  %v2503 = vld [vmem:[%s3 + $0x318] sm:$0xff]
  %v2504 = vld [vmem:[%s3 + $0x320] sm:$0xff]
  %v2505 = vld [vmem:[%s3 + $0x328] sm:$0xff]
  %v2506 = vld [vmem:[%s3 + $0x330] sm:$0xff]
  %v2507 = vld [vmem:[%s3 + $0x338] sm:$0xff]
  %v2508 = vld [vmem:[%s3 + $0x340] sm:$0xff]
  %v2509 = vld [vmem:[%s3 + $0x348] sm:$0xff]
  %v2510 = vld [vmem:[%s3 + $0x350] sm:$0xff]
  %v2511 = vld [vmem:[%s3 + $0x358] sm:$0xff]
  %v2512 = vld [vmem:[%s3 + $0x360] sm:$0xff]
  %v2513 = vld [vmem:[%s3 + $0x368] sm:$0xff]
  %v2514 = vld [vmem:[%s3 + $0x370] sm:$0xff]
  %v2515 = vld [vmem:[%s3 + $0x378] sm:$0xff]
  %v2516 = vld [vmem:[%s3 + $0x380] sm:$0xff]
  %v2517 = vld [vmem:[%s3 + $0x388] sm:$0xff]
  %v2518 = vld [vmem:[%s3 + $0x390] sm:$0xff]
  %v2519 = vld [vmem:[%s3 + $0x398] sm:$0xff]
  %v2520 = vld [vmem:[%s3 + $0x3a0] sm:$0xff]
  %v2521 = vld [vmem:[%s3 + $0x3a8] sm:$0xff]
  %v2522 = vld [vmem:[%s3 + $0x3b0] sm:$0xff]
  %v2523 = vld [vmem:[%s3 + $0x3b8] sm:$0xff]
  %v2524 = vld [vmem:[%s3 + $0x3c0] sm:$0xff]
  %v2525 = vld [vmem:[%s3 + $0x3c8] sm:$0xff]
  %v2526 = vld [vmem:[%s3 + $0x3d0] sm:$0xff]
  %v2527 = vld [vmem:[%s3 + $0x3d8] sm:$0xff]
  %v2528 = vld [vmem:[%s3 + $0x3e0] sm:$0xff]
  %v2529 = vld [vmem:[%s3 + $0x3e8] sm:$0xff]
  %v2530 = vld [vmem:[%s3 + $0x3f0] sm:$0xff]
  %v2531 = vld [vmem:[%s3 + $0x3f8] sm:$0xff]
  %v2532 = vld [vmem:[%s3 + $0x400] sm:$0xff]
  %v2533 = vld [vmem:[%s3 + $0x408] sm:$0xff]
  %v2534 = vld [vmem:[%s3 + $0x410] sm:$0xff]
  %v2535 = vld [vmem:[%s3 + $0x418] sm:$0xff]
  %v2536 = vld [vmem:[%s3 + $0x420] sm:$0xff]
  %v2537 = vld [vmem:[%s3 + $0x428] sm:$0xff]
  %v2538 = vld [vmem:[%s3 + $0x430] sm:$0xff]
  %v2539 = vld [vmem:[%s3 + $0x438] sm:$0xff]
  %v2540 = vld [vmem:[%s3 + $0x440] sm:$0xff]
  %v2541 = vld [vmem:[%s3 + $0x448] sm:$0xff]
  %v2542 = vld [vmem:[%s3 + $0x450] sm:$0xff]
  %v2543 = vld [vmem:[%s3 + $0x458] sm:$0xff]
  %v2544 = vld [vmem:[%s3 + $0x460] sm:$0xff]
  %v2545 = vld [vmem:[%s3 + $0x468] sm:$0xff]
  %v2546 = vld [vmem:[%s3 + $0x470] sm:$0xff]
  %v2547 = vld [vmem:[%s3 + $0x478] sm:$0xff]
  %v2548 = vld [vmem:[%s3 + $0x480] sm:$0xff]
  %v2549 = vld [vmem:[%s3 + $0x488] sm:$0xff]
  %v2550 = vld [vmem:[%s3 + $0x490] sm:$0xff]
  %v2551 = vld [vmem:[%s3 + $0x498] sm:$0xff]
  %v2552 = vld [vmem:[%s3 + $0x4a0] sm:$0xff]
  %v2553 = vld [vmem:[%s3 + $0x4a8] sm:$0xff]
  %v2554 = vld [vmem:[%s3 + $0x4b0] sm:$0xff]
  %v2555 = vld [vmem:[%s3 + $0x4b8] sm:$0xff]
  %v2556 = vld [vmem:[%s3 + $0x4c0] sm:$0xff]
  %v2557 = vld [vmem:[%s3 + $0x4c8] sm:$0xff]
  %v2558 = vld [vmem:[%s3 + $0x4d0] sm:$0xff]
  %v2559 = vld [vmem:[%s3 + $0x4d8] sm:$0xff]
  %v2560 = vld [vmem:[%s3 + $0x4e0] sm:$0xff]
  %v2561 = vld [vmem:[%s3 + $0x4e8] sm:$0xff]
  %v2562 = vld [vmem:[%s3 + $0x4f0] sm:$0xff]
  %v2563 = vld [vmem:[%s3 + $0x4f8] sm:$0xff]
  %v2564 = vld [vmem:[%s3 + $0x500] sm:$0xff]
  %v2565 = vld [vmem:[%s3 + $0x508] sm:$0xff]
  %v2566 = vld [vmem:[%s3 + $0x510] sm:$0xff]
  %v2567 = vld [vmem:[%s3 + $0x518] sm:$0xff]
  %v2568 = vld [vmem:[%s3 + $0x520] sm:$0xff]
  %v2569 = vld [vmem:[%s3 + $0x528] sm:$0xff]
  %v2570 = vld [vmem:[%s3 + $0x530] sm:$0xff]
  %v2571 = vld [vmem:[%s3 + $0x538] sm:$0xff]
  %v2572 = vpack.c.b16 %v2362, %v2356
  %v2573 = vpack.c.b16 %v2363, %v2357
  %v2574 = vpack.c.b16 %v2364, %v2358
  %v2575 = vpack.c.b16 %v2365, %v2359
  %v2576 = vpack.c.b16 %v2366, %v2360
  %v2577 = vpack.c.b16 %v2367, %v2361
  %v2578 = vpack.c.b16 %v2374, %v2368
  %v2579 = vpack.c.b16 %v2375, %v2369
  %v2580 = vpack.c.b16 %v2376, %v2370
  %v2581 = vpack.c.b16 %v2377, %v2371
  %v2582 = vpack.c.b16 %v2378, %v2372
  %v2583 = vpack.c.b16 %v2379, %v2373
  %v2584 = vpack.c.b16 %v2386, %v2380
  %v2585 = vpack.c.b16 %v2387, %v2381
  %v2586 = vpack.c.b16 %v2388, %v2382
  %v2587 = vpack.c.b16 %v2389, %v2383
  %v2588 = vpack.c.b16 %v2390, %v2384
  %v2589 = vpack.c.b16 %v2391, %v2385
  %v2590 = vpack.c.b16 %v2398, %v2392
  %v2591 = vpack.c.b16 %v2399, %v2393
  %v2592 = vpack.c.b16 %v2400, %v2394
  %v2593 = vpack.c.b16 %v2401, %v2395
  %v2594 = vpack.c.b16 %v2402, %v2396
  %v2595 = vpack.c.b16 %v2403, %v2397
  %v2784 = vunpack.c.l.b16 %v2404
  %v2785 = vunpack.c.h.b16 %v2404
  %v2786 = vunpack.c.l.b16 %v2405
  %v2787 = vunpack.c.h.b16 %v2405
  %v2788 = vunpack.c.l.b16 %v2406
  %v2789 = vunpack.c.h.b16 %v2406
  %v2790 = vunpack.c.l.b16 %v2407
  %v2791 = vunpack.c.h.b16 %v2407
  %v2792 = vunpack.c.l.b16 %v2408
  %v2793 = vunpack.c.h.b16 %v2408
  %v2794 = vunpack.c.l.b16 %v2409
  %v2795 = vunpack.c.h.b16 %v2409
  %v2796 = vunpack.c.l.b16 %v2410
  %v2797 = vunpack.c.h.b16 %v2410
  %v2798 = vunpack.c.l.b16 %v2411
  %v2799 = vunpack.c.h.b16 %v2411
  %v2800 = vunpack.c.l.b16 %v2412
  %v2801 = vunpack.c.h.b16 %v2412
  %v2802 = vunpack.c.l.b16 %v2413
  %v2803 = vunpack.c.h.b16 %v2413
  %v2804 = vunpack.c.l.b16 %v2414
  %v2805 = vunpack.c.h.b16 %v2414
  %v2806 = vunpack.c.l.b16 %v2415
  %v2807 = vunpack.c.h.b16 %v2415
  %v2808 = vunpack.c.l.b16 %v2416
  %v2809 = vunpack.c.h.b16 %v2416
  %v2810 = vunpack.c.l.b16 %v2417
  %v2811 = vunpack.c.h.b16 %v2417
  %v2812 = vunpack.c.l.b16 %v2418
  %v2813 = vunpack.c.h.b16 %v2418
  %v2814 = vunpack.c.l.b16 %v2419
  %v2815 = vunpack.c.h.b16 %v2419
  %v2816 = vunpack.c.l.b16 %v2420
  %v2817 = vunpack.c.h.b16 %v2420
  %v2818 = vunpack.c.l.b16 %v2421
  %v2819 = vunpack.c.h.b16 %v2421
  %v2820 = vunpack.c.l.b16 %v2422
  %v2821 = vunpack.c.h.b16 %v2422
  %v2822 = vunpack.c.l.b16 %v2423
  %v2823 = vunpack.c.h.b16 %v2423
  %v2824 = vunpack.c.l.b16 %v2424
  %v2825 = vunpack.c.h.b16 %v2424
  %v2826 = vunpack.c.l.b16 %v2425
  %v2827 = vunpack.c.h.b16 %v2425
  %v2828 = vunpack.c.l.b16 %v2426
  %v2829 = vunpack.c.h.b16 %v2426
  %v2830 = vunpack.c.l.b16 %v2427
  %v2831 = vunpack.c.h.b16 %v2427
  %v2832 = vunpack.c.l.b16 %v2428
  %v2833 = vunpack.c.h.b16 %v2428
  %v2834 = vunpack.c.l.b16 %v2429
  %v2835 = vunpack.c.h.b16 %v2429
  %v2836 = vunpack.c.l.b16 %v2430
  %v2837 = vunpack.c.h.b16 %v2430
  %v2838 = vunpack.c.l.b16 %v2431
  %v2839 = vunpack.c.h.b16 %v2431
  %v2840 = vunpack.c.l.b16 %v2432
  %v2841 = vunpack.c.h.b16 %v2432
  %v2842 = vunpack.c.l.b16 %v2433
  %v2843 = vunpack.c.h.b16 %v2433
  %v2844 = vunpack.c.l.b16 %v2434
  %v2845 = vunpack.c.h.b16 %v2434
  %v2846 = vunpack.c.l.b16 %v2435
  %v2847 = vunpack.c.h.b16 %v2435
  %v2848 = vunpack.c.l.b16 %v2436
  %v2849 = vunpack.c.h.b16 %v2436
  %v2850 = vunpack.c.l.b16 %v2437
  %v2851 = vunpack.c.h.b16 %v2437
  %v2852 = vunpack.c.l.b16 %v2438
  %v2853 = vunpack.c.h.b16 %v2438
  %v2854 = vunpack.c.l.b16 %v2439
  %v2855 = vunpack.c.h.b16 %v2439
  %v2856 = vunpack.c.l.b16 %v2440
  %v2857 = vunpack.c.h.b16 %v2440
  %v2858 = vunpack.c.l.b16 %v2441
  %v2859 = vunpack.c.h.b16 %v2441
  %v2860 = vunpack.c.l.b16 %v2442
  %v2861 = vunpack.c.h.b16 %v2442
  %v2862 = vunpack.c.l.b16 %v2443
  %v2863 = vunpack.c.h.b16 %v2443
  %v2864 = vunpack.c.l.b16 %v2444
  %v2865 = vunpack.c.h.b16 %v2444
  %v2866 = vunpack.c.l.b16 %v2445
  %v2867 = vunpack.c.h.b16 %v2445
  %v2868 = vunpack.c.l.b16 %v2446
  %v2869 = vunpack.c.h.b16 %v2446
  %v2870 = vunpack.c.l.b16 %v2447
  %v2871 = vunpack.c.h.b16 %v2447
  %v2872 = vunpack.c.l.b16 %v2448
  %v2873 = vunpack.c.h.b16 %v2448
  %v2874 = vunpack.c.l.b16 %v2449
  %v2875 = vunpack.c.h.b16 %v2449
  %v2876 = vunpack.c.l.b16 %v2450
  %v2877 = vunpack.c.h.b16 %v2450
  %v2878 = vunpack.c.l.b16 %v2451
  %v2879 = vunpack.c.h.b16 %v2451
  %v2880 = vunpack.c.l.b16 %v2452
  %v2881 = vunpack.c.h.b16 %v2452
  %v2882 = vunpack.c.l.b16 %v2453
  %v2883 = vunpack.c.h.b16 %v2453
  %v2884 = vunpack.c.l.b16 %v2454
  %v2885 = vunpack.c.h.b16 %v2454
  %v2886 = vunpack.c.l.b16 %v2455
  %v2887 = vunpack.c.h.b16 %v2455
  %v2888 = vunpack.c.l.b16 %v2456
  %v2889 = vunpack.c.h.b16 %v2456
  %v2890 = vunpack.c.l.b16 %v2457
  %v2891 = vunpack.c.h.b16 %v2457
  %v2892 = vunpack.c.l.b16 %v2458
  %v2893 = vunpack.c.h.b16 %v2458
  %v2894 = vunpack.c.l.b16 %v2459
  %v2895 = vunpack.c.h.b16 %v2459
  %v2896 = vunpack.c.l.b16 %v2460
  %v2897 = vunpack.c.h.b16 %v2460
  %v2898 = vunpack.c.l.b16 %v2461
  %v2899 = vunpack.c.h.b16 %v2461
  %v2900 = vunpack.c.l.b16 %v2462
  %v2901 = vunpack.c.h.b16 %v2462
  %v2902 = vunpack.c.l.b16 %v2463
  %v2903 = vunpack.c.h.b16 %v2463
  %v2904 = vunpack.c.l.b16 %v2464
  %v2905 = vunpack.c.h.b16 %v2464
  %v2906 = vunpack.c.l.b16 %v2465
  %v2907 = vunpack.c.h.b16 %v2465
  %v2908 = vunpack.c.l.b16 %v2466
  %v2909 = vunpack.c.h.b16 %v2466
  %v2910 = vunpack.c.l.b16 %v2467
  %v2911 = vunpack.c.h.b16 %v2467
  %v2912 = vunpack.c.l.b16 %v2468
  %v2913 = vunpack.c.h.b16 %v2468
  %v2914 = vunpack.c.l.b16 %v2469
  %v2915 = vunpack.c.h.b16 %v2469
  %v2916 = vunpack.c.l.b16 %v2470
  %v2917 = vunpack.c.h.b16 %v2470
  %v2918 = vunpack.c.l.b16 %v2471
  %v2919 = vunpack.c.h.b16 %v2471
  %v2920 = vunpack.c.l.b16 %v2472
  %v2921 = vunpack.c.h.b16 %v2472
  %v2922 = vunpack.c.l.b16 %v2473
  %v2923 = vunpack.c.h.b16 %v2473
  %v2924 = vunpack.c.l.b16 %v2474
  %v2925 = vunpack.c.h.b16 %v2474
  %v2926 = vunpack.c.l.b16 %v2475
  %v2927 = vunpack.c.h.b16 %v2475
  %v2928 = vunpack.c.l.b16 %v2476
  %v2929 = vunpack.c.h.b16 %v2476
  %v2930 = vunpack.c.l.b16 %v2477
  %v2931 = vunpack.c.h.b16 %v2477
  %v2932 = vunpack.c.l.b16 %v2478
  %v2933 = vunpack.c.h.b16 %v2478
  %v2934 = vunpack.c.l.b16 %v2479
  %v2935 = vunpack.c.h.b16 %v2479
  %v2936 = vunpack.c.l.b16 %v2480
  %v2937 = vunpack.c.h.b16 %v2480
  %v2938 = vunpack.c.l.b16 %v2481
  %v2939 = vunpack.c.h.b16 %v2481
  %v2940 = vunpack.c.l.b16 %v2482
  %v2941 = vunpack.c.h.b16 %v2482
  %v2942 = vunpack.c.l.b16 %v2483
  %v2943 = vunpack.c.h.b16 %v2483
  %v2944 = vunpack.c.l.b16 %v2484
  %v2945 = vunpack.c.h.b16 %v2484
  %v2946 = vunpack.c.l.b16 %v2485
  %v2947 = vunpack.c.h.b16 %v2485
  %v2948 = vunpack.c.l.b16 %v2486
  %v2949 = vunpack.c.h.b16 %v2486
  %v2950 = vunpack.c.l.b16 %v2487
  %v2951 = vunpack.c.h.b16 %v2487
  %v2952 = vunpack.c.l.b16 %v2488
  %v2953 = vunpack.c.h.b16 %v2488
  %v2954 = vunpack.c.l.b16 %v2489
  %v2955 = vunpack.c.h.b16 %v2489
  %v2956 = vunpack.c.l.b16 %v2490
  %v2957 = vunpack.c.h.b16 %v2490
  %v2958 = vunpack.c.l.b16 %v2491
  %v2959 = vunpack.c.h.b16 %v2491
  %v2960 = vunpack.c.l.b16 %v2492
  %v2961 = vunpack.c.h.b16 %v2492
  %v2962 = vunpack.c.l.b16 %v2493
  %v2963 = vunpack.c.h.b16 %v2493
  %v2964 = vunpack.c.l.b16 %v2494
  %v2965 = vunpack.c.h.b16 %v2494
  %v2966 = vunpack.c.l.b16 %v2495
  %v2967 = vunpack.c.h.b16 %v2495
  %v2968 = vunpack.c.l.b16 %v2496
  %v2969 = vunpack.c.h.b16 %v2496
  %v2970 = vunpack.c.l.b16 %v2497
  %v2971 = vunpack.c.h.b16 %v2497
  %v2972 = vunpack.c.l.b16 %v2498
  %v2973 = vunpack.c.h.b16 %v2498
  %v2974 = vunpack.c.l.b16 %v2499
  %v2975 = vunpack.c.h.b16 %v2499
  %v2976 = vunpack.c.l.b16 %v2500
  %v2977 = vunpack.c.h.b16 %v2500
  %v2978 = vunpack.c.l.b16 %v2501
  %v2979 = vunpack.c.h.b16 %v2501
  %v2980 = vunpack.c.l.b16 %v2502
  %v2981 = vunpack.c.h.b16 %v2502
  %v2982 = vunpack.c.l.b16 %v2503
  %v2983 = vunpack.c.h.b16 %v2503
  %v2984 = vunpack.c.l.b16 %v2504
  %v2985 = vunpack.c.h.b16 %v2504
  %v2986 = vunpack.c.l.b16 %v2505
  %v2987 = vunpack.c.h.b16 %v2505
  %v2988 = vunpack.c.l.b16 %v2506
  %v2989 = vunpack.c.h.b16 %v2506
  %v2990 = vunpack.c.l.b16 %v2507
  %v2991 = vunpack.c.h.b16 %v2507
  %v2992 = vunpack.c.l.b16 %v2508
  %v2993 = vunpack.c.h.b16 %v2508
  %v2994 = vunpack.c.l.b16 %v2509
  %v2995 = vunpack.c.h.b16 %v2509
  %v2996 = vunpack.c.l.b16 %v2510
  %v2997 = vunpack.c.h.b16 %v2510
  %v2998 = vunpack.c.l.b16 %v2511
  %v2999 = vunpack.c.h.b16 %v2511
  %v3000 = vunpack.c.l.b16 %v2512
  %v3001 = vunpack.c.h.b16 %v2512
  %v3002 = vunpack.c.l.b16 %v2513
  %v3003 = vunpack.c.h.b16 %v2513
  %v3004 = vunpack.c.l.b16 %v2514
  %v3005 = vunpack.c.h.b16 %v2514
  %v3006 = vunpack.c.l.b16 %v2515
  %v3007 = vunpack.c.h.b16 %v2515
  %v3008 = vunpack.c.l.b16 %v2516
  %v3009 = vunpack.c.h.b16 %v2516
  %v3010 = vunpack.c.l.b16 %v2517
  %v3011 = vunpack.c.h.b16 %v2517
  %v3012 = vunpack.c.l.b16 %v2518
  %v3013 = vunpack.c.h.b16 %v2518
  %v3014 = vunpack.c.l.b16 %v2519
  %v3015 = vunpack.c.h.b16 %v2519
  %v3016 = vunpack.c.l.b16 %v2520
  %v3017 = vunpack.c.h.b16 %v2520
  %v3018 = vunpack.c.l.b16 %v2521
  %v3019 = vunpack.c.h.b16 %v2521
  %v3020 = vunpack.c.l.b16 %v2522
  %v3021 = vunpack.c.h.b16 %v2522
  %v3022 = vunpack.c.l.b16 %v2523
  %v3023 = vunpack.c.h.b16 %v2523
  %v3024 = vunpack.c.l.b16 %v2524
  %v3025 = vunpack.c.h.b16 %v2524
  %v3026 = vunpack.c.l.b16 %v2525
  %v3027 = vunpack.c.h.b16 %v2525
  %v3028 = vunpack.c.l.b16 %v2526
  %v3029 = vunpack.c.h.b16 %v2526
  %v3030 = vunpack.c.l.b16 %v2527
  %v3031 = vunpack.c.h.b16 %v2527
  %v3032 = vunpack.c.l.b16 %v2528
  %v3033 = vunpack.c.h.b16 %v2528
  %v3034 = vunpack.c.l.b16 %v2529
  %v3035 = vunpack.c.h.b16 %v2529
  %v3036 = vunpack.c.l.b16 %v2530
  %v3037 = vunpack.c.h.b16 %v2530
  %v3038 = vunpack.c.l.b16 %v2531
  %v3039 = vunpack.c.h.b16 %v2531
  %v3040 = vunpack.c.l.b16 %v2532
  %v3041 = vunpack.c.h.b16 %v2532
  %v3042 = vunpack.c.l.b16 %v2533
  %v3043 = vunpack.c.h.b16 %v2533
  %v3044 = vunpack.c.l.b16 %v2534
  %v3045 = vunpack.c.h.b16 %v2534
  %v3046 = vunpack.c.l.b16 %v2535
  %v3047 = vunpack.c.h.b16 %v2535
  %v3048 = vunpack.c.l.b16 %v2536
  %v3049 = vunpack.c.h.b16 %v2536
  %v3050 = vunpack.c.l.b16 %v2537
  %v3051 = vunpack.c.h.b16 %v2537
  %v3052 = vunpack.c.l.b16 %v2538
  %v3053 = vunpack.c.h.b16 %v2538
  %v3054 = vunpack.c.l.b16 %v2539
  %v3055 = vunpack.c.h.b16 %v2539
  %v3056 = vunpack.c.l.b16 %v2540
  %v3057 = vunpack.c.h.b16 %v2540
  %v3058 = vunpack.c.l.b16 %v2541
  %v3059 = vunpack.c.h.b16 %v2541
  %v3060 = vunpack.c.l.b16 %v2542
  %v3061 = vunpack.c.h.b16 %v2542
  %v3062 = vunpack.c.l.b16 %v2543
  %v3063 = vunpack.c.h.b16 %v2543
  %v3064 = vunpack.c.l.b16 %v2544
  %v3065 = vunpack.c.h.b16 %v2544
  %v3066 = vunpack.c.l.b16 %v2545
  %v3067 = vunpack.c.h.b16 %v2545
  %v3068 = vunpack.c.l.b16 %v2546
  %v3069 = vunpack.c.h.b16 %v2546
  %v3070 = vunpack.c.l.b16 %v2547
  %v3071 = vunpack.c.h.b16 %v2547
  %v3072 = vunpack.c.l.b16 %v2548
  %v3073 = vunpack.c.h.b16 %v2548
  %v3074 = vunpack.c.l.b16 %v2549
  %v3075 = vunpack.c.h.b16 %v2549
  %v3076 = vunpack.c.l.b16 %v2550
  %v3077 = vunpack.c.h.b16 %v2550
  %v3078 = vunpack.c.l.b16 %v2551
  %v3079 = vunpack.c.h.b16 %v2551
  %v3080 = vunpack.c.l.b16 %v2552
  %v3081 = vunpack.c.h.b16 %v2552
  %v3082 = vunpack.c.l.b16 %v2553
  %v3083 = vunpack.c.h.b16 %v2553
  %v3084 = vunpack.c.l.b16 %v2554
  %v3085 = vunpack.c.h.b16 %v2554
  %v3086 = vunpack.c.l.b16 %v2555
  %v3087 = vunpack.c.h.b16 %v2555
  %v3088 = vunpack.c.l.b16 %v2556
  %v3089 = vunpack.c.h.b16 %v2556
  %v3090 = vunpack.c.l.b16 %v2557
  %v3091 = vunpack.c.h.b16 %v2557
  %v3092 = vunpack.c.l.b16 %v2558
  %v3093 = vunpack.c.h.b16 %v2558
  %v3094 = vunpack.c.l.b16 %v2559
  %v3095 = vunpack.c.h.b16 %v2559
  %v3096 = vunpack.c.l.b16 %v2560
  %v3097 = vunpack.c.h.b16 %v2560
  %v3098 = vunpack.c.l.b16 %v2561
  %v3099 = vunpack.c.h.b16 %v2561
  %v3100 = vunpack.c.l.b16 %v2562
  %v3101 = vunpack.c.h.b16 %v2562
  %v3102 = vunpack.c.l.b16 %v2563
  %v3103 = vunpack.c.h.b16 %v2563
  %v3104 = vunpack.c.l.b16 %v2564
  %v3105 = vunpack.c.h.b16 %v2564
  %v3106 = vunpack.c.l.b16 %v2565
  %v3107 = vunpack.c.h.b16 %v2565
  %v3108 = vunpack.c.l.b16 %v2566
  %v3109 = vunpack.c.h.b16 %v2566
  %v3110 = vunpack.c.l.b16 %v2567
  %v3111 = vunpack.c.h.b16 %v2567
  %v3112 = vunpack.c.l.b16 %v2568
  %v3113 = vunpack.c.h.b16 %v2568
  %v3114 = vunpack.c.l.b16 %v2569
  %v3115 = vunpack.c.h.b16 %v2569
  %v3116 = vunpack.c.l.b16 %v2570
  %v3117 = vunpack.c.h.b16 %v2570
  %v3118 = vunpack.c.l.b16 %v2571
  %v3119 = vunpack.c.h.b16 %v2571
  %v3120 = vpack.c.b16 %v2788, %v2784
  %v3121 = vpack.c.b16 %v2789, %v2785
  %v3122 = vpack.c.b16 %v2790, %v2786
  %v3123 = vpack.c.b16 %v2791, %v2787
  %v3124 = vpack.c.b16 %v2796, %v2792
  %v3125 = vpack.c.b16 %v2797, %v2793
  %v3126 = vpack.c.b16 %v2798, %v2794
  %v3127 = vpack.c.b16 %v2799, %v2795
  %v3128 = vpack.c.b16 %v2804, %v2800
  %v3129 = vpack.c.b16 %v2805, %v2801
  %v3130 = vpack.c.b16 %v2806, %v2802
  %v3131 = vpack.c.b16 %v2807, %v2803
  %v3132 = vpack.c.b16 %v2812, %v2808
  %v3133 = vpack.c.b16 %v2813, %v2809
  %v3134 = vpack.c.b16 %v2814, %v2810
  %v3135 = vpack.c.b16 %v2815, %v2811
  %v3136 = vpack.c.b16 %v2820, %v2816
  %v3137 = vpack.c.b16 %v2821, %v2817
  %v3138 = vpack.c.b16 %v2822, %v2818
  %v3139 = vpack.c.b16 %v2823, %v2819
  %v3140 = vpack.c.b16 %v2828, %v2824
  %v3141 = vpack.c.b16 %v2829, %v2825
  %v3142 = vpack.c.b16 %v2830, %v2826
  %v3143 = vpack.c.b16 %v2831, %v2827
  %v3144 = vpack.c.b16 %v2836, %v2832
  %v3145 = vpack.c.b16 %v2837, %v2833
  %v3146 = vpack.c.b16 %v2838, %v2834
  %v3147 = vpack.c.b16 %v2839, %v2835
  %v3148 = vpack.c.b16 %v2844, %v2840
  %v3149 = vpack.c.b16 %v2845, %v2841
  %v3150 = vpack.c.b16 %v2846, %v2842
  %v3151 = vpack.c.b16 %v2847, %v2843
  %v3152 = vpack.c.b16 %v2852, %v2848
  %v3153 = vpack.c.b16 %v2853, %v2849
  %v3154 = vpack.c.b16 %v2854, %v2850
  %v3155 = vpack.c.b16 %v2855, %v2851
  %v3156 = vpack.c.b16 %v2860, %v2856
  %v3157 = vpack.c.b16 %v2861, %v2857
  %v3158 = vpack.c.b16 %v2862, %v2858
  %v3159 = vpack.c.b16 %v2863, %v2859
  %v3160 = vpack.c.b16 %v2868, %v2864
  %v3161 = vpack.c.b16 %v2869, %v2865
  %v3162 = vpack.c.b16 %v2870, %v2866
  %v3163 = vpack.c.b16 %v2871, %v2867
  %v3164 = vpack.c.b16 %v2876, %v2872
  %v3165 = vpack.c.b16 %v2877, %v2873
  %v3166 = vpack.c.b16 %v2878, %v2874
  %v3167 = vpack.c.b16 %v2879, %v2875
  %v3168 = vpack.c.b16 %v2884, %v2880
  %v3169 = vpack.c.b16 %v2885, %v2881
  %v3170 = vpack.c.b16 %v2886, %v2882
  %v3171 = vpack.c.b16 %v2887, %v2883
  %v3172 = vpack.c.b16 %v2892, %v2888
  %v3173 = vpack.c.b16 %v2893, %v2889
  %v3174 = vpack.c.b16 %v2894, %v2890
  %v3175 = vpack.c.b16 %v2895, %v2891
  %v3176 = vpack.c.b16 %v2900, %v2896
  %v3177 = vpack.c.b16 %v2901, %v2897
  %v3178 = vpack.c.b16 %v2902, %v2898
  %v3179 = vpack.c.b16 %v2903, %v2899
  %v3180 = vpack.c.b16 %v2908, %v2904
  %v3181 = vpack.c.b16 %v2909, %v2905
  %v3182 = vpack.c.b16 %v2910, %v2906
  %v3183 = vpack.c.b16 %v2911, %v2907
  %v3184 = vpack.c.b16 %v2916, %v2912
  %v3185 = vpack.c.b16 %v2917, %v2913
  %v3186 = vpack.c.b16 %v2918, %v2914
  %v3187 = vpack.c.b16 %v2919, %v2915
  %v3188 = vpack.c.b16 %v2924, %v2920
  %v3189 = vpack.c.b16 %v2925, %v2921
  %v3190 = vpack.c.b16 %v2926, %v2922
  %v3191 = vpack.c.b16 %v2927, %v2923
  %v3192 = vpack.c.b16 %v2932, %v2928
  %v3193 = vpack.c.b16 %v2933, %v2929
  %v3194 = vpack.c.b16 %v2934, %v2930
  %v3195 = vpack.c.b16 %v2935, %v2931
  %v3196 = vpack.c.b16 %v2940, %v2936
  %v3197 = vpack.c.b16 %v2941, %v2937
  %v3198 = vpack.c.b16 %v2942, %v2938
  %v3199 = vpack.c.b16 %v2943, %v2939
  %v3200 = vpack.c.b16 %v2948, %v2944
  %v3201 = vpack.c.b16 %v2949, %v2945
  %v3202 = vpack.c.b16 %v2950, %v2946
  %v3203 = vpack.c.b16 %v2951, %v2947
  %v3204 = vpack.c.b16 %v2956, %v2952
  %v3205 = vpack.c.b16 %v2957, %v2953
  %v3206 = vpack.c.b16 %v2958, %v2954
  %v3207 = vpack.c.b16 %v2959, %v2955
  %v3208 = vpack.c.b16 %v2964, %v2960
  %v3209 = vpack.c.b16 %v2965, %v2961
  %v3210 = vpack.c.b16 %v2966, %v2962
  %v3211 = vpack.c.b16 %v2967, %v2963
  %v3212 = vpack.c.b16 %v2972, %v2968
  %v3213 = vpack.c.b16 %v2973, %v2969
  %v3214 = vpack.c.b16 %v2974, %v2970
  %v3215 = vpack.c.b16 %v2975, %v2971
  %v3216 = vpack.c.b16 %v2980, %v2976
  %v3217 = vpack.c.b16 %v2981, %v2977
  %v3218 = vpack.c.b16 %v2982, %v2978
  %v3219 = vpack.c.b16 %v2983, %v2979
  %v3220 = vpack.c.b16 %v2988, %v2984
  %v3221 = vpack.c.b16 %v2989, %v2985
  %v3222 = vpack.c.b16 %v2990, %v2986
  %v3223 = vpack.c.b16 %v2991, %v2987
  %v3224 = vpack.c.b16 %v2996, %v2992
  %v3225 = vpack.c.b16 %v2997, %v2993
  %v3226 = vpack.c.b16 %v2998, %v2994
  %v3227 = vpack.c.b16 %v2999, %v2995
  %v3228 = vpack.c.b16 %v3004, %v3000
  %v3229 = vpack.c.b16 %v3005, %v3001
  %v3230 = vpack.c.b16 %v3006, %v3002
  %v3231 = vpack.c.b16 %v3007, %v3003
  %v3232 = vpack.c.b16 %v3012, %v3008
  %v3233 = vpack.c.b16 %v3013, %v3009
  %v3234 = vpack.c.b16 %v3014, %v3010
  %v3235 = vpack.c.b16 %v3015, %v3011
  %v3236 = vpack.c.b16 %v3020, %v3016
  %v3237 = vpack.c.b16 %v3021, %v3017
  %v3238 = vpack.c.b16 %v3022, %v3018
  %v3239 = vpack.c.b16 %v3023, %v3019
  %v3240 = vpack.c.b16 %v3028, %v3024
  %v3241 = vpack.c.b16 %v3029, %v3025
  %v3242 = vpack.c.b16 %v3030, %v3026
  %v3243 = vpack.c.b16 %v3031, %v3027
  %v3244 = vpack.c.b16 %v3036, %v3032
  %v3245 = vpack.c.b16 %v3037, %v3033
  %v3246 = vpack.c.b16 %v3038, %v3034
  %v3247 = vpack.c.b16 %v3039, %v3035
  %v3248 = vpack.c.b16 %v3044, %v3040
  %v3249 = vpack.c.b16 %v3045, %v3041
  %v3250 = vpack.c.b16 %v3046, %v3042
  %v3251 = vpack.c.b16 %v3047, %v3043
  %v3252 = vpack.c.b16 %v3052, %v3048
  %v3253 = vpack.c.b16 %v3053, %v3049
  %v3254 = vpack.c.b16 %v3054, %v3050
  %v3255 = vpack.c.b16 %v3055, %v3051
  %v3256 = vpack.c.b16 %v3060, %v3056
  %v3257 = vpack.c.b16 %v3061, %v3057
  %v3258 = vpack.c.b16 %v3062, %v3058
  %v3259 = vpack.c.b16 %v3063, %v3059
  %v3260 = vpack.c.b16 %v3068, %v3064
  %v3261 = vpack.c.b16 %v3069, %v3065
  %v3262 = vpack.c.b16 %v3070, %v3066
  %v3263 = vpack.c.b16 %v3071, %v3067
  %v3264 = vpack.c.b16 %v3076, %v3072
  %v3265 = vpack.c.b16 %v3077, %v3073
  %v3266 = vpack.c.b16 %v3078, %v3074
  %v3267 = vpack.c.b16 %v3079, %v3075
  %v3268 = vpack.c.b16 %v3084, %v3080
  %v3269 = vpack.c.b16 %v3085, %v3081
  %v3270 = vpack.c.b16 %v3086, %v3082
  %v3271 = vpack.c.b16 %v3087, %v3083
  %v3272 = vpack.c.b16 %v3092, %v3088
  %v3273 = vpack.c.b16 %v3093, %v3089
  %v3274 = vpack.c.b16 %v3094, %v3090
  %v3275 = vpack.c.b16 %v3095, %v3091
  %v3276 = vpack.c.b16 %v3100, %v3096
  %v3277 = vpack.c.b16 %v3101, %v3097
  %v3278 = vpack.c.b16 %v3102, %v3098
  %v3279 = vpack.c.b16 %v3103, %v3099
  %v3280 = vpack.c.b16 %v3108, %v3104
  %v3281 = vpack.c.b16 %v3109, %v3105
  %v3282 = vpack.c.b16 %v3110, %v3106
  %v3283 = vpack.c.b16 %v3111, %v3107
  %v3284 = vpack.c.b16 %v3116, %v3112
  %v3285 = vpack.c.b16 %v3117, %v3113
  %v3286 = vpack.c.b16 %v3118, %v3114
  %v3287 = vpack.c.b16 %v3119, %v3115
  %v3457 = vsel %vm985, %v2577, 0
  %v3460 = vsel %vm985, %v2583, 0
  %v3463 = vsel %vm985, %v2589, 0
  %v3466 = vsel %vm985, %v2595, 0
  %3468 = vmatprep.subr.bf16.mxu0 %v3121
  %3469 = vmatpush1.bf16.msra.mxu0 %v3120
  %3470 = vmatprep.subr.bf16.mxu0 %v3125
  %3471 = vmatpush1.bf16.msra.mxu0 %v3124
  %3472 = vmatprep.subr.bf16.mxu0 %v3129
  %3473 = vmatpush1.bf16.msra.mxu0 %v3128
  %3474 = vmatprep.subr.bf16.mxu0 %v3133
  %3475 = vmatpush1.bf16.msra.mxu0 %v3132
  %3476 = vmatprep.subr.bf16.mxu0 %v3137
  %3477 = vmatpush1.bf16.msra.mxu0 %v3136
  %3478 = vmatprep.subr.bf16.mxu0 %v3141
  %3479 = vmatpush1.bf16.msra.mxu0 %v3140
  %3480 = vmatprep.subr.bf16.mxu0 %v3145
  %3481 = vmatpush1.bf16.msra.mxu0 %v3144
  %3482 = vmatprep.subr.bf16.mxu0 %v3149
  %3483 = vmatpush1.bf16.msra.mxu0 %v3148
  %3484 = vmatprep.subr.bf16.mxu0 %v3153
  %3485 = vmatpush1.bf16.msra.mxu0 %v3152
  %3486 = vmatprep.subr.bf16.mxu0 %v3157
  %3487 = vmatpush1.bf16.msra.mxu0 %v3156
  %3488 = vmatprep.subr.bf16.mxu0 %v3161
  %3489 = vmatpush1.bf16.msra.mxu0 %v3160
  %3490 = vmatprep.subr.bf16.mxu0 %v3165
  %3491 = vmatpush1.bf16.msra.mxu0 %v3164
  %3492 = vmatprep.subr.bf16.mxu0 %v3169
  %3493 = vmatpush1.bf16.msra.mxu0 %v3168
  %3494 = vmatprep.subr.bf16.mxu0 %v3173
  %3495 = vmatpush1.bf16.msra.mxu0 %v3172
  %3496 = vmatprep.subr.bf16.mxu0 %v3177
  %3497 = vmatpush1.bf16.msra.mxu0 %v3176
  %3498 = vmatprep.subr.bf16.mxu0 %v3181
  %3499 = vmatpush1.bf16.msra.mxu0 %v3180
  %3500 = vmatprep.mubr.bf16.mxu0 %v2573
  %3501 = vmatmul.mubr.bf16.gmra.mrb[0].mxu0 %v2572
  %v3502 = vpop.f32.mrb[0].mxu0
  %v3503 = vadd.f32 0.0, %v3502
  %v3504 = vpop.f32.mrb[0].mxu0
  %v3505 = vadd.f32 0.0, %v3504
  %v3506 = vpop.f32.mrb[0].mxu0
  %v3507 = vadd.f32 0.0, %v3506
  %v3508 = vpop.f32.mrb[0].mxu0
  %v3509 = vadd.f32 0.0, %v3508
  %3510 = vmatprep.mubr.bf16.mxu0 %v2579
  %3511 = vmatmul.mubr.bf16.gmra.mrb[0].mxu0 %v2578
  %v3512 = vpop.f32.mrb[0].mxu0
  %v3513 = vadd.f32 0.0, %v3512
  %v3514 = vpop.f32.mrb[0].mxu0
  %v3515 = vadd.f32 0.0, %v3514
  %v3516 = vpop.f32.mrb[0].mxu0
  %v3517 = vadd.f32 0.0, %v3516
  %v3518 = vpop.f32.mrb[0].mxu0
  %v3519 = vadd.f32 0.0, %v3518
  %3520 = vmatprep.mubr.bf16.mxu0 %v2585
  %3521 = vmatmul.mubr.bf16.gmra.mrb[0].mxu0 %v2584
  %v3522 = vpop.f32.mrb[0].mxu0
  %v3523 = vadd.f32 0.0, %v3522
  %v3524 = vpop.f32.mrb[0].mxu0
  %v3525 = vadd.f32 0.0, %v3524
  %v3526 = vpop.f32.mrb[0].mxu0
  %v3527 = vadd.f32 0.0, %v3526
  %v3528 = vpop.f32.mrb[0].mxu0
  %v3529 = vadd.f32 0.0, %v3528
  %3530 = vmatprep.mubr.bf16.mxu0 %v2591
  %3531 = vmatmul.mubr.bf16.gmra.mrb[0].mxu0 %v2590
  %v3532 = vpop.f32.mrb[0].mxu0
  %v3533 = vadd.f32 0.0, %v3532
  %v3534 = vpop.f32.mrb[0].mxu0
  %v3535 = vadd.f32 0.0, %v3534
  %v3536 = vpop.f32.mrb[0].mxu0
  %v3537 = vadd.f32 0.0, %v3536
  %v3538 = vpop.f32.mrb[0].mxu0
  %v3539 = vadd.f32 0.0, %v3538
  %3540 = vdwg.mxu0
  %3541 = vmatprep.subr.bf16.mxu0 %v3185
  %3542 = vmatpush1.bf16.msra.mxu0 %v3184
  %3543 = vmatprep.subr.bf16.mxu0 %v3189
  %3544 = vmatpush1.bf16.msra.mxu0 %v3188
  %3545 = vmatprep.subr.bf16.mxu0 %v3193
  %3546 = vmatpush1.bf16.msra.mxu0 %v3192
  %3547 = vmatprep.subr.bf16.mxu0 %v3197
  %3548 = vmatpush1.bf16.msra.mxu0 %v3196
  %3549 = vmatprep.subr.bf16.mxu0 %v3201
  %3550 = vmatpush1.bf16.msra.mxu0 %v3200
  %3551 = vmatprep.subr.bf16.mxu0 %v3205
  %3552 = vmatpush1.bf16.msra.mxu0 %v3204
  %3553 = vmatprep.subr.bf16.mxu0 %v3209
  %3554 = vmatpush1.bf16.msra.mxu0 %v3208
  %3555 = vmatprep.subr.bf16.mxu0 %v3213
  %3556 = vmatpush1.bf16.msra.mxu0 %v3212
  %3557 = vmatprep.subr.bf16.mxu0 %v3217
  %3558 = vmatpush1.bf16.msra.mxu0 %v3216
  %3559 = vmatprep.subr.bf16.mxu0 %v3221
  %3560 = vmatpush1.bf16.msra.mxu0 %v3220
  %3561 = vmatprep.subr.bf16.mxu0 %v3225
  %3562 = vmatpush1.bf16.msra.mxu0 %v3224
  %3563 = vmatprep.subr.bf16.mxu0 %v3229
  %3564 = vmatpush1.bf16.msra.mxu0 %v3228
  %3565 = vmatprep.subr.bf16.mxu0 %v3233
  %3566 = vmatpush1.bf16.msra.mxu0 %v3232
  %3567 = vmatprep.subr.bf16.mxu0 %v3237
  %3568 = vmatpush1.bf16.msra.mxu0 %v3236
  %3569 = vmatprep.subr.bf16.mxu0 %v3241
  %3570 = vmatpush1.bf16.msra.mxu0 %v3240
  %3571 = vmatprep.subr.bf16.mxu0 %v3245
  %3572 = vmatpush1.bf16.msra.mxu0 %v3244
  %3573 = vmatprep.mubr.bf16.mxu0 %v2575
  %3574 = vmatmul.mubr.bf16.gmra.mrb[0].mxu0 %v2574
  %v3575 = vpop.f32.mrb[0].mxu0
  %v3576 = vadd.f32 %v3503, %v3575
  %v3577 = vpop.f32.mrb[0].mxu0
  %v3578 = vadd.f32 %v3505, %v3577
  %v3579 = vpop.f32.mrb[0].mxu0
  %v3580 = vadd.f32 %v3507, %v3579
  %v3581 = vpop.f32.mrb[0].mxu0
  %v3582 = vadd.f32 %v3509, %v3581
  %3583 = vmatprep.mubr.bf16.mxu0 %v2581
  %3584 = vmatmul.mubr.bf16.gmra.mrb[0].mxu0 %v2580
  %v3585 = vpop.f32.mrb[0].mxu0
  %v3586 = vadd.f32 %v3513, %v3585
  %v3587 = vpop.f32.mrb[0].mxu0
  %v3588 = vadd.f32 %v3515, %v3587
  %v3589 = vpop.f32.mrb[0].mxu0
  %v3590 = vadd.f32 %v3517, %v3589
  %v3591 = vpop.f32.mrb[0].mxu0
  %v3592 = vadd.f32 %v3519, %v3591
  %3593 = vmatprep.mubr.bf16.mxu0 %v2587
  %3594 = vmatmul.mubr.bf16.gmra.mrb[0].mxu0 %v2586
  %v3595 = vpop.f32.mrb[0].mxu0
  %v3596 = vadd.f32 %v3523, %v3595
  %v3597 = vpop.f32.mrb[0].mxu0
  %v3598 = vadd.f32 %v3525, %v3597
  %v3599 = vpop.f32.mrb[0].mxu0
  %v3600 = vadd.f32 %v3527, %v3599
  %v3601 = vpop.f32.mrb[0].mxu0
  %v3602 = vadd.f32 %v3529, %v3601
  %3603 = vmatprep.mubr.bf16.mxu0 %v2593
  %3604 = vmatmul.mubr.bf16.gmra.mrb[0].mxu0 %v2592
  %v3605 = vpop.f32.mrb[0].mxu0
  %v3606 = vadd.f32 %v3533, %v3605
  %v3607 = vpop.f32.mrb[0].mxu0
  %v3608 = vadd.f32 %v3535, %v3607
  %v3609 = vpop.f32.mrb[0].mxu0
  %v3610 = vadd.f32 %v3537, %v3609
  %v3611 = vpop.f32.mrb[0].mxu0
  %v3612 = vadd.f32 %v3539, %v3611
  %3613 = vdwg.mxu0
  %3614 = vmatprep.subr.bf16.mxu0 %v3249
  %3615 = vmatpush1.bf16.msra.mxu0 %v3248
  %3616 = vmatprep.subr.bf16.mxu0 %v3253
  %3617 = vmatpush1.bf16.msra.mxu0 %v3252
  %3618 = vmatprep.subr.bf16.mxu0 %v3257
  %3619 = vmatpush1.bf16.msra.mxu0 %v3256
  %3620 = vmatprep.subr.bf16.mxu0 %v3261
  %3621 = vmatpush1.bf16.msra.mxu0 %v3260
  %3622 = vmatprep.subr.bf16.mxu0 %v3265
  %3623 = vmatpush1.bf16.msra.mxu0 %v3264
  %3624 = vmatprep.subr.bf16.mxu0 %v3269
  %3625 = vmatpush1.bf16.msra.mxu0 %v3268
  %3626 = vmatprep.subr.bf16.mxu0 %v3273
  %3627 = vmatpush1.bf16.msra.mxu0 %v3272
  %3628 = vmatprep.subr.bf16.mxu0 %v3277
  %3629 = vmatpush1.bf16.msra.mxu0 %v3276
  %3630 = vmatprep.subr.bf16.mxu0 %v3281
  %3631 = vmatpush1.bf16.msra.mxu0 %v3280
  %3632 = vmatprep.subr.bf16.mxu0 %v3285
  %3633 = vmatpush1.bf16.msra.mxu0 %v3284
  %3634 = vmatprep.subr.bf16.mxu0 0
  %3635 = vmatpush1.bf16.msra.mxu0 0
  %3636 = vmatprep.subr.bf16.mxu0 0
  %3637 = vmatpush1.bf16.msra.mxu0 0
  %3638 = vmatprep.subr.bf16.mxu0 0
  %3639 = vmatpush1.bf16.msra.mxu0 0
  %3640 = vmatprep.subr.bf16.mxu0 0
  %3641 = vmatpush1.bf16.msra.mxu0 0
  %3642 = vmatprep.subr.bf16.mxu0 0
  %3643 = vmatpush1.bf16.msra.mxu0 0
  %3644 = vmatprep.subr.bf16.mxu0 0
  %3645 = vmatpush1.bf16.msra.mxu0 0
  %3646 = vmatprep.mubr.bf16.mxu0 %v3457
  %3647 = vmatmul.mubr.bf16.gmra.mrb[0].mxu0 %v2576
  %v3648 = vpop.f32.mrb[0].mxu0
  %v3649 = vadd.f32 %v3576, %v3648
  %v3650 = vpop.f32.mrb[0].mxu0
  %v3651 = vadd.f32 %v3578, %v3650
  %v3652 = vpop.f32.mrb[0].mxu0
  %v3653 = vadd.f32 %v3580, %v3652
  %v3654 = vpop.f32.mrb[0].mxu0
  %v3655 = vadd.f32 %v3582, %v3654
  %3656 = vmatprep.mubr.bf16.mxu0 %v3460
  %3657 = vmatmul.mubr.bf16.gmra.mrb[0].mxu0 %v2582
  %v3658 = vpop.f32.mrb[0].mxu0
  %v3659 = vadd.f32 %v3586, %v3658
  %v3660 = vpop.f32.mrb[0].mxu0
  %v3661 = vadd.f32 %v3588, %v3660
  %v3662 = vpop.f32.mrb[0].mxu0
  %v3663 = vadd.f32 %v3590, %v3662
  %v3664 = vpop.f32.mrb[0].mxu0
  %v3665 = vadd.f32 %v3592, %v3664
  %3666 = vmatprep.mubr.bf16.mxu0 %v3463
  %3667 = vmatmul.mubr.bf16.gmra.mrb[0].mxu0 %v2588
  %v3668 = vpop.f32.mrb[0].mxu0
  %v3669 = vadd.f32 %v3596, %v3668
  %v3670 = vpop.f32.mrb[0].mxu0
  %v3671 = vadd.f32 %v3598, %v3670
  %v3672 = vpop.f32.mrb[0].mxu0
  %v3673 = vadd.f32 %v3600, %v3672
  %v3674 = vpop.f32.mrb[0].mxu0
  %v3675 = vadd.f32 %v3602, %v3674
  %3676 = vmatprep.mubr.bf16.mxu0 %v3466
  %3677 = vmatmul.mubr.bf16.gmra.mrb[0].mxu0 %v2594
  %v3678 = vpop.f32.mrb[0].mxu0
  %v3679 = vadd.f32 %v3606, %v3678
  %v3680 = vpop.f32.mrb[0].mxu0
  %v3681 = vadd.f32 %v3608, %v3680
  %v3682 = vpop.f32.mrb[0].mxu0
  %v3683 = vadd.f32 %v3610, %v3682
  %v3684 = vpop.f32.mrb[0].mxu0
  %v3685 = vadd.f32 %v3612, %v3684
  %3686 = vdwg.mxu0
  %3687 = vmatprep.subr.bf16.mxu0 %v3123
  %3688 = vmatpush1.bf16.msra.mxu0 %v3122
  %3689 = vmatprep.subr.bf16.mxu0 %v3127
  %3690 = vmatpush1.bf16.msra.mxu0 %v3126
  %3691 = vmatprep.subr.bf16.mxu0 %v3131
  %3692 = vmatpush1.bf16.msra.mxu0 %v3130
  %3693 = vmatprep.subr.bf16.mxu0 %v3135
  %3694 = vmatpush1.bf16.msra.mxu0 %v3134
  %3695 = vmatprep.subr.bf16.mxu0 %v3139
  %3696 = vmatpush1.bf16.msra.mxu0 %v3138
  %3697 = vmatprep.subr.bf16.mxu0 %v3143
  %3698 = vmatpush1.bf16.msra.mxu0 %v3142
  %3699 = vmatprep.subr.bf16.mxu0 %v3147
  %3700 = vmatpush1.bf16.msra.mxu0 %v3146
  %3701 = vmatprep.subr.bf16.mxu0 %v3151
  %3702 = vmatpush1.bf16.msra.mxu0 %v3150
  %3703 = vmatprep.subr.bf16.mxu0 %v3155
  %3704 = vmatpush1.bf16.msra.mxu0 %v3154
  %3705 = vmatprep.subr.bf16.mxu0 %v3159
  %3706 = vmatpush1.bf16.msra.mxu0 %v3158
  %3707 = vmatprep.subr.bf16.mxu0 %v3163
  %3708 = vmatpush1.bf16.msra.mxu0 %v3162
  %3709 = vmatprep.subr.bf16.mxu0 %v3167
  %3710 = vmatpush1.bf16.msra.mxu0 %v3166
  %3711 = vmatprep.subr.bf16.mxu0 %v3171
  %3712 = vmatpush1.bf16.msra.mxu0 %v3170
  %3713 = vmatprep.subr.bf16.mxu0 %v3175
  %3714 = vmatpush1.bf16.msra.mxu0 %v3174
  %3715 = vmatprep.subr.bf16.mxu0 %v3179
  %3716 = vmatpush1.bf16.msra.mxu0 %v3178
  %3717 = vmatprep.subr.bf16.mxu0 %v3183
  %3718 = vmatpush1.bf16.msra.mxu0 %v3182
  %3719 = vmatprep.mubr.bf16.mxu0 %v2573
  %3720 = vmatmul.mubr.bf16.gmra.mrb[0].mxu0 %v2572
  %v3721 = vpop.f32.mrb[0].mxu0
  %v3722 = vadd.f32 0.0, %v3721
  %v3723 = vpop.f32.mrb[0].mxu0
  %v3724 = vadd.f32 0.0, %v3723
  %v3725 = vpop.f32.mrb[0].mxu0
  %v3726 = vadd.f32 0.0, %v3725
  %v3727 = vpop.f32.mrb[0].mxu0
  %v3728 = vadd.f32 0.0, %v3727
  %3729 = vmatprep.mubr.bf16.mxu0 %v2579
  %3730 = vmatmul.mubr.bf16.gmra.mrb[0].mxu0 %v2578
  %v3731 = vpop.f32.mrb[0].mxu0
  %v3732 = vadd.f32 0.0, %v3731
  %v3733 = vpop.f32.mrb[0].mxu0
  %v3734 = vadd.f32 0.0, %v3733
  %v3735 = vpop.f32.mrb[0].mxu0
  %v3736 = vadd.f32 0.0, %v3735
  %v3737 = vpop.f32.mrb[0].mxu0
  %v3738 = vadd.f32 0.0, %v3737
  %3739 = vmatprep.mubr.bf16.mxu0 %v2585
  %3740 = vmatmul.mubr.bf16.gmra.mrb[0].mxu0 %v2584
  %v3741 = vpop.f32.mrb[0].mxu0
  %v3742 = vadd.f32 0.0, %v3741
  %v3743 = vpop.f32.mrb[0].mxu0
  %v3744 = vadd.f32 0.0, %v3743
  %v3745 = vpop.f32.mrb[0].mxu0
  %v3746 = vadd.f32 0.0, %v3745
  %v3747 = vpop.f32.mrb[0].mxu0
  %v3748 = vadd.f32 0.0, %v3747
  %3749 = vmatprep.mubr.bf16.mxu0 %v2591
  %3750 = vmatmul.mubr.bf16.gmra.mrb[0].mxu0 %v2590
  %v3751 = vpop.f32.mrb[0].mxu0
  %v3752 = vadd.f32 0.0, %v3751
  %v3753 = vpop.f32.mrb[0].mxu0
  %v3754 = vadd.f32 0.0, %v3753
  %v3755 = vpop.f32.mrb[0].mxu0
  %v3756 = vadd.f32 0.0, %v3755
  %v3757 = vpop.f32.mrb[0].mxu0
  %v3758 = vadd.f32 0.0, %v3757
  %3759 = vdwg.mxu0
  %3760 = vmatprep.subr.bf16.mxu0 %v3187
  %3761 = vmatpush1.bf16.msra.mxu0 %v3186
  %3762 = vmatprep.subr.bf16.mxu0 %v3191
  %3763 = vmatpush1.bf16.msra.mxu0 %v3190
  %3764 = vmatprep.subr.bf16.mxu0 %v3195
  %3765 = vmatpush1.bf16.msra.mxu0 %v3194
  %3766 = vmatprep.subr.bf16.mxu0 %v3199
  %3767 = vmatpush1.bf16.msra.mxu0 %v3198
  %3768 = vmatprep.subr.bf16.mxu0 %v3203
  %3769 = vmatpush1.bf16.msra.mxu0 %v3202
  %3770 = vmatprep.subr.bf16.mxu0 %v3207
  %3771 = vmatpush1.bf16.msra.mxu0 %v3206
  %3772 = vmatprep.subr.bf16.mxu0 %v3211
  %3773 = vmatpush1.bf16.msra.mxu0 %v3210
  %3774 = vmatprep.subr.bf16.mxu0 %v3215
  %3775 = vmatpush1.bf16.msra.mxu0 %v3214
  %3776 = vmatprep.subr.bf16.mxu0 %v3219
  %3777 = vmatpush1.bf16.msra.mxu0 %v3218
  %3778 = vmatprep.subr.bf16.mxu0 %v3223
  %3779 = vmatpush1.bf16.msra.mxu0 %v3222
  %3780 = vmatprep.subr.bf16.mxu0 %v3227
  %3781 = vmatpush1.bf16.msra.mxu0 %v3226
  %3782 = vmatprep.subr.bf16.mxu0 %v3231
  %3783 = vmatpush1.bf16.msra.mxu0 %v3230
  %3784 = vmatprep.subr.bf16.mxu0 %v3235
  %3785 = vmatpush1.bf16.msra.mxu0 %v3234
  %3786 = vmatprep.subr.bf16.mxu0 %v3239
  %3787 = vmatpush1.bf16.msra.mxu0 %v3238
  %3788 = vmatprep.subr.bf16.mxu0 %v3243
  %3789 = vmatpush1.bf16.msra.mxu0 %v3242
  %3790 = vmatprep.subr.bf16.mxu0 %v3247
  %3791 = vmatpush1.bf16.msra.mxu0 %v3246
  %3792 = vmatprep.mubr.bf16.mxu0 %v2575
  %3793 = vmatmul.mubr.bf16.gmra.mrb[0].mxu0 %v2574
  %v3794 = vpop.f32.mrb[0].mxu0
  %v3795 = vadd.f32 %v3722, %v3794
  %v3796 = vpop.f32.mrb[0].mxu0
  %v3797 = vadd.f32 %v3724, %v3796
  %v3798 = vpop.f32.mrb[0].mxu0
  %v3799 = vadd.f32 %v3726, %v3798
  %v3800 = vpop.f32.mrb[0].mxu0
  %v3801 = vadd.f32 %v3728, %v3800
  %3802 = vmatprep.mubr.bf16.mxu0 %v2581
  %3803 = vmatmul.mubr.bf16.gmra.mrb[0].mxu0 %v2580
  %v3804 = vpop.f32.mrb[0].mxu0
  %v3805 = vadd.f32 %v3732, %v3804
  %v3806 = vpop.f32.mrb[0].mxu0
  %v3807 = vadd.f32 %v3734, %v3806
  %v3808 = vpop.f32.mrb[0].mxu0
  %v3809 = vadd.f32 %v3736, %v3808
  %v3810 = vpop.f32.mrb[0].mxu0
  %v3811 = vadd.f32 %v3738, %v3810
  %3812 = vmatprep.mubr.bf16.mxu0 %v2587
  %3813 = vmatmul.mubr.bf16.gmra.mrb[0].mxu0 %v2586
  %v3814 = vpop.f32.mrb[0].mxu0
  %v3815 = vadd.f32 %v3742, %v3814
  %v3816 = vpop.f32.mrb[0].mxu0
  %v3817 = vadd.f32 %v3744, %v3816
  %v3818 = vpop.f32.mrb[0].mxu0
  %v3819 = vadd.f32 %v3746, %v3818
  %v3820 = vpop.f32.mrb[0].mxu0
  %v3821 = vadd.f32 %v3748, %v3820
  %3822 = vmatprep.mubr.bf16.mxu0 %v2593
  %3823 = vmatmul.mubr.bf16.gmra.mrb[0].mxu0 %v2592
  %v3824 = vpop.f32.mrb[0].mxu0
  %v3825 = vadd.f32 %v3752, %v3824
  %v3826 = vpop.f32.mrb[0].mxu0
  %v3827 = vadd.f32 %v3754, %v3826
  %v3828 = vpop.f32.mrb[0].mxu0
  %v3829 = vadd.f32 %v3756, %v3828
  %v3830 = vpop.f32.mrb[0].mxu0
  %v3831 = vadd.f32 %v3758, %v3830
  %3832 = vdwg.mxu0
  %3833 = vmatprep.subr.bf16.mxu0 %v3251
  %3834 = vmatpush1.bf16.msra.mxu0 %v3250
  %3835 = vmatprep.subr.bf16.mxu0 %v3255
  %3836 = vmatpush1.bf16.msra.mxu0 %v3254
  %3837 = vmatprep.subr.bf16.mxu0 %v3259
  %3838 = vmatpush1.bf16.msra.mxu0 %v3258
  %3839 = vmatprep.subr.bf16.mxu0 %v3263
  %3840 = vmatpush1.bf16.msra.mxu0 %v3262
  %3841 = vmatprep.subr.bf16.mxu0 %v3267
  %3842 = vmatpush1.bf16.msra.mxu0 %v3266
  %3843 = vmatprep.subr.bf16.mxu0 %v3271
  %3844 = vmatpush1.bf16.msra.mxu0 %v3270
  %3845 = vmatprep.subr.bf16.mxu0 %v3275
  %3846 = vmatpush1.bf16.msra.mxu0 %v3274
  %3847 = vmatprep.subr.bf16.mxu0 %v3279
  %3848 = vmatpush1.bf16.msra.mxu0 %v3278
  %3849 = vmatprep.subr.bf16.mxu0 %v3283
  %3850 = vmatpush1.bf16.msra.mxu0 %v3282
  %3851 = vmatprep.subr.bf16.mxu0 %v3287
  %3852 = vmatpush1.bf16.msra.mxu0 %v3286
  %3853 = vmatprep.subr.bf16.mxu0 0
  %3854 = vmatpush1.bf16.msra.mxu0 0
  %3855 = vmatprep.subr.bf16.mxu0 0
  %3856 = vmatpush1.bf16.msra.mxu0 0
  %3857 = vmatprep.subr.bf16.mxu0 0
  %3858 = vmatpush1.bf16.msra.mxu0 0
  %3859 = vmatprep.subr.bf16.mxu0 0
  %3860 = vmatpush1.bf16.msra.mxu0 0
  %3861 = vmatprep.subr.bf16.mxu0 0
  %3862 = vmatpush1.bf16.msra.mxu0 0
  %3863 = vmatprep.subr.bf16.mxu0 0
  %3864 = vmatpush1.bf16.msra.mxu0 0
  %3865 = vmatprep.mubr.bf16.mxu0 %v3457
  %3866 = vmatmul.mubr.bf16.gmra.mrb[0].mxu0 %v2576
  %v3867 = vpop.f32.mrb[0].mxu0
  %v3868 = vadd.f32 %v3795, %v3867
  %v3869 = vpop.f32.mrb[0].mxu0
  %v3870 = vadd.f32 %v3797, %v3869
  %v3871 = vpop.f32.mrb[0].mxu0
  %v3872 = vadd.f32 %v3799, %v3871
  %v3873 = vpop.f32.mrb[0].mxu0
  %v3874 = vadd.f32 %v3801, %v3873
  %3875 = vmatprep.mubr.bf16.mxu0 %v3460
  %3876 = vmatmul.mubr.bf16.gmra.mrb[0].mxu0 %v2582
  %v3877 = vpop.f32.mrb[0].mxu0
  %v3878 = vadd.f32 %v3805, %v3877
  %v3879 = vpop.f32.mrb[0].mxu0
  %v3880 = vadd.f32 %v3807, %v3879
  %v3881 = vpop.f32.mrb[0].mxu0
  %v3882 = vadd.f32 %v3809, %v3881
  %v3883 = vpop.f32.mrb[0].mxu0
  %v3884 = vadd.f32 %v3811, %v3883
  %3885 = vmatprep.mubr.bf16.mxu0 %v3463
  %3886 = vmatmul.mubr.bf16.gmra.mrb[0].mxu0 %v2588
  %v3887 = vpop.f32.mrb[0].mxu0
  %v3888 = vadd.f32 %v3815, %v3887
  %v3889 = vpop.f32.mrb[0].mxu0
  %v3890 = vadd.f32 %v3817, %v3889
  %v3891 = vpop.f32.mrb[0].mxu0
  %v3892 = vadd.f32 %v3819, %v3891
  %v3893 = vpop.f32.mrb[0].mxu0
  %v3894 = vadd.f32 %v3821, %v3893
  %3895 = vmatprep.mubr.bf16.mxu0 %v3466
  %3896 = vmatmul.mubr.bf16.gmra.mrb[0].mxu0 %v2594
  %v3897 = vpop.f32.mrb[0].mxu0
  %v3898 = vadd.f32 %v3825, %v3897
  %v3899 = vpop.f32.mrb[0].mxu0
  %v3900 = vadd.f32 %v3827, %v3899
  %v3901 = vpop.f32.mrb[0].mxu0
  %v3902 = vadd.f32 %v3829, %v3901
  %v3903 = vpop.f32.mrb[0].mxu0
  %v3904 = vadd.f32 %v3831, %v3903
  %3905 = vdwg.mxu0
  %3922 = vrot.lane.b32.xlu0 %v3649, 16
  %v3923 = vpop.permute.xlu0 %3922
  %3924 = vrot.lane.b32.xlu0 %v3651, 16
  %v3925 = vpop.permute.xlu0 %3924
  %3926 = vrot.lane.b32.xlu0 %v3653, 16
  %v3927 = vpop.permute.xlu0 %3926
  %3928 = vrot.lane.b32.xlu0 %v3655, 16
  %v3929 = vpop.permute.xlu0 %3928
  %3930 = vrot.lane.b32.xlu0 %v3659, 16
  %v3931 = vpop.permute.xlu0 %3930
  %3932 = vrot.lane.b32.xlu0 %v3661, 16
  %v3933 = vpop.permute.xlu0 %3932
  %3934 = vrot.lane.b32.xlu0 %v3663, 16
  %v3935 = vpop.permute.xlu0 %3934
  %3936 = vrot.lane.b32.xlu0 %v3665, 16
  %v3937 = vpop.permute.xlu0 %3936
  %3938 = vrot.lane.b32.xlu0 %v3669, 16
  %v3939 = vpop.permute.xlu0 %3938
  %3940 = vrot.lane.b32.xlu0 %v3671, 16
  %v3941 = vpop.permute.xlu0 %3940
  %3942 = vrot.lane.b32.xlu0 %v3673, 16
  %v3943 = vpop.permute.xlu0 %3942
  %3944 = vrot.lane.b32.xlu0 %v3675, 16
  %v3945 = vpop.permute.xlu0 %3944
  %3946 = vrot.lane.b32.xlu0 %v3679, 16
  %v3947 = vpop.permute.xlu0 %3946
  %3948 = vrot.lane.b32.xlu0 %v3681, 16
  %v3949 = vpop.permute.xlu0 %3948
  %3950 = vrot.lane.b32.xlu0 %v3683, 16
  %v3951 = vpop.permute.xlu0 %3950
  %3952 = vrot.lane.b32.xlu0 %v3685, 16
  %v3953 = vpop.permute.xlu0 %3952
  %v3954 = vsel %vm824, %v3923, %v3925
  %v3955 = vsel %vm824, %v3927, %v3929
  %v3956 = vsel %vm824, %v3931, %v3933
  %v3957 = vsel %vm824, %v3935, %v3937
  %v3958 = vsel %vm824, %v3939, %v3941
  %v3959 = vsel %vm824, %v3943, %v3945
  %v3960 = vsel %vm824, %v3947, %v3949
  %v3961 = vsel %vm824, %v3951, %v3953
  %v3970 = vmax.f32 %v3649, %v3954
  %v3971 = vmax.f32 %v3653, %v3955
  %v3972 = vmax.f32 %v3659, %v3956
  %v3973 = vmax.f32 %v3663, %v3957
  %v3974 = vmax.f32 %v3669, %v3958
  %v3975 = vmax.f32 %v3673, %v3959
  %v3976 = vmax.f32 %v3679, %v3960
  %v3977 = vmax.f32 %v3683, %v3961
  %3994 = vrot.lane.b32.xlu0 %v3868, 16
  %v3995 = vpop.permute.xlu0 %3994
  %3996 = vrot.lane.b32.xlu0 %v3870, 16
  %v3997 = vpop.permute.xlu0 %3996
  %3998 = vrot.lane.b32.xlu0 %v3872, 16
  %v3999 = vpop.permute.xlu0 %3998
  %4000 = vrot.lane.b32.xlu0 %v3874, 16
  %v4001 = vpop.permute.xlu0 %4000
  %4002 = vrot.lane.b32.xlu0 %v3878, 16
  %v4003 = vpop.permute.xlu0 %4002
  %4004 = vrot.lane.b32.xlu0 %v3880, 16
  %v4005 = vpop.permute.xlu0 %4004
  %4006 = vrot.lane.b32.xlu0 %v3882, 16
  %v4007 = vpop.permute.xlu0 %4006
  %4008 = vrot.lane.b32.xlu0 %v3884, 16
  %v4009 = vpop.permute.xlu0 %4008
  %4010 = vrot.lane.b32.xlu0 %v3888, 16
  %v4011 = vpop.permute.xlu0 %4010
  %4012 = vrot.lane.b32.xlu0 %v3890, 16
  %v4013 = vpop.permute.xlu0 %4012
  %4014 = vrot.lane.b32.xlu0 %v3892, 16
  %v4015 = vpop.permute.xlu0 %4014
  %4016 = vrot.lane.b32.xlu0 %v3894, 16
  %v4017 = vpop.permute.xlu0 %4016
  %4018 = vrot.lane.b32.xlu0 %v3898, 16
  %v4019 = vpop.permute.xlu0 %4018
  %4020 = vrot.lane.b32.xlu0 %v3900, 16
  %v4021 = vpop.permute.xlu0 %4020
  %4022 = vrot.lane.b32.xlu0 %v3902, 16
  %v4023 = vpop.permute.xlu0 %4022
  %4024 = vrot.lane.b32.xlu0 %v3904, 16
  %v4025 = vpop.permute.xlu0 %4024
  %v4026 = vsel %vm824, %v3995, %v3997
  %v4027 = vsel %vm824, %v3999, %v4001
  %v4028 = vsel %vm824, %v4003, %v4005
  %v4029 = vsel %vm824, %v4007, %v4009
  %v4030 = vsel %vm824, %v4011, %v4013
  %v4031 = vsel %vm824, %v4015, %v4017
  %v4032 = vsel %vm824, %v4019, %v4021
  %v4033 = vsel %vm824, %v4023, %v4025
  %v4050 = vmax.f32 %v3651, %v3995
  %v4051 = vmax.f32 %v3868, %v4026
  %v4052 = vmax.f32 %v3655, %v3999
  %v4053 = vmax.f32 %v3872, %v4027
  %v4054 = vmax.f32 %v3661, %v4003
  %v4055 = vmax.f32 %v3878, %v4028
  %v4056 = vmax.f32 %v3665, %v4007
  %v4057 = vmax.f32 %v3882, %v4029
  %v4058 = vmax.f32 %v3671, %v4011
  %v4059 = vmax.f32 %v3888, %v4030
  %v4060 = vmax.f32 %v3675, %v4015
  %v4061 = vmax.f32 %v3892, %v4031
  %v4062 = vmax.f32 %v3681, %v4019
  %v4063 = vmax.f32 %v3898, %v4032
  %v4064 = vmax.f32 %v3685, %v4023
  %v4065 = vmax.f32 %v3902, %v4033
  %4082 = vrot.lane.b32.xlu0 %v4050, 32
  %v4083 = vpop.permute.xlu0 %4082
  %4084 = vrot.lane.b32.xlu0 %v4051, 32
  %v4085 = vpop.permute.xlu0 %4084
  %4086 = vrot.lane.b32.xlu0 %v4052, 32
  %v4087 = vpop.permute.xlu0 %4086
  %4088 = vrot.lane.b32.xlu0 %v4053, 32
  %v4089 = vpop.permute.xlu0 %4088
  %4090 = vrot.lane.b32.xlu0 %v4054, 32
  %v4091 = vpop.permute.xlu0 %4090
  %4092 = vrot.lane.b32.xlu0 %v4055, 32
  %v4093 = vpop.permute.xlu0 %4092
  %4094 = vrot.lane.b32.xlu0 %v4056, 32
  %v4095 = vpop.permute.xlu0 %4094
  %4096 = vrot.lane.b32.xlu0 %v4057, 32
  %v4097 = vpop.permute.xlu0 %4096
  %4098 = vrot.lane.b32.xlu0 %v4058, 32
  %v4099 = vpop.permute.xlu0 %4098
  %4100 = vrot.lane.b32.xlu0 %v4059, 32
  %v4101 = vpop.permute.xlu0 %4100
  %4102 = vrot.lane.b32.xlu0 %v4060, 32
  %v4103 = vpop.permute.xlu0 %4102
  %4104 = vrot.lane.b32.xlu0 %v4061, 32
  %v4105 = vpop.permute.xlu0 %4104
  %4106 = vrot.lane.b32.xlu0 %v4062, 32
  %v4107 = vpop.permute.xlu0 %4106
  %4108 = vrot.lane.b32.xlu0 %v4063, 32
  %v4109 = vpop.permute.xlu0 %4108
  %4110 = vrot.lane.b32.xlu0 %v4064, 32
  %v4111 = vpop.permute.xlu0 %4110
  %4112 = vrot.lane.b32.xlu0 %v4065, 32
  %v4113 = vpop.permute.xlu0 %4112
  %v4114 = vsel %vm985, %v4083, %v4085
  %v4115 = vsel %vm985, %v4087, %v4089
  %v4116 = vsel %vm985, %v4091, %v4093
  %v4117 = vsel %vm985, %v4095, %v4097
  %v4118 = vsel %vm985, %v4099, %v4101
  %v4119 = vsel %vm985, %v4103, %v4105
  %v4120 = vsel %vm985, %v4107, %v4109
  %v4121 = vsel %vm985, %v4111, %v4113
  %v4130 = vmax.f32 %v3970, %v4114
  %v4131 = vmax.f32 %v3971, %v4115
  %v4132 = vmax.f32 %v3972, %v4116
  %v4133 = vmax.f32 %v3973, %v4117
  %v4134 = vmax.f32 %v3974, %v4118
  %v4135 = vmax.f32 %v3975, %v4119
  %v4136 = vmax.f32 %v3976, %v4120
  %v4137 = vmax.f32 %v3977, %v4121
  %v4138 = vld [vmem:[%s4] sm:$0x1]
  %v4140 = vlaneseq
  %v4141 = vshrl.u32 %v4140, 7
  %v4142 = vsub.s32 0, %v4141
  %v4143 = vrot.slane %v4138, %v4142
  %v4145 = vadd.f32 %v4130, %v4143
  %v4146 = vadd.f32 %v4131, %v4143
  %v4147 = vadd.f32 %v4132, %v4143
  %v4148 = vadd.f32 %v4133, %v4143
  %v4149 = vadd.f32 %v4134, %v4143
  %v4150 = vadd.f32 %v4135, %v4143
  %v4151 = vadd.f32 %v4136, %v4143
  %v4152 = vadd.f32 %v4137, %v4143
  %v4153 = vmax.f32 %v4145, 0.0
  %v4154 = vmax.f32 %v4146, 0.0
  %v4155 = vmax.f32 %v4147, 0.0
  %v4156 = vmax.f32 %v4148, 0.0
  %v4157 = vmax.f32 %v4149, 0.0
  %v4158 = vmax.f32 %v4150, 0.0
  %v4159 = vmax.f32 %v4151, 0.0
  %v4160 = vmax.f32 %v4152, 0.0
  %v4169 = vrot.slane %v4154, 7
  %vm4170 = vcmask 1041409
  %v4171 = vsel %vm4170, %v4169, %v4153
  %v4172 = vrot.slane %v4155, 6
  %vm4173 = vcmask 1042434
  %v4174 = vsel %vm4173, %v4172, %v4171
  %v4175 = vrot.slane %v4156, 5
  %vm4176 = vcmask 1043459
  %v4177 = vsel %vm4176, %v4175, %v4174
  %v4178 = vrot.slane %v4157, 4
  %vm4179 = vcmask 1044484
  %v4180 = vsel %vm4179, %v4178, %v4177
  %v4181 = vrot.slane %v4158, 3
  %vm4182 = vcmask 1045509
  %v4183 = vsel %vm4182, %v4181, %v4180
  %v4184 = vrot.slane %v4159, 2
  %vm4185 = vcmask 1046534
  %v4186 = vsel %vm4185, %v4184, %v4183
  %v4187 = vrot.slane %v4160, 1
  %vm4188 = vcmask 1047559
  %v4189 = vsel %vm4188, %v4187, %v4186
  %v4191 = vrot.slane %v4153, 1
  %v4192 = vsel %vm4170, %v4154, %v4191
  %v4193 = vrot.slane %v4155, 7
  %v4194 = vsel %vm4173, %v4193, %v4192
  %v4195 = vrot.slane %v4156, 6
  %v4196 = vsel %vm4176, %v4195, %v4194
  %v4197 = vrot.slane %v4157, 5
  %v4198 = vsel %vm4179, %v4197, %v4196
  %v4199 = vrot.slane %v4158, 4
  %v4200 = vsel %vm4182, %v4199, %v4198
  %v4201 = vrot.slane %v4159, 3
  %v4202 = vsel %vm4185, %v4201, %v4200
  %v4203 = vrot.slane %v4160, 2
  %v4204 = vsel %vm4188, %v4203, %v4202
  %4205 = vrot.lane.b32.xlu0 %v4204, 112
  %v4206 = vpop.permute.xlu0 %4205
  %v4208 = vrot.slane %v4153, 2
  %v4209 = vrot.slane %v4154, 1
  %v4210 = vsel %vm4170, %v4209, %v4208
  %v4211 = vsel %vm4173, %v4155, %v4210
  %v4212 = vrot.slane %v4156, 7
  %v4213 = vsel %vm4176, %v4212, %v4211
  %v4214 = vrot.slane %v4157, 6
  %v4215 = vsel %vm4179, %v4214, %v4213
  %v4216 = vrot.slane %v4158, 5
  %v4217 = vsel %vm4182, %v4216, %v4215
  %v4218 = vrot.slane %v4159, 4
  %v4219 = vsel %vm4185, %v4218, %v4217
  %v4220 = vrot.slane %v4160, 3
  %v4221 = vsel %vm4188, %v4220, %v4219
  %4222 = vrot.lane.b32.xlu0 %v4221, 96
  %v4223 = vpop.permute.xlu0 %4222
  %v4225 = vrot.slane %v4153, 3
  %v4226 = vrot.slane %v4154, 2
  %v4227 = vsel %vm4170, %v4226, %v4225
  %v4228 = vrot.slane %v4155, 1
  %v4229 = vsel %vm4173, %v4228, %v4227
  %v4230 = vsel %vm4176, %v4156, %v4229
  %v4231 = vrot.slane %v4157, 7
  %v4232 = vsel %vm4179, %v4231, %v4230
  %v4233 = vrot.slane %v4158, 6
  %v4234 = vsel %vm4182, %v4233, %v4232
  %v4235 = vrot.slane %v4159, 5
  %v4236 = vsel %vm4185, %v4235, %v4234
  %v4237 = vrot.slane %v4160, 4
  %v4238 = vsel %vm4188, %v4237, %v4236
  %4239 = vrot.lane.b32.xlu0 %v4238, 80
  %v4240 = vpop.permute.xlu0 %4239
  %v4242 = vrot.slane %v4153, 4
  %v4243 = vrot.slane %v4154, 3
  %v4244 = vsel %vm4170, %v4243, %v4242
  %v4245 = vrot.slane %v4155, 2
  %v4246 = vsel %vm4173, %v4245, %v4244
  %v4247 = vrot.slane %v4156, 1
  %v4248 = vsel %vm4176, %v4247, %v4246
  %v4249 = vsel %vm4179, %v4157, %v4248
  %v4250 = vrot.slane %v4158, 7
  %v4251 = vsel %vm4182, %v4250, %v4249
  %v4252 = vrot.slane %v4159, 6
  %v4253 = vsel %vm4185, %v4252, %v4251
  %v4254 = vrot.slane %v4160, 5
  %v4255 = vsel %vm4188, %v4254, %v4253
  %4256 = vrot.lane.b32.xlu0 %v4255, 64
  %v4257 = vpop.permute.xlu0 %4256
  %v4259 = vrot.slane %v4153, 5
  %v4260 = vrot.slane %v4154, 4
  %v4261 = vsel %vm4170, %v4260, %v4259
  %v4262 = vrot.slane %v4155, 3
  %v4263 = vsel %vm4173, %v4262, %v4261
  %v4264 = vrot.slane %v4156, 2
  %v4265 = vsel %vm4176, %v4264, %v4263
  %v4266 = vrot.slane %v4157, 1
  %v4267 = vsel %vm4179, %v4266, %v4265
  %v4268 = vsel %vm4182, %v4158, %v4267
  %v4269 = vrot.slane %v4159, 7
  %v4270 = vsel %vm4185, %v4269, %v4268
  %v4271 = vrot.slane %v4160, 6
  %v4272 = vsel %vm4188, %v4271, %v4270
  %4273 = vrot.lane.b32.xlu0 %v4272, 48
  %v4274 = vpop.permute.xlu0 %4273
  %v4276 = vrot.slane %v4153, 6
  %v4277 = vrot.slane %v4154, 5
  %v4278 = vsel %vm4170, %v4277, %v4276
  %v4279 = vrot.slane %v4155, 4
  %v4280 = vsel %vm4173, %v4279, %v4278
  %v4281 = vrot.slane %v4156, 3
  %v4282 = vsel %vm4176, %v4281, %v4280
  %v4283 = vrot.slane %v4157, 2
  %v4284 = vsel %vm4179, %v4283, %v4282
  %v4285 = vrot.slane %v4158, 1
  %v4286 = vsel %vm4182, %v4285, %v4284
  %v4287 = vsel %vm4185, %v4159, %v4286
  %v4288 = vrot.slane %v4160, 7
  %v4289 = vsel %vm4188, %v4288, %v4287
  %4290 = vrot.lane.b32.xlu0 %v4289, 32
  %v4291 = vpop.permute.xlu0 %4290
  %vm4293 = vcmask 916480
  %v4294 = vsel %vm4293, %v4189, %v4206
  %v4295 = vsel %vm2283, %v4206, %v4223
  %vm4296 = vcmask 654336
  %v4297 = vsel %vm4296, %v4223, %v4240
  %v4298 = vsel %vm215, %v4240, %v4257
  %vm4299 = vcmask 392192
  %v4300 = vsel %vm4299, %v4257, %v4274
  %v4301 = vsel %vm985, %v4274, %v4291
  %v4302 = vld [vmem:[%s5] sm:$0xff]
  %v4303 = vld [vmem:[%s5 + $0x8] sm:$0xff]
  %v4304 = vld [vmem:[%s5 + $0x10] sm:$0xff]
  %v4305 = vld [vmem:[%s5 + $0x18] sm:$0xff]
  %v4306 = vld [vmem:[%s5 + $0x20] sm:$0xff]
  %v4307 = vld [vmem:[%s5 + $0x28] sm:$0xff]
  %v4308 = vld [vmem:[%s5 + $0x30] sm:$0xff]
  %v4309 = vld [vmem:[%s5 + $0x38] sm:$0xff]
  %v4310 = vld [vmem:[%s5 + $0x40] sm:$0xff]
  %v4311 = vld [vmem:[%s5 + $0x48] sm:$0xff]
  %v4312 = vld [vmem:[%s5 + $0x50] sm:$0xff]
  %v4313 = vld [vmem:[%s5 + $0x58] sm:$0xff]
  %v4314 = vld [vmem:[%s5 + $0x60] sm:$0xff]
  %v4315 = vld [vmem:[%s5 + $0x68] sm:$0xff]
  %v4316 = vld [vmem:[%s5 + $0x70] sm:$0xff]
  %v4317 = vld [vmem:[%s5 + $0x78] sm:$0xff]
  %v4318 = vld [vmem:[%s5 + $0x80] sm:$0xff]
  %v4319 = vld [vmem:[%s5 + $0x88] sm:$0xff]
  %v4320 = vld [vmem:[%s5 + $0x90] sm:$0xff]
  %v4321 = vld [vmem:[%s5 + $0x98] sm:$0xff]
  %v4322 = vld [vmem:[%s5 + $0xa0] sm:$0xff]
  %v4323 = vld [vmem:[%s5 + $0xa8] sm:$0xff]
  %v4324 = vld [vmem:[%s5 + $0xb0] sm:$0xff]
  %v4325 = vld [vmem:[%s5 + $0xb8] sm:$0xff]
  %v4326 = vld [vmem:[%s5 + $0xc0] sm:$0xff]
  %v4327 = vld [vmem:[%s5 + $0xc8] sm:$0xff]
  %v4328 = vld [vmem:[%s5 + $0xd0] sm:$0xff]
  %v4329 = vld [vmem:[%s5 + $0xd8] sm:$0xff]
  %v4330 = vld [vmem:[%s5 + $0xe0] sm:$0xff]
  %v4331 = vld [vmem:[%s5 + $0xe8] sm:$0xff]
  %v4332 = vld [vmem:[%s5 + $0xf0] sm:$0xff]
  %v4333 = vld [vmem:[%s5 + $0xf8] sm:$0xff]
  %v4334 = vld [vmem:[%s5 + $0x100] sm:$0xff]
  %v4335 = vld [vmem:[%s5 + $0x108] sm:$0xff]
  %v4336 = vld [vmem:[%s5 + $0x110] sm:$0xff]
  %v4337 = vld [vmem:[%s5 + $0x118] sm:$0xff]
  %v4338 = vld [vmem:[%s5 + $0x120] sm:$0xff]
  %v4339 = vld [vmem:[%s5 + $0x128] sm:$0xff]
  %v4340 = vld [vmem:[%s5 + $0x130] sm:$0xff]
  %v4341 = vld [vmem:[%s5 + $0x138] sm:$0xff]
  %v4342 = vld [vmem:[%s5 + $0x140] sm:$0xff]
  %v4343 = vld [vmem:[%s5 + $0x148] sm:$0xff]
  %v4344 = vld [vmem:[%s5 + $0x150] sm:$0xff]
  %v4345 = vld [vmem:[%s5 + $0x158] sm:$0xff]
  %v4346 = vld [vmem:[%s5 + $0x160] sm:$0xff]
  %v4347 = vld [vmem:[%s5 + $0x168] sm:$0xff]
  %v4348 = vld [vmem:[%s5 + $0x170] sm:$0xff]
  %v4349 = vld [vmem:[%s5 + $0x178] sm:$0xff]
  %v4350 = vld [vmem:[%s5 + $0x180] sm:$0xff]
  %v4351 = vld [vmem:[%s5 + $0x188] sm:$0xff]
  %v4352 = vld [vmem:[%s5 + $0x190] sm:$0xff]
  %v4353 = vld [vmem:[%s5 + $0x198] sm:$0xff]
  %v4354 = vld [vmem:[%s5 + $0x1a0] sm:$0xff]
  %v4355 = vld [vmem:[%s5 + $0x1a8] sm:$0xff]
  %v4356 = vld [vmem:[%s5 + $0x1b0] sm:$0xff]
  %v4357 = vld [vmem:[%s5 + $0x1b8] sm:$0xff]
  %v4358 = vld [vmem:[%s5 + $0x1c0] sm:$0xff]
  %v4359 = vld [vmem:[%s5 + $0x1c8] sm:$0xff]
  %v4360 = vld [vmem:[%s5 + $0x1d0] sm:$0xff]
  %v4361 = vld [vmem:[%s5 + $0x1d8] sm:$0xff]
  %v4362 = vld [vmem:[%s5 + $0x1e0] sm:$0xff]
  %v4363 = vld [vmem:[%s5 + $0x1e8] sm:$0xff]
  %v4364 = vld [vmem:[%s5 + $0x1f0] sm:$0xff]
  %v4365 = vld [vmem:[%s5 + $0x1f8] sm:$0xff]
  %v4366 = vld [vmem:[%s5 + $0x200] sm:$0xff]
  %v4367 = vld [vmem:[%s5 + $0x208] sm:$0xff]
  %v4368 = vld [vmem:[%s5 + $0x210] sm:$0xff]
  %v4369 = vld [vmem:[%s5 + $0x218] sm:$0xff]
  %v4370 = vld [vmem:[%s5 + $0x220] sm:$0xff]
  %v4371 = vld [vmem:[%s5 + $0x228] sm:$0xff]
  %v4372 = vld [vmem:[%s5 + $0x230] sm:$0xff]
  %v4373 = vld [vmem:[%s5 + $0x238] sm:$0xff]
  %v4374 = vld [vmem:[%s5 + $0x240] sm:$0xff]
  %v4375 = vld [vmem:[%s5 + $0x248] sm:$0xff]
  %v4376 = vld [vmem:[%s5 + $0x250] sm:$0xff]
  %v4377 = vld [vmem:[%s5 + $0x258] sm:$0xff]
  %v4378 = vld [vmem:[%s5 + $0x260] sm:$0xff]
  %v4379 = vld [vmem:[%s5 + $0x268] sm:$0xff]
  %v4380 = vld [vmem:[%s5 + $0x270] sm:$0xff]
  %v4381 = vld [vmem:[%s5 + $0x278] sm:$0xff]
  %v4382 = vld [vmem:[%s5 + $0x280] sm:$0xff]
  %v4383 = vld [vmem:[%s5 + $0x288] sm:$0xff]
  %v4384 = vld [vmem:[%s5 + $0x290] sm:$0xff]
  %v4385 = vld [vmem:[%s5 + $0x298] sm:$0xff]
  %v4386 = vld [vmem:[%s5 + $0x2a0] sm:$0xff]
  %v4387 = vld [vmem:[%s5 + $0x2a8] sm:$0xff]
  %v4388 = vld [vmem:[%s5 + $0x2b0] sm:$0xff]
  %v4389 = vld [vmem:[%s5 + $0x2b8] sm:$0xff]
  %v4390 = vld [vmem:[%s5 + $0x2c0] sm:$0xff]
  %v4391 = vld [vmem:[%s5 + $0x2c8] sm:$0xff]
  %v4392 = vld [vmem:[%s5 + $0x2d0] sm:$0xff]
  %v4393 = vld [vmem:[%s5 + $0x2d8] sm:$0xff]
  %v4394 = vld [vmem:[%s5 + $0x2e0] sm:$0xff]
  %v4395 = vld [vmem:[%s5 + $0x2e8] sm:$0xff]
  %v4396 = vld [vmem:[%s5 + $0x2f0] sm:$0xff]
  %v4397 = vld [vmem:[%s5 + $0x2f8] sm:$0xff]
  %v4398 = vld [vmem:[%s5 + $0x300] sm:$0xff]
  %v4399 = vld [vmem:[%s5 + $0x308] sm:$0xff]
  %v4400 = vld [vmem:[%s6] sm:$0x1]
  %v4402 = vlaneseq
  %v4403 = vshrl.u32 %v4402, 7
  %v4404 = vsub.s32 0, %v4403
  %v4405 = vrot.slane %v4400, %v4404
  %v4407 = vsel %vm824, %v4291, 0
  %4409 = vmatprep.subr.mxu0 0.0
  %4410 = vmatpush1.msra.mxu0 %v4302
  %4411 = vmatprep.subr.mxu0 0.0
  %4412 = vmatpush1.msra.mxu0 %v4303
  %4413 = vmatprep.subr.mxu0 0.0
  %4414 = vmatpush1.msra.mxu0 %v4304
  %4415 = vmatprep.subr.mxu0 0.0
  %4416 = vmatpush1.msra.mxu0 %v4305
  %4417 = vmatprep.subr.mxu0 0.0
  %4418 = vmatpush1.msra.mxu0 %v4306
  %4419 = vmatprep.subr.mxu0 0.0
  %4420 = vmatpush1.msra.mxu0 %v4307
  %4421 = vmatprep.subr.mxu0 0.0
  %4422 = vmatpush1.msra.mxu0 %v4308
  %4423 = vmatprep.subr.mxu0 0.0
  %4424 = vmatpush1.msra.mxu0 %v4309
  %4425 = vmatprep.subr.mxu0 0.0
  %4426 = vmatpush1.msra.mxu0 %v4310
  %4427 = vmatprep.subr.mxu0 0.0
  %4428 = vmatpush1.msra.mxu0 %v4311
  %4429 = vmatprep.subr.mxu0 0.0
  %4430 = vmatpush1.msra.mxu0 %v4312
  %4431 = vmatprep.subr.mxu0 0.0
  %4432 = vmatpush1.msra.mxu0 %v4313
  %4433 = vmatprep.subr.mxu0 0.0
  %4434 = vmatpush1.msra.mxu0 %v4314
  %4435 = vmatprep.subr.mxu0 0.0
  %4436 = vmatpush1.msra.mxu0 %v4315
  %4437 = vmatprep.subr.mxu0 0.0
  %4438 = vmatpush1.msra.mxu0 %v4316
  %4439 = vmatprep.subr.mxu0 0.0
  %4440 = vmatpush1.msra.mxu0 %v4317
  %4441 = vmatprep.subr.mxu0 0.0
  %4442 = vmatpush1.msra.mxu0 %v4318
  %4443 = vmatprep.subr.mxu0 0.0
  %4444 = vmatpush1.msra.mxu0 %v4319
  %4445 = vmatprep.subr.mxu0 0.0
  %4446 = vmatpush1.msra.mxu0 %v4320
  %4447 = vmatprep.subr.mxu0 0.0
  %4448 = vmatpush1.msra.mxu0 %v4321
  %4449 = vmatprep.subr.mxu0 0.0
  %4450 = vmatpush1.msra.mxu0 %v4322
  %4451 = vmatprep.subr.mxu0 0.0
  %4452 = vmatpush1.msra.mxu0 %v4323
  %4453 = vmatprep.subr.mxu0 0.0
  %4454 = vmatpush1.msra.mxu0 %v4324
  %4455 = vmatprep.subr.mxu0 0.0
  %4456 = vmatpush1.msra.mxu0 %v4325
  %4457 = vmatprep.subr.mxu0 0.0
  %4458 = vmatpush1.msra.mxu0 %v4326
  %4459 = vmatprep.subr.mxu0 0.0
  %4460 = vmatpush1.msra.mxu0 %v4327
  %4461 = vmatprep.subr.mxu0 0.0
  %4462 = vmatpush1.msra.mxu0 %v4328
  %4463 = vmatprep.subr.mxu0 0.0
  %4464 = vmatpush1.msra.mxu0 %v4329
  %4465 = vmatprep.subr.mxu0 0.0
  %4466 = vmatpush1.msra.mxu0 %v4330
  %4467 = vmatprep.subr.mxu0 0.0
  %4468 = vmatpush1.msra.mxu0 %v4331
  %4469 = vmatprep.subr.mxu0 0.0
  %4470 = vmatpush1.msra.mxu0 %v4332
  %4471 = vmatprep.subr.mxu0 0.0
  %4472 = vmatpush1.msra.mxu0 %v4333
  %4473 = vmatprep.mubr.f32.mxu0 %v4295
  %4474 = vmatmul.mubr.f32.gmra.mrb[0].mxu0 %v4294
  %v4475 = vpop.f32.mrb[0].mxu0
  %v4476 = vadd.f32 %v4405, %v4475
  %v4477 = vpop.f32.mrb[0].mxu0
  %4478 = vdwg.mxu0
  %4479 = vmatprep.subr.mxu0 0.0
  %4480 = vmatpush1.msra.mxu0 %v4334
  %4481 = vmatprep.subr.mxu0 0.0
  %4482 = vmatpush1.msra.mxu0 %v4335
  %4483 = vmatprep.subr.mxu0 0.0
  %4484 = vmatpush1.msra.mxu0 %v4336
  %4485 = vmatprep.subr.mxu0 0.0
  %4486 = vmatpush1.msra.mxu0 %v4337
  %4487 = vmatprep.subr.mxu0 0.0
  %4488 = vmatpush1.msra.mxu0 %v4338
  %4489 = vmatprep.subr.mxu0 0.0
  %4490 = vmatpush1.msra.mxu0 %v4339
  %4491 = vmatprep.subr.mxu0 0.0
  %4492 = vmatpush1.msra.mxu0 %v4340
  %4493 = vmatprep.subr.mxu0 0.0
  %4494 = vmatpush1.msra.mxu0 %v4341
  %4495 = vmatprep.subr.mxu0 0.0
  %4496 = vmatpush1.msra.mxu0 %v4342
  %4497 = vmatprep.subr.mxu0 0.0
  %4498 = vmatpush1.msra.mxu0 %v4343
  %4499 = vmatprep.subr.mxu0 0.0
  %4500 = vmatpush1.msra.mxu0 %v4344
  %4501 = vmatprep.subr.mxu0 0.0
  %4502 = vmatpush1.msra.mxu0 %v4345
  %4503 = vmatprep.subr.mxu0 0.0
  %4504 = vmatpush1.msra.mxu0 %v4346
  %4505 = vmatprep.subr.mxu0 0.0
  %4506 = vmatpush1.msra.mxu0 %v4347
  %4507 = vmatprep.subr.mxu0 0.0
  %4508 = vmatpush1.msra.mxu0 %v4348
  %4509 = vmatprep.subr.mxu0 0.0
  %4510 = vmatpush1.msra.mxu0 %v4349
  %4511 = vmatprep.subr.mxu0 0.0
  %4512 = vmatpush1.msra.mxu0 %v4350
  %4513 = vmatprep.subr.mxu0 0.0
  %4514 = vmatpush1.msra.mxu0 %v4351
  %4515 = vmatprep.subr.mxu0 0.0
  %4516 = vmatpush1.msra.mxu0 %v4352
  %4517 = vmatprep.subr.mxu0 0.0
  %4518 = vmatpush1.msra.mxu0 %v4353
  %4519 = vmatprep.subr.mxu0 0.0
  %4520 = vmatpush1.msra.mxu0 %v4354
  %4521 = vmatprep.subr.mxu0 0.0
  %4522 = vmatpush1.msra.mxu0 %v4355
  %4523 = vmatprep.subr.mxu0 0.0
  %4524 = vmatpush1.msra.mxu0 %v4356
  %4525 = vmatprep.subr.mxu0 0.0
  %4526 = vmatpush1.msra.mxu0 %v4357
  %4527 = vmatprep.subr.mxu0 0.0
  %4528 = vmatpush1.msra.mxu0 %v4358
  %4529 = vmatprep.subr.mxu0 0.0
  %4530 = vmatpush1.msra.mxu0 %v4359
  %4531 = vmatprep.subr.mxu0 0.0
  %4532 = vmatpush1.msra.mxu0 %v4360
  %4533 = vmatprep.subr.mxu0 0.0
  %4534 = vmatpush1.msra.mxu0 %v4361
  %4535 = vmatprep.subr.mxu0 0.0
  %4536 = vmatpush1.msra.mxu0 %v4362
  %4537 = vmatprep.subr.mxu0 0.0
  %4538 = vmatpush1.msra.mxu0 %v4363
  %4539 = vmatprep.subr.mxu0 0.0
  %4540 = vmatpush1.msra.mxu0 %v4364
  %4541 = vmatprep.subr.mxu0 0.0
  %4542 = vmatpush1.msra.mxu0 %v4365
  %4543 = vmatprep.mubr.f32.mxu0 %v4298
  %4544 = vmatmul.mubr.f32.gmra.mrb[0].mxu0 %v4297
  %v4545 = vpop.f32.mrb[0].mxu0
  %v4546 = vadd.f32 %v4476, %v4545
  %v4547 = vpop.f32.mrb[0].mxu0
  %4548 = vdwg.mxu0
  %4549 = vmatprep.subr.mxu0 0.0
  %4550 = vmatpush1.msra.mxu0 %v4366
  %4551 = vmatprep.subr.mxu0 0.0
  %4552 = vmatpush1.msra.mxu0 %v4367
  %4553 = vmatprep.subr.mxu0 0.0
  %4554 = vmatpush1.msra.mxu0 %v4368
  %4555 = vmatprep.subr.mxu0 0.0
  %4556 = vmatpush1.msra.mxu0 %v4369
  %4557 = vmatprep.subr.mxu0 0.0
  %4558 = vmatpush1.msra.mxu0 %v4370
  %4559 = vmatprep.subr.mxu0 0.0
  %4560 = vmatpush1.msra.mxu0 %v4371
  %4561 = vmatprep.subr.mxu0 0.0
  %4562 = vmatpush1.msra.mxu0 %v4372
  %4563 = vmatprep.subr.mxu0 0.0
  %4564 = vmatpush1.msra.mxu0 %v4373
  %4565 = vmatprep.subr.mxu0 0.0
  %4566 = vmatpush1.msra.mxu0 %v4374
  %4567 = vmatprep.subr.mxu0 0.0
  %4568 = vmatpush1.msra.mxu0 %v4375
  %4569 = vmatprep.subr.mxu0 0.0
  %4570 = vmatpush1.msra.mxu0 %v4376
  %4571 = vmatprep.subr.mxu0 0.0
  %4572 = vmatpush1.msra.mxu0 %v4377
  %4573 = vmatprep.subr.mxu0 0.0
  %4574 = vmatpush1.msra.mxu0 %v4378
  %4575 = vmatprep.subr.mxu0 0.0
  %4576 = vmatpush1.msra.mxu0 %v4379
  %4577 = vmatprep.subr.mxu0 0.0
  %4578 = vmatpush1.msra.mxu0 %v4380
  %4579 = vmatprep.subr.mxu0 0.0
  %4580 = vmatpush1.msra.mxu0 %v4381
  %4581 = vmatprep.subr.mxu0 0.0
  %4582 = vmatpush1.msra.mxu0 %v4382
  %4583 = vmatprep.subr.mxu0 0.0
  %4584 = vmatpush1.msra.mxu0 %v4383
  %4585 = vmatprep.subr.mxu0 0.0
  %4586 = vmatpush1.msra.mxu0 %v4384
  %4587 = vmatprep.subr.mxu0 0.0
  %4588 = vmatpush1.msra.mxu0 %v4385
  %4589 = vmatprep.subr.mxu0 0.0
  %4590 = vmatpush1.msra.mxu0 %v4386
  %4591 = vmatprep.subr.mxu0 0.0
  %4592 = vmatpush1.msra.mxu0 %v4387
  %4593 = vmatprep.subr.mxu0 0.0
  %4594 = vmatpush1.msra.mxu0 %v4388
  %4595 = vmatprep.subr.mxu0 0.0
  %4596 = vmatpush1.msra.mxu0 %v4389
  %4597 = vmatprep.subr.mxu0 0.0
  %4598 = vmatpush1.msra.mxu0 %v4390
  %4599 = vmatprep.subr.mxu0 0.0
  %4600 = vmatpush1.msra.mxu0 %v4391
  %4601 = vmatprep.subr.mxu0 0.0
  %4602 = vmatpush1.msra.mxu0 %v4392
  %4603 = vmatprep.subr.mxu0 0.0
  %4604 = vmatpush1.msra.mxu0 %v4393
  %4605 = vmatprep.subr.mxu0 0.0
  %4606 = vmatpush1.msra.mxu0 %v4394
  %4607 = vmatprep.subr.mxu0 0.0
  %4608 = vmatpush1.msra.mxu0 %v4395
  %4609 = vmatprep.subr.mxu0 0.0
  %4610 = vmatpush1.msra.mxu0 %v4396
  %4611 = vmatprep.subr.mxu0 0.0
  %4612 = vmatpush1.msra.mxu0 %v4397
  %4613 = vmatprep.mubr.f32.mxu0 %v4301
  %4614 = vmatmul.mubr.f32.gmra.mrb[0].mxu0 %v4300
  %v4615 = vpop.f32.mrb[0].mxu0
  %v4616 = vadd.f32 %v4546, %v4615
  %v4617 = vpop.f32.mrb[0].mxu0
  %4618 = vdwg.mxu0
  %4619 = vmatprep.subr.mxu0 0.0
  %4620 = vmatpush1.msra.mxu0 %v4398
  %4621 = vmatprep.subr.mxu0 0.0
  %4622 = vmatpush1.msra.mxu0 %v4399
  %4623 = vmatprep.subr.mxu0 0.0
  %4624 = vmatpush1.msra.mxu0 0.0
  %4625 = vmatprep.subr.mxu0 0.0
  %4626 = vmatpush1.msra.mxu0 0.0
  %4627 = vmatprep.subr.mxu0 0.0
  %4628 = vmatpush1.msra.mxu0 0.0
  %4629 = vmatprep.subr.mxu0 0.0
  %4630 = vmatpush1.msra.mxu0 0.0
  %4631 = vmatprep.subr.mxu0 0.0
  %4632 = vmatpush1.msra.mxu0 0.0
  %4633 = vmatprep.subr.mxu0 0.0
  %4634 = vmatpush1.msra.mxu0 0.0
  %4635 = vmatprep.subr.mxu0 0.0
  %4636 = vmatpush1.msra.mxu0 0.0
  %4637 = vmatprep.subr.mxu0 0.0
  %4638 = vmatpush1.msra.mxu0 0.0
  %4639 = vmatprep.subr.mxu0 0.0
  %4640 = vmatpush1.msra.mxu0 0.0
  %4641 = vmatprep.subr.mxu0 0.0
  %4642 = vmatpush1.msra.mxu0 0.0
  %4643 = vmatprep.subr.mxu0 0.0
  %4644 = vmatpush1.msra.mxu0 0.0
  %4645 = vmatprep.subr.mxu0 0.0
  %4646 = vmatpush1.msra.mxu0 0.0
  %4647 = vmatprep.subr.mxu0 0.0
  %4648 = vmatpush1.msra.mxu0 0.0
  %4649 = vmatprep.subr.mxu0 0.0
  %4650 = vmatpush1.msra.mxu0 0.0
  %4651 = vmatprep.subr.mxu0 0.0
  %4652 = vmatpush1.msra.mxu0 0.0
  %4653 = vmatprep.subr.mxu0 0.0
  %4654 = vmatpush1.msra.mxu0 0.0
  %4655 = vmatprep.subr.mxu0 0.0
  %4656 = vmatpush1.msra.mxu0 0.0
  %4657 = vmatprep.subr.mxu0 0.0
  %4658 = vmatpush1.msra.mxu0 0.0
  %4659 = vmatprep.subr.mxu0 0.0
  %4660 = vmatpush1.msra.mxu0 0.0
  %4661 = vmatprep.subr.mxu0 0.0
  %4662 = vmatpush1.msra.mxu0 0.0
  %4663 = vmatprep.subr.mxu0 0.0
  %4664 = vmatpush1.msra.mxu0 0.0
  %4665 = vmatprep.subr.mxu0 0.0
  %4666 = vmatpush1.msra.mxu0 0.0
  %4667 = vmatprep.subr.mxu0 0.0
  %4668 = vmatpush1.msra.mxu0 0.0
  %4669 = vmatprep.subr.mxu0 0.0
  %4670 = vmatpush1.msra.mxu0 0.0
  %4671 = vmatprep.subr.mxu0 0.0
  %4672 = vmatpush1.msra.mxu0 0.0
  %4673 = vmatprep.subr.mxu0 0.0
  %4674 = vmatpush1.msra.mxu0 0.0
  %4675 = vmatprep.subr.mxu0 0.0
  %4676 = vmatpush1.msra.mxu0 0.0
  %4677 = vmatprep.subr.mxu0 0.0
  %4678 = vmatpush1.msra.mxu0 0.0
  %4679 = vmatprep.subr.mxu0 0.0
  %4680 = vmatpush1.msra.mxu0 0.0
  %4681 = vmatprep.subr.mxu0 0.0
  %4682 = vmatpush1.msra.mxu0 0.0
  %4683 = vmatprep.mubr.f32.mxu0 0.0
  %4684 = vmatmul.mubr.f32.gmra.mrb[0].mxu0 %v4407
  %v4685 = vpop.f32.mrb[0].mxu0
  %v4686 = vadd.f32 %v4616, %v4685
  %v4687 = vpop.f32.mrb[0].mxu0
  %4688 = vdwg.mxu0
  %v4689 = vld [vmem:[%s7] sm:$0xff]
  %v4690 = vld [vmem:[%s7 + $0x8] sm:$0xff]
  %v4691 = vld [vmem:[%s7 + $0x10] sm:$0xff]
  %v4692 = vld [vmem:[%s7 + $0x18] sm:$0xff]
  %v4693 = vld [vmem:[%s7 + $0x20] sm:$0xff]
  %v4694 = vld [vmem:[%s7 + $0x28] sm:$0xff]
  %v4695 = vld [vmem:[%s7 + $0x30] sm:$0xff]
  %v4696 = vld [vmem:[%s7 + $0x38] sm:$0xff]
  %v4697 = vld [vmem:[%s7 + $0x40] sm:$0xff]
  %v4698 = vld [vmem:[%s7 + $0x48] sm:$0xff]
  %v4699 = vld [vmem:[%s7 + $0x50] sm:$0xff]
  %v4700 = vld [vmem:[%s7 + $0x58] sm:$0xff]
  %v4701 = vld [vmem:[%s7 + $0x60] sm:$0xff]
  %v4702 = vld [vmem:[%s7 + $0x68] sm:$0xff]
  %v4703 = vld [vmem:[%s7 + $0x70] sm:$0xff]
  %v4704 = vld [vmem:[%s7 + $0x78] sm:$0xff]
  %v4705 = vld [vmem:[%s8] sm:$0x1]
  %v4707 = vlaneseq
  %v4708 = vshrl.u32 %v4707, 7
  %v4709 = vsub.s32 0, %v4708
  %v4710 = vrot.slane %v4705, %v4709
  %4712 = vmatprep.subr.mxu0 0.0
  %4713 = vmatpush1.msra.mxu0 %v4689
  %4714 = vmatprep.subr.mxu0 0.0
  %4715 = vmatpush1.msra.mxu0 %v4690
  %4716 = vmatprep.subr.mxu0 0.0
  %4717 = vmatpush1.msra.mxu0 %v4691
  %4718 = vmatprep.subr.mxu0 0.0
  %4719 = vmatpush1.msra.mxu0 %v4692
  %4720 = vmatprep.subr.mxu0 0.0
  %4721 = vmatpush1.msra.mxu0 %v4693
  %4722 = vmatprep.subr.mxu0 0.0
  %4723 = vmatpush1.msra.mxu0 %v4694
  %4724 = vmatprep.subr.mxu0 0.0
  %4725 = vmatpush1.msra.mxu0 %v4695
  %4726 = vmatprep.subr.mxu0 0.0
  %4727 = vmatpush1.msra.mxu0 %v4696
  %4728 = vmatprep.subr.mxu0 0.0
  %4729 = vmatpush1.msra.mxu0 %v4697
  %4730 = vmatprep.subr.mxu0 0.0
  %4731 = vmatpush1.msra.mxu0 %v4698
  %4732 = vmatprep.subr.mxu0 0.0
  %4733 = vmatpush1.msra.mxu0 %v4699
  %4734 = vmatprep.subr.mxu0 0.0
  %4735 = vmatpush1.msra.mxu0 %v4700
  %4736 = vmatprep.subr.mxu0 0.0
  %4737 = vmatpush1.msra.mxu0 %v4701
  %4738 = vmatprep.subr.mxu0 0.0
  %4739 = vmatpush1.msra.mxu0 %v4702
  %4740 = vmatprep.subr.mxu0 0.0
  %4741 = vmatpush1.msra.mxu0 %v4703
  %4742 = vmatprep.subr.mxu0 0.0
  %4743 = vmatpush1.msra.mxu0 %v4704
  %4744 = vmatprep.subr.mxu0 0.0
  %4745 = vmatpush1.msra.mxu0 0.0
  %4746 = vmatprep.subr.mxu0 0.0
  %4747 = vmatpush1.msra.mxu0 0.0
  %4748 = vmatprep.subr.mxu0 0.0
  %4749 = vmatpush1.msra.mxu0 0.0
  %4750 = vmatprep.subr.mxu0 0.0
  %4751 = vmatpush1.msra.mxu0 0.0
  %4752 = vmatprep.subr.mxu0 0.0
  %4753 = vmatpush1.msra.mxu0 0.0
  %4754 = vmatprep.subr.mxu0 0.0
  %4755 = vmatpush1.msra.mxu0 0.0
  %4756 = vmatprep.subr.mxu0 0.0
  %4757 = vmatpush1.msra.mxu0 0.0
  %4758 = vmatprep.subr.mxu0 0.0
  %4759 = vmatpush1.msra.mxu0 0.0
  %4760 = vmatprep.subr.mxu0 0.0
  %4761 = vmatpush1.msra.mxu0 0.0
  %4762 = vmatprep.subr.mxu0 0.0
  %4763 = vmatpush1.msra.mxu0 0.0
  %4764 = vmatprep.subr.mxu0 0.0
  %4765 = vmatpush1.msra.mxu0 0.0
  %4766 = vmatprep.subr.mxu0 0.0
  %4767 = vmatpush1.msra.mxu0 0.0
  %4768 = vmatprep.subr.mxu0 0.0
  %4769 = vmatpush1.msra.mxu0 0.0
  %4770 = vmatprep.subr.mxu0 0.0
  %4771 = vmatpush1.msra.mxu0 0.0
  %4772 = vmatprep.subr.mxu0 0.0
  %4773 = vmatpush1.msra.mxu0 0.0
  %4774 = vmatprep.subr.mxu0 0.0
  %4775 = vmatpush1.msra.mxu0 0.0
  %4776 = vmatprep.mubr.f32.mxu0 0.0
  %4777 = vmatmul.mubr.f32.gmra.mrb[0].mxu0 %v4686
  %v4778 = vpop.f32.mrb[0].mxu0
  %v4779 = vadd.f32 %v4710, %v4778
  %v4780 = vpop.f32.mrb[0].mxu0
  %4781 = vdwg.mxu0
  %v4782 = vld [vmem:[%s9] sm:$0xff]
  %v4783 = vld [vmem:[%s9 + $0x8] sm:$0xff]
  %v4784 = vld [vmem:[%s9 + $0x10] sm:$0xff]
  %v4785 = vld [vmem:[%s9 + $0x18] sm:$0xff]
  %v4786 = vld [vmem:[%s9 + $0x20] sm:$0xff]
  %v4787 = vld [vmem:[%s9 + $0x28] sm:$0xff]
  %v4788 = vld [vmem:[%s9 + $0x30] sm:$0xff]
  %v4789 = vld [vmem:[%s9 + $0x38] sm:$0xff]
  %v4790 = vld [vmem:[%s9 + $0x40] sm:$0xff]
  %v4791 = vld [vmem:[%s9 + $0x48] sm:$0xff]
  %v4792 = vld [vmem:[%s9 + $0x50] sm:$0xff]
  %v4793 = vld [vmem:[%s9 + $0x58] sm:$0xff]
  %v4794 = vld [vmem:[%s9 + $0x60] sm:$0xff]
  %v4795 = vld [vmem:[%s9 + $0x68] sm:$0xff]
  %v4796 = vld [vmem:[%s9 + $0x70] sm:$0xff]
  %v4797 = vld [vmem:[%s9 + $0x78] sm:$0xff]
  %v4798 = vld [vmem:[%s10] sm:$0x1]
  %v4800 = vlaneseq
  %v4801 = vshrl.u32 %v4800, 7
  %v4802 = vsub.s32 0, %v4801
  %v4803 = vrot.slane %v4798, %v4802
  %4805 = vmatprep.subr.mxu0 0.0
  %4806 = vmatpush1.msra.mxu0 %v4782
  %4807 = vmatprep.subr.mxu0 0.0
  %4808 = vmatpush1.msra.mxu0 %v4783
  %4809 = vmatprep.subr.mxu0 0.0
  %4810 = vmatpush1.msra.mxu0 %v4784
  %4811 = vmatprep.subr.mxu0 0.0
  %4812 = vmatpush1.msra.mxu0 %v4785
  %4813 = vmatprep.subr.mxu0 0.0
  %4814 = vmatpush1.msra.mxu0 %v4786
  %4815 = vmatprep.subr.mxu0 0.0
  %4816 = vmatpush1.msra.mxu0 %v4787
  %4817 = vmatprep.subr.mxu0 0.0
  %4818 = vmatpush1.msra.mxu0 %v4788
  %4819 = vmatprep.subr.mxu0 0.0
  %4820 = vmatpush1.msra.mxu0 %v4789
  %4821 = vmatprep.subr.mxu0 0.0
  %4822 = vmatpush1.msra.mxu0 %v4790
  %4823 = vmatprep.subr.mxu0 0.0
  %4824 = vmatpush1.msra.mxu0 %v4791
  %4825 = vmatprep.subr.mxu0 0.0
  %4826 = vmatpush1.msra.mxu0 %v4792
  %4827 = vmatprep.subr.mxu0 0.0
  %4828 = vmatpush1.msra.mxu0 %v4793
  %4829 = vmatprep.subr.mxu0 0.0
  %4830 = vmatpush1.msra.mxu0 %v4794
  %4831 = vmatprep.subr.mxu0 0.0
  %4832 = vmatpush1.msra.mxu0 %v4795
  %4833 = vmatprep.subr.mxu0 0.0
  %4834 = vmatpush1.msra.mxu0 %v4796
  %4835 = vmatprep.subr.mxu0 0.0
  %4836 = vmatpush1.msra.mxu0 %v4797
  %4837 = vmatprep.subr.mxu0 0.0
  %4838 = vmatpush1.msra.mxu0 0.0
  %4839 = vmatprep.subr.mxu0 0.0
  %4840 = vmatpush1.msra.mxu0 0.0
  %4841 = vmatprep.subr.mxu0 0.0
  %4842 = vmatpush1.msra.mxu0 0.0
  %4843 = vmatprep.subr.mxu0 0.0
  %4844 = vmatpush1.msra.mxu0 0.0
  %4845 = vmatprep.subr.mxu0 0.0
  %4846 = vmatpush1.msra.mxu0 0.0
  %4847 = vmatprep.subr.mxu0 0.0
  %4848 = vmatpush1.msra.mxu0 0.0
  %4849 = vmatprep.subr.mxu0 0.0
  %4850 = vmatpush1.msra.mxu0 0.0
  %4851 = vmatprep.subr.mxu0 0.0
  %4852 = vmatpush1.msra.mxu0 0.0
  %4853 = vmatprep.subr.mxu0 0.0
  %4854 = vmatpush1.msra.mxu0 0.0
  %4855 = vmatprep.subr.mxu0 0.0
  %4856 = vmatpush1.msra.mxu0 0.0
  %4857 = vmatprep.subr.mxu0 0.0
  %4858 = vmatpush1.msra.mxu0 0.0
  %4859 = vmatprep.subr.mxu0 0.0
  %4860 = vmatpush1.msra.mxu0 0.0
  %4861 = vmatprep.subr.mxu0 0.0
  %4862 = vmatpush1.msra.mxu0 0.0
  %4863 = vmatprep.subr.mxu0 0.0
  %4864 = vmatpush1.msra.mxu0 0.0
  %4865 = vmatprep.subr.mxu0 0.0
  %4866 = vmatpush1.msra.mxu0 0.0
  %4867 = vmatprep.subr.mxu0 0.0
  %4868 = vmatpush1.msra.mxu0 0.0
  %4869 = vmatprep.mubr.f32.mxu0 0.0
  %4870 = vmatmul.mubr.f32.gmra.mrb[0].mxu0 %v4779
  %v4871 = vpop.f32.mrb[0].mxu0
  %v4872 = vadd.f32 %v4803, %v4871
  %v4873 = vpop.f32.mrb[0].mxu0
  %4874 = vdwg.mxu0
  %4875 = vst [vmem:[%s11] sm:$0xff] %v4872
  // Predicated region
  $region46: #{lenet5_forward.1} parent=0 // pred_check
    _
  $region47: #{lenet5_forward.1} parent=0 // pred_check_branch
    %4877 = sbr.rel (0) target = $region49
  $region48: #{lenet5_forward.1} parent=0 // pred_region
    _
  $region49: #{lenet5_forward.1} parent=0 // pred_fallthru
    _
  // Predicated region
  $region50: #{lenet5_forward.1} parent=0 // pred_check
    _
  $region51: #{lenet5_forward.1} parent=0 // pred_check_branch
    %4879 = sbr.rel (0) target = $region53
  $region52: #{lenet5_forward.1} parent=0 // pred_region
    _
  $region53: #{lenet5_forward.1} parent=0 // pred_fallthru
    _

</llo_original>
